<compile_context>
chip_gen: v5e
topology: v5e:2x2
jax: 0.10.0
libtpu: 0.0.40
codegen_flags: <defaults>
</compile_context>

<pallas_src>
import jax
import jax.numpy as jnp
from jax.experimental import pallas as pl
from jax.experimental.pallas import tpu as pltpu


def _lstm_fc_kernel(x_ref, w_ih_ref, w_hh_ref, b_ref, w_fc_ref, b_fc_ref,
                    out_ref):
    Bp, T, D = x_ref.shape          # padded batch, seq len, input dim
    Hp = w_hh_ref.shape[0]          # padded hidden size (128)
    G = w_ih_ref.shape[1]           # 4 * Hp

    # ---- hoisted input projection: one MXU call covering all timesteps ----
    x = x_ref[...]                                          # (Bp, T, D)
    gx = (jnp.dot(x.reshape(Bp * T, D), w_ih_ref[...],
                  preferred_element_type=jnp.float32)
          + b_ref[...])
    gx = gx.reshape(Bp, T, G)                               # (Bp, T, 4*Hp)

    w_hh = w_hh_ref[...]                                    # (Hp, 4*Hp)

    h = jnp.zeros((Bp, Hp), jnp.float32)
    c = jnp.zeros((Bp, Hp), jnp.float32)

    # ---- serial recurrence, fully unrolled (T small & static) ----
    for t in range(T):
        gates = gx[:, t, :] + jnp.dot(h, w_hh,
                                      preferred_element_type=jnp.float32)
        i_g = jax.nn.sigmoid(gates[:, 0 * Hp:1 * Hp])       # whole-vreg slices
        f_g = jax.nn.sigmoid(gates[:, 1 * Hp:2 * Hp])
        g_g = jnp.tanh(gates[:, 2 * Hp:3 * Hp])
        o_g = jax.nn.sigmoid(gates[:, 3 * Hp:4 * Hp])
        c = f_g * c + i_g * g_g
        h = o_g * jnp.tanh(c)

    # ---- final linear layer on the last hidden state only ----
    out_ref[...] = (jnp.dot(h, w_fc_ref[...],
                            preferred_element_type=jnp.float32)
                    + b_fc_ref[...])


def _pad_gate_cols(w, h, h_pad):
    """Pad a (..., 4*h) gate-stacked array to (..., 4*h_pad), zeros per gate."""
    lead = w.shape[:-1]
    w4 = w.reshape(lead + (4, h))
    w4 = jnp.pad(w4, [(0, 0)] * len(lead) + [(0, 0), (0, h_pad - h)])
    return w4.reshape(lead + (4 * h_pad,))


@jax.jit
def sequential_behaviour_lstm(x_seq, params):
    """x_seq: (B, T, D) float32 (batch_first, like PyTorch). Returns (B, O)."""
    w_ih, w_hh, b, w_fc, b_fc = (params["w_ih"], params["w_hh"], params["b"],
                                 params["w_fc"], params["b_fc"])
    B, T, D = x_seq.shape
    H = w_hh.shape[0]
    O = w_fc.shape[1]

    B_pad = max(8, ((B + 7) // 8) * 8)              # f32 sublane tile
    H_pad = max(128, ((H + 127) // 128) * 128)      # whole-vreg gates

    # Zero-pad batch rows and hidden lanes; padded lanes provably stay zero
    # through the recurrence, so the valid region is unchanged.
    x_p = jnp.pad(x_seq, ((0, B_pad - B), (0, 0), (0, 0)))   # (Bp, T, D)
    w_ih_p = _pad_gate_cols(w_ih, H, H_pad)                  # (D, 4*Hp)
    w_hh_p = jnp.pad(_pad_gate_cols(w_hh, H, H_pad),
                     ((0, H_pad - H), (0, 0)))               # (Hp, 4*Hp)
    b_p = _pad_gate_cols(b, H, H_pad)                        # (1, 4*Hp)
    w_fc_p = jnp.pad(w_fc, ((0, H_pad - H), (0, 0)))         # (Hp, O)

    # Single invocation: everything fits comfortably in VMEM (<1 MiB total),
    # so no grid / pipelining is needed.
    vmem = pl.BlockSpec(memory_space=pltpu.MemorySpace.VMEM)
    out_p = pl.pallas_call(
        _lstm_fc_kernel,
        out_shape=jax.ShapeDtypeStruct((B_pad, O), jnp.float32),
        in_specs=[vmem] * 6,
        out_specs=vmem,
    )(x_p, w_ih_p, w_hh_p, b_p, w_fc_p, b_fc)

    # TODO(synk): if batch is ever scaled up, add a "parallel" batch-tile grid
    # axis so v7x's two TensorCores each run an independent batch shard.
    return out_p[:B]


def init_params(key, input_dim=20, hidden_dim=64, output_dim=16):
    """Deterministic synthetic parameters (PyTorch-style uniform init)."""
    ks = jax.random.split(key, 6)
    k_lstm = 1.0 / jnp.sqrt(hidden_dim)
    k_fc = 1.0 / jnp.sqrt(hidden_dim)
    u = lambda k, shape, s: jax.random.uniform(k, shape, jnp.float32, -s, s)
    # PyTorch stores weight_ih_l0 as (4H, D); we keep the transposed (D, 4H),
    # gate order i, f, g, o.
    w_ih = u(ks[0], (input_dim, 4 * hidden_dim), k_lstm)
    w_hh = u(ks[1], (hidden_dim, 4 * hidden_dim), k_lstm)
    b_ih = u(ks[2], (1, 4 * hidden_dim), k_lstm)
    b_hh = u(ks[3], (1, 4 * hidden_dim), k_lstm)
    w_fc = u(ks[4], (hidden_dim, output_dim), k_fc)
    b_fc = u(ks[5], (1, output_dim), k_fc)
    return {"w_ih": w_ih, "w_hh": w_hh, "b": b_ih + b_hh,
            "w_fc": w_fc, "b_fc": b_fc}


def reference_forward(x_seq, params):
    """Pure-JAX reference of the PyTorch forward (lax.scan LSTM)."""
    w_ih, w_hh, b, w_fc, b_fc = (params["w_ih"], params["w_hh"], params["b"],
                                 params["w_fc"], params["b_fc"])
    B = x_seq.shape[0]
    H = w_hh.shape[0]

    def step(carry, x_t):
        h, c = carry
        gates = x_t @ w_ih + h @ w_hh + b
        i = jax.nn.sigmoid(gates[:, 0 * H:1 * H])
        f = jax.nn.sigmoid(gates[:, 1 * H:2 * H])
        g = jnp.tanh(gates[:, 2 * H:3 * H])
        o = jax.nn.sigmoid(gates[:, 3 * H:4 * H])
        c_new = f * c + i * g
        h_new = o * jnp.tanh(c_new)
        return (h_new, c_new), None

    h0 = jnp.zeros((B, H), jnp.float32)
    c0 = jnp.zeros((B, H), jnp.float32)
    (h_n, _), _ = jax.lax.scan(step, (h0, c0),
                               jnp.transpose(x_seq, (1, 0, 2)))
    return h_n @ w_fc + b_fc


if __name__ == "__main__":
    key = jax.random.PRNGKey(0)
    k_param, k_x = jax.random.split(key)

    B, T, D, H, O = 2, 8, 20, 64, 16
    params = init_params(k_param, input_dim=D, hidden_dim=H, output_dim=O)
    x_seq = jax.random.normal(k_x, (B, T, D), jnp.float32)

    out = sequential_behaviour_lstm(x_seq, params)
    out = jax.block_until_ready(out)

    ref = jax.block_until_ready(reference_forward(x_seq, params))
    assert out.shape == (B, O)
    assert jnp.allclose(out, ref, atol=2e-3, rtol=2e-3), \
        f"mismatch: max abs diff {jnp.max(jnp.abs(out - ref))}"

    print("KERNEL_OK")
</pallas_src>

<mosaic_0001>
module attributes {stable_mosaic.version = 11 : i64} {
  func.func @_lstm_fc_kernel(%arg0: memref<8x8x20xf32, #tpu.memory_space<vmem>>, %arg1: memref<20x512xf32, #tpu.memory_space<vmem>>, %arg2: memref<128x512xf32, #tpu.memory_space<vmem>>, %arg3: memref<1x512xf32, #tpu.memory_space<vmem>>, %arg4: memref<128x16xf32, #tpu.memory_space<vmem>>, %arg5: memref<1x16xf32, #tpu.memory_space<vmem>>, %arg6: memref<8x16xf32, #tpu.memory_space<vmem>>) attributes {dimension_semantics = [], scalar_prefetch = 0 : i64, scratch_operands = 0 : i64, tpu.core_type = #tpu.core_type<tc>} {
    %c0 = arith.constant 0 : index
    %c0_0 = arith.constant 0 : index
    %c0_1 = arith.constant 0 : index
    %0 = vector.load %arg0[%c0, %c0_0, %c0_1] : memref<8x8x20xf32, #tpu.memory_space<vmem>>, vector<8x8x20xf32>
    %1 = vector.shape_cast %0 : vector<8x8x20xf32> to vector<64x20xf32>
    %c0_2 = arith.constant 0 : index
    %c0_3 = arith.constant 0 : index
    %2 = vector.load %arg1[%c0_2, %c0_3] : memref<20x512xf32, #tpu.memory_space<vmem>>, vector<20x512xf32>
    %cst = arith.constant dense<0.000000e+00> : vector<64x512xf32>
    %3 = tpu.matmul %1, %2, %cst {dimension_numbers = #tpu.dot_dimension_numbers<[1], [0], [0], [1], [0, 0, 1, 1], [], []>} : vector<64x20xf32>, vector<20x512xf32>, vector<64x512xf32> -> vector<64x512xf32>
    %c0_4 = arith.constant 0 : index
    %c0_5 = arith.constant 0 : index
    %4 = vector.load %arg3[%c0_4, %c0_5] : memref<1x512xf32, #tpu.memory_space<vmem>>, vector<1x512xf32>
    %5 = vector.broadcast %4 : vector<1x512xf32> to vector<64x512xf32>
    %6 = arith.addf %3, %5 : vector<64x512xf32>
    %7 = vector.shape_cast %6 : vector<64x512xf32> to vector<8x8x512xf32>
    %c0_6 = arith.constant 0 : index
    %c0_7 = arith.constant 0 : index
    %8 = vector.load %arg2[%c0_6, %c0_7] : memref<128x512xf32, #tpu.memory_space<vmem>>, vector<128x512xf32>
    %cst_8 = arith.constant 0.000000e+00 : f32
    %9 = vector.broadcast %cst_8 : f32 to vector<8x128xf32>
    %cst_9 = arith.constant 0.000000e+00 : f32
    %10 = vector.broadcast %cst_9 : f32 to vector<8x128xf32>
    %11 = vector.extract_strided_slice %7 {offsets = [0, 0, 0], sizes = [8, 1, 512], strides = [1, 1, 1]} : vector<8x8x512xf32> to vector<8x1x512xf32>
    %12 = vector.shape_cast %11 : vector<8x1x512xf32> to vector<8x512xf32>
    %cst_10 = arith.constant dense<0.000000e+00> : vector<8x512xf32>
    %13 = tpu.matmul %9, %8, %cst_10 {dimension_numbers = #tpu.dot_dimension_numbers<[1], [0], [0], [1], [0, 0, 1, 1], [], []>} : vector<8x128xf32>, vector<128x512xf32>, vector<8x512xf32> -> vector<8x512xf32>
    %14 = arith.addf %12, %13 : vector<8x512xf32>
    %15 = vector.extract_strided_slice %14 {offsets = [0, 0], sizes = [8, 128], strides = [1, 1]} : vector<8x512xf32> to vector<8x128xf32>
    %16 = arith.negf %15 : vector<8x128xf32>
    %17 = math.exp %16 : vector<8x128xf32>
    %cst_11 = arith.constant 1.000000e+00 : f32
    %18 = vector.broadcast %cst_11 : f32 to vector<8x128xf32>
    %19 = arith.addf %18, %17 : vector<8x128xf32>
    %20 = arith.divf %18, %19 : vector<8x128xf32>
    %21 = vector.extract_strided_slice %14 {offsets = [0, 128], sizes = [8, 128], strides = [1, 1]} : vector<8x512xf32> to vector<8x128xf32>
    %22 = arith.negf %21 : vector<8x128xf32>
    %23 = math.exp %22 : vector<8x128xf32>
    %cst_12 = arith.constant 1.000000e+00 : f32
    %24 = vector.broadcast %cst_12 : f32 to vector<8x128xf32>
    %25 = arith.addf %24, %23 : vector<8x128xf32>
    %26 = arith.divf %24, %25 : vector<8x128xf32>
    %27 = vector.extract_strided_slice %14 {offsets = [0, 256], sizes = [8, 128], strides = [1, 1]} : vector<8x512xf32> to vector<8x128xf32>
    %28 = math.tanh %27 : vector<8x128xf32>
    %29 = vector.extract_strided_slice %14 {offsets = [0, 384], sizes = [8, 128], strides = [1, 1]} : vector<8x512xf32> to vector<8x128xf32>
    %30 = arith.negf %29 : vector<8x128xf32>
    %31 = math.exp %30 : vector<8x128xf32>
    %cst_13 = arith.constant 1.000000e+00 : f32
    %32 = vector.broadcast %cst_13 : f32 to vector<8x128xf32>
    %33 = arith.addf %32, %31 : vector<8x128xf32>
    %34 = arith.divf %32, %33 : vector<8x128xf32>
    %35 = arith.mulf %26, %10 : vector<8x128xf32>
    %36 = arith.mulf %20, %28 : vector<8x128xf32>
    %37 = arith.addf %35, %36 : vector<8x128xf32>
    %38 = math.tanh %37 : vector<8x128xf32>
    %39 = arith.mulf %34, %38 : vector<8x128xf32>
    %40 = vector.extract_strided_slice %7 {offsets = [0, 1, 0], sizes = [8, 1, 512], strides = [1, 1, 1]} : vector<8x8x512xf32> to vector<8x1x512xf32>
    %41 = vector.shape_cast %40 : vector<8x1x512xf32> to vector<8x512xf32>
    %cst_14 = arith.constant dense<0.000000e+00> : vector<8x512xf32>
    %42 = tpu.matmul %39, %8, %cst_14 {dimension_numbers = #tpu.dot_dimension_numbers<[1], [0], [0], [1], [0, 0, 1, 1], [], []>} : vector<8x128xf32>, vector<128x512xf32>, vector<8x512xf32> -> vector<8x512xf32>
    %43 = arith.addf %41, %42 : vector<8x512xf32>
    %44 = vector.extract_strided_slice %43 {offsets = [0, 0], sizes = [8, 128], strides = [1, 1]} : vector<8x512xf32> to vector<8x128xf32>
    %45 = arith.negf %44 : vector<8x128xf32>
    %46 = math.exp %45 : vector<8x128xf32>
    %cst_15 = arith.constant 1.000000e+00 : f32
    %47 = vector.broadcast %cst_15 : f32 to vector<8x128xf32>
    %48 = arith.addf %47, %46 : vector<8x128xf32>
    %49 = arith.divf %47, %48 : vector<8x128xf32>
    %50 = vector.extract_strided_slice %43 {offsets = [0, 128], sizes = [8, 128], strides = [1, 1]} : vector<8x512xf32> to vector<8x128xf32>
    %51 = arith.negf %50 : vector<8x128xf32>
    %52 = math.exp %51 : vector<8x128xf32>
    %cst_16 = arith.constant 1.000000e+00 : f32
    %53 = vector.broadcast %cst_16 : f32 to vector<8x128xf32>
    %54 = arith.addf %53, %52 : vector<8x128xf32>
    %55 = arith.divf %53, %54 : vector<8x128xf32>
    %56 = vector.extract_strided_slice %43 {offsets = [0, 256], sizes = [8, 128], strides = [1, 1]} : vector<8x512xf32> to vector<8x128xf32>
    %57 = math.tanh %56 : vector<8x128xf32>
    %58 = vector.extract_strided_slice %43 {offsets = [0, 384], sizes = [8, 128], strides = [1, 1]} : vector<8x512xf32> to vector<8x128xf32>
    %59 = arith.negf %58 : vector<8x128xf32>
    %60 = math.exp %59 : vector<8x128xf32>
    %cst_17 = arith.constant 1.000000e+00 : f32
    %61 = vector.broadcast %cst_17 : f32 to vector<8x128xf32>
    %62 = arith.addf %61, %60 : vector<8x128xf32>
    %63 = arith.divf %61, %62 : vector<8x128xf32>
    %64 = arith.mulf %55, %37 : vector<8x128xf32>
    %65 = arith.mulf %49, %57 : vector<8x128xf32>
    %66 = arith.addf %64, %65 : vector<8x128xf32>
    %67 = math.tanh %66 : vector<8x128xf32>
    %68 = arith.mulf %63, %67 : vector<8x128xf32>
    %69 = vector.extract_strided_slice %7 {offsets = [0, 2, 0], sizes = [8, 1, 512], strides = [1, 1, 1]} : vector<8x8x512xf32> to vector<8x1x512xf32>
    %70 = vector.shape_cast %69 : vector<8x1x512xf32> to vector<8x512xf32>
    %cst_18 = arith.constant dense<0.000000e+00> : vector<8x512xf32>
    %71 = tpu.matmul %68, %8, %cst_18 {dimension_numbers = #tpu.dot_dimension_numbers<[1], [0], [0], [1], [0, 0, 1, 1], [], []>} : vector<8x128xf32>, vector<128x512xf32>, vector<8x512xf32> -> vector<8x512xf32>
    %72 = arith.addf %70, %71 : vector<8x512xf32>
    %73 = vector.extract_strided_slice %72 {offsets = [0, 0], sizes = [8, 128], strides = [1, 1]} : vector<8x512xf32> to vector<8x128xf32>
    %74 = arith.negf %73 : vector<8x128xf32>
    %75 = math.exp %74 : vector<8x128xf32>
    %cst_19 = arith.constant 1.000000e+00 : f32
    %76 = vector.broadcast %cst_19 : f32 to vector<8x128xf32>
    %77 = arith.addf %76, %75 : vector<8x128xf32>
    %78 = arith.divf %76, %77 : vector<8x128xf32>
    %79 = vector.extract_strided_slice %72 {offsets = [0, 128], sizes = [8, 128], strides = [1, 1]} : vector<8x512xf32> to vector<8x128xf32>
    %80 = arith.negf %79 : vector<8x128xf32>
    %81 = math.exp %80 : vector<8x128xf32>
    %cst_20 = arith.constant 1.000000e+00 : f32
    %82 = vector.broadcast %cst_20 : f32 to vector<8x128xf32>
    %83 = arith.addf %82, %81 : vector<8x128xf32>
    %84 = arith.divf %82, %83 : vector<8x128xf32>
    %85 = vector.extract_strided_slice %72 {offsets = [0, 256], sizes = [8, 128], strides = [1, 1]} : vector<8x512xf32> to vector<8x128xf32>
    %86 = math.tanh %85 : vector<8x128xf32>
    %87 = vector.extract_strided_slice %72 {offsets = [0, 384], sizes = [8, 128], strides = [1, 1]} : vector<8x512xf32> to vector<8x128xf32>
    %88 = arith.negf %87 : vector<8x128xf32>
    %89 = math.exp %88 : vector<8x128xf32>
    %cst_21 = arith.constant 1.000000e+00 : f32
    %90 = vector.broadcast %cst_21 : f32 to vector<8x128xf32>
    %91 = arith.addf %90, %89 : vector<8x128xf32>
    %92 = arith.divf %90, %91 : vector<8x128xf32>
    %93 = arith.mulf %84, %66 : vector<8x128xf32>
    %94 = arith.mulf %78, %86 : vector<8x128xf32>
    %95 = arith.addf %93, %94 : vector<8x128xf32>
    %96 = math.tanh %95 : vector<8x128xf32>
    %97 = arith.mulf %92, %96 : vector<8x128xf32>
    %98 = vector.extract_strided_slice %7 {offsets = [0, 3, 0], sizes = [8, 1, 512], strides = [1, 1, 1]} : vector<8x8x512xf32> to vector<8x1x512xf32>
    %99 = vector.shape_cast %98 : vector<8x1x512xf32> to vector<8x512xf32>
    %cst_22 = arith.constant dense<0.000000e+00> : vector<8x512xf32>
    %100 = tpu.matmul %97, %8, %cst_22 {dimension_numbers = #tpu.dot_dimension_numbers<[1], [0], [0], [1], [0, 0, 1, 1], [], []>} : vector<8x128xf32>, vector<128x512xf32>, vector<8x512xf32> -> vector<8x512xf32>
    %101 = arith.addf %99, %100 : vector<8x512xf32>
    %102 = vector.extract_strided_slice %101 {offsets = [0, 0], sizes = [8, 128], strides = [1, 1]} : vector<8x512xf32> to vector<8x128xf32>
    %103 = arith.negf %102 : vector<8x128xf32>
    %104 = math.exp %103 : vector<8x128xf32>
    %cst_23 = arith.constant 1.000000e+00 : f32
    %105 = vector.broadcast %cst_23 : f32 to vector<8x128xf32>
    %106 = arith.addf %105, %104 : vector<8x128xf32>
    %107 = arith.divf %105, %106 : vector<8x128xf32>
    %108 = vector.extract_strided_slice %101 {offsets = [0, 128], sizes = [8, 128], strides = [1, 1]} : vector<8x512xf32> to vector<8x128xf32>
    %109 = arith.negf %108 : vector<8x128xf32>
    %110 = math.exp %109 : vector<8x128xf32>
    %cst_24 = arith.constant 1.000000e+00 : f32
    %111 = vector.broadcast %cst_24 : f32 to vector<8x128xf32>
    %112 = arith.addf %111, %110 : vector<8x128xf32>
    %113 = arith.divf %111, %112 : vector<8x128xf32>
    %114 = vector.extract_strided_slice %101 {offsets = [0, 256], sizes = [8, 128], strides = [1, 1]} : vector<8x512xf32> to vector<8x128xf32>
    %115 = math.tanh %114 : vector<8x128xf32>
    %116 = vector.extract_strided_slice %101 {offsets = [0, 384], sizes = [8, 128], strides = [1, 1]} : vector<8x512xf32> to vector<8x128xf32>
    %117 = arith.negf %116 : vector<8x128xf32>
    %118 = math.exp %117 : vector<8x128xf32>
    %cst_25 = arith.constant 1.000000e+00 : f32
    %119 = vector.broadcast %cst_25 : f32 to vector<8x128xf32>
    %120 = arith.addf %119, %118 : vector<8x128xf32>
    %121 = arith.divf %119, %120 : vector<8x128xf32>
    %122 = arith.mulf %113, %95 : vector<8x128xf32>
    %123 = arith.mulf %107, %115 : vector<8x128xf32>
    %124 = arith.addf %122, %123 : vector<8x128xf32>
    %125 = math.tanh %124 : vector<8x128xf32>
    %126 = arith.mulf %121, %125 : vector<8x128xf32>
    %127 = vector.extract_strided_slice %7 {offsets = [0, 4, 0], sizes = [8, 1, 512], strides = [1, 1, 1]} : vector<8x8x512xf32> to vector<8x1x512xf32>
    %128 = vector.shape_cast %127 : vector<8x1x512xf32> to vector<8x512xf32>
    %cst_26 = arith.constant dense<0.000000e+00> : vector<8x512xf32>
    %129 = tpu.matmul %126, %8, %cst_26 {dimension_numbers = #tpu.dot_dimension_numbers<[1], [0], [0], [1], [0, 0, 1, 1], [], []>} : vector<8x128xf32>, vector<128x512xf32>, vector<8x512xf32> -> vector<8x512xf32>
    %130 = arith.addf %128, %129 : vector<8x512xf32>
    %131 = vector.extract_strided_slice %130 {offsets = [0, 0], sizes = [8, 128], strides = [1, 1]} : vector<8x512xf32> to vector<8x128xf32>
    %132 = arith.negf %131 : vector<8x128xf32>
    %133 = math.exp %132 : vector<8x128xf32>
    %cst_27 = arith.constant 1.000000e+00 : f32
    %134 = vector.broadcast %cst_27 : f32 to vector<8x128xf32>
    %135 = arith.addf %134, %133 : vector<8x128xf32>
    %136 = arith.divf %134, %135 : vector<8x128xf32>
    %137 = vector.extract_strided_slice %130 {offsets = [0, 128], sizes = [8, 128], strides = [1, 1]} : vector<8x512xf32> to vector<8x128xf32>
    %138 = arith.negf %137 : vector<8x128xf32>
    %139 = math.exp %138 : vector<8x128xf32>
    %cst_28 = arith.constant 1.000000e+00 : f32
    %140 = vector.broadcast %cst_28 : f32 to vector<8x128xf32>
    %141 = arith.addf %140, %139 : vector<8x128xf32>
    %142 = arith.divf %140, %141 : vector<8x128xf32>
    %143 = vector.extract_strided_slice %130 {offsets = [0, 256], sizes = [8, 128], strides = [1, 1]} : vector<8x512xf32> to vector<8x128xf32>
    %144 = math.tanh %143 : vector<8x128xf32>
    %145 = vector.extract_strided_slice %130 {offsets = [0, 384], sizes = [8, 128], strides = [1, 1]} : vector<8x512xf32> to vector<8x128xf32>
    %146 = arith.negf %145 : vector<8x128xf32>
    %147 = math.exp %146 : vector<8x128xf32>
    %cst_29 = arith.constant 1.000000e+00 : f32
    %148 = vector.broadcast %cst_29 : f32 to vector<8x128xf32>
    %149 = arith.addf %148, %147 : vector<8x128xf32>
    %150 = arith.divf %148, %149 : vector<8x128xf32>
    %151 = arith.mulf %142, %124 : vector<8x128xf32>
    %152 = arith.mulf %136, %144 : vector<8x128xf32>
    %153 = arith.addf %151, %152 : vector<8x128xf32>
    %154 = math.tanh %153 : vector<8x128xf32>
    %155 = arith.mulf %150, %154 : vector<8x128xf32>
    %156 = vector.extract_strided_slice %7 {offsets = [0, 5, 0], sizes = [8, 1, 512], strides = [1, 1, 1]} : vector<8x8x512xf32> to vector<8x1x512xf32>
    %157 = vector.shape_cast %156 : vector<8x1x512xf32> to vector<8x512xf32>
    %cst_30 = arith.constant dense<0.000000e+00> : vector<8x512xf32>
    %158 = tpu.matmul %155, %8, %cst_30 {dimension_numbers = #tpu.dot_dimension_numbers<[1], [0], [0], [1], [0, 0, 1, 1], [], []>} : vector<8x128xf32>, vector<128x512xf32>, vector<8x512xf32> -> vector<8x512xf32>
    %159 = arith.addf %157, %158 : vector<8x512xf32>
    %160 = vector.extract_strided_slice %159 {offsets = [0, 0], sizes = [8, 128], strides = [1, 1]} : vector<8x512xf32> to vector<8x128xf32>
    %161 = arith.negf %160 : vector<8x128xf32>
    %162 = math.exp %161 : vector<8x128xf32>
    %cst_31 = arith.constant 1.000000e+00 : f32
    %163 = vector.broadcast %cst_31 : f32 to vector<8x128xf32>
    %164 = arith.addf %163, %162 : vector<8x128xf32>
    %165 = arith.divf %163, %164 : vector<8x128xf32>
    %166 = vector.extract_strided_slice %159 {offsets = [0, 128], sizes = [8, 128], strides = [1, 1]} : vector<8x512xf32> to vector<8x128xf32>
    %167 = arith.negf %166 : vector<8x128xf32>
    %168 = math.exp %167 : vector<8x128xf32>
    %cst_32 = arith.constant 1.000000e+00 : f32
    %169 = vector.broadcast %cst_32 : f32 to vector<8x128xf32>
    %170 = arith.addf %169, %168 : vector<8x128xf32>
    %171 = arith.divf %169, %170 : vector<8x128xf32>
    %172 = vector.extract_strided_slice %159 {offsets = [0, 256], sizes = [8, 128], strides = [1, 1]} : vector<8x512xf32> to vector<8x128xf32>
    %173 = math.tanh %172 : vector<8x128xf32>
    %174 = vector.extract_strided_slice %159 {offsets = [0, 384], sizes = [8, 128], strides = [1, 1]} : vector<8x512xf32> to vector<8x128xf32>
    %175 = arith.negf %174 : vector<8x128xf32>
    %176 = math.exp %175 : vector<8x128xf32>
    %cst_33 = arith.constant 1.000000e+00 : f32
    %177 = vector.broadcast %cst_33 : f32 to vector<8x128xf32>
    %178 = arith.addf %177, %176 : vector<8x128xf32>
    %179 = arith.divf %177, %178 : vector<8x128xf32>
    %180 = arith.mulf %171, %153 : vector<8x128xf32>
    %181 = arith.mulf %165, %173 : vector<8x128xf32>
    %182 = arith.addf %180, %181 : vector<8x128xf32>
    %183 = math.tanh %182 : vector<8x128xf32>
    %184 = arith.mulf %179, %183 : vector<8x128xf32>
    %185 = vector.extract_strided_slice %7 {offsets = [0, 6, 0], sizes = [8, 1, 512], strides = [1, 1, 1]} : vector<8x8x512xf32> to vector<8x1x512xf32>
    %186 = vector.shape_cast %185 : vector<8x1x512xf32> to vector<8x512xf32>
    %cst_34 = arith.constant dense<0.000000e+00> : vector<8x512xf32>
    %187 = tpu.matmul %184, %8, %cst_34 {dimension_numbers = #tpu.dot_dimension_numbers<[1], [0], [0], [1], [0, 0, 1, 1], [], []>} : vector<8x128xf32>, vector<128x512xf32>, vector<8x512xf32> -> vector<8x512xf32>
    %188 = arith.addf %186, %187 : vector<8x512xf32>
    %189 = vector.extract_strided_slice %188 {offsets = [0, 0], sizes = [8, 128], strides = [1, 1]} : vector<8x512xf32> to vector<8x128xf32>
    %190 = arith.negf %189 : vector<8x128xf32>
    %191 = math.exp %190 : vector<8x128xf32>
    %cst_35 = arith.constant 1.000000e+00 : f32
    %192 = vector.broadcast %cst_35 : f32 to vector<8x128xf32>
    %193 = arith.addf %192, %191 : vector<8x128xf32>
    %194 = arith.divf %192, %193 : vector<8x128xf32>
    %195 = vector.extract_strided_slice %188 {offsets = [0, 128], sizes = [8, 128], strides = [1, 1]} : vector<8x512xf32> to vector<8x128xf32>
    %196 = arith.negf %195 : vector<8x128xf32>
    %197 = math.exp %196 : vector<8x128xf32>
    %cst_36 = arith.constant 1.000000e+00 : f32
    %198 = vector.broadcast %cst_36 : f32 to vector<8x128xf32>
    %199 = arith.addf %198, %197 : vector<8x128xf32>
    %200 = arith.divf %198, %199 : vector<8x128xf32>
    %201 = vector.extract_strided_slice %188 {offsets = [0, 256], sizes = [8, 128], strides = [1, 1]} : vector<8x512xf32> to vector<8x128xf32>
    %202 = math.tanh %201 : vector<8x128xf32>
    %203 = vector.extract_strided_slice %188 {offsets = [0, 384], sizes = [8, 128], strides = [1, 1]} : vector<8x512xf32> to vector<8x128xf32>
    %204 = arith.negf %203 : vector<8x128xf32>
    %205 = math.exp %204 : vector<8x128xf32>
    %cst_37 = arith.constant 1.000000e+00 : f32
    %206 = vector.broadcast %cst_37 : f32 to vector<8x128xf32>
    %207 = arith.addf %206, %205 : vector<8x128xf32>
    %208 = arith.divf %206, %207 : vector<8x128xf32>
    %209 = arith.mulf %200, %182 : vector<8x128xf32>
    %210 = arith.mulf %194, %202 : vector<8x128xf32>
    %211 = arith.addf %209, %210 : vector<8x128xf32>
    %212 = math.tanh %211 : vector<8x128xf32>
    %213 = arith.mulf %208, %212 : vector<8x128xf32>
    %214 = vector.extract_strided_slice %7 {offsets = [0, 7, 0], sizes = [8, 1, 512], strides = [1, 1, 1]} : vector<8x8x512xf32> to vector<8x1x512xf32>
    %215 = vector.shape_cast %214 : vector<8x1x512xf32> to vector<8x512xf32>
    %cst_38 = arith.constant dense<0.000000e+00> : vector<8x512xf32>
    %216 = tpu.matmul %213, %8, %cst_38 {dimension_numbers = #tpu.dot_dimension_numbers<[1], [0], [0], [1], [0, 0, 1, 1], [], []>} : vector<8x128xf32>, vector<128x512xf32>, vector<8x512xf32> -> vector<8x512xf32>
    %217 = arith.addf %215, %216 : vector<8x512xf32>
    %218 = vector.extract_strided_slice %217 {offsets = [0, 0], sizes = [8, 128], strides = [1, 1]} : vector<8x512xf32> to vector<8x128xf32>
    %219 = arith.negf %218 : vector<8x128xf32>
    %220 = math.exp %219 : vector<8x128xf32>
    %cst_39 = arith.constant 1.000000e+00 : f32
    %221 = vector.broadcast %cst_39 : f32 to vector<8x128xf32>
    %222 = arith.addf %221, %220 : vector<8x128xf32>
    %223 = arith.divf %221, %222 : vector<8x128xf32>
    %224 = vector.extract_strided_slice %217 {offsets = [0, 128], sizes = [8, 128], strides = [1, 1]} : vector<8x512xf32> to vector<8x128xf32>
    %225 = arith.negf %224 : vector<8x128xf32>
    %226 = math.exp %225 : vector<8x128xf32>
    %cst_40 = arith.constant 1.000000e+00 : f32
    %227 = vector.broadcast %cst_40 : f32 to vector<8x128xf32>
    %228 = arith.addf %227, %226 : vector<8x128xf32>
    %229 = arith.divf %227, %228 : vector<8x128xf32>
    %230 = vector.extract_strided_slice %217 {offsets = [0, 256], sizes = [8, 128], strides = [1, 1]} : vector<8x512xf32> to vector<8x128xf32>
    %231 = math.tanh %230 : vector<8x128xf32>
    %232 = vector.extract_strided_slice %217 {offsets = [0, 384], sizes = [8, 128], strides = [1, 1]} : vector<8x512xf32> to vector<8x128xf32>
    %233 = arith.negf %232 : vector<8x128xf32>
    %234 = math.exp %233 : vector<8x128xf32>
    %cst_41 = arith.constant 1.000000e+00 : f32
    %235 = vector.broadcast %cst_41 : f32 to vector<8x128xf32>
    %236 = arith.addf %235, %234 : vector<8x128xf32>
    %237 = arith.divf %235, %236 : vector<8x128xf32>
    %238 = arith.mulf %229, %211 : vector<8x128xf32>
    %239 = arith.mulf %223, %231 : vector<8x128xf32>
    %240 = arith.addf %238, %239 : vector<8x128xf32>
    %241 = math.tanh %240 : vector<8x128xf32>
    %242 = arith.mulf %237, %241 : vector<8x128xf32>
    %c0_42 = arith.constant 0 : index
    %c0_43 = arith.constant 0 : index
    %243 = vector.load %arg4[%c0_42, %c0_43] : memref<128x16xf32, #tpu.memory_space<vmem>>, vector<128x16xf32>
    %cst_44 = arith.constant dense<0.000000e+00> : vector<8x16xf32>
    %244 = tpu.matmul %242, %243, %cst_44 {dimension_numbers = #tpu.dot_dimension_numbers<[1], [0], [0], [1], [0, 0, 1, 1], [], []>} : vector<8x128xf32>, vector<128x16xf32>, vector<8x16xf32> -> vector<8x16xf32>
    %c0_45 = arith.constant 0 : index
    %c0_46 = arith.constant 0 : index
    %245 = vector.load %arg5[%c0_45, %c0_46] : memref<1x16xf32, #tpu.memory_space<vmem>>, vector<1x16xf32>
    %246 = vector.broadcast %245 : vector<1x16xf32> to vector<8x16xf32>
    %247 = arith.addf %244, %246 : vector<8x16xf32>
    %c0_47 = arith.constant 0 : index
    %c0_48 = arith.constant 0 : index
    %248 = vector.load %arg6[%c0_47, %c0_48] : memref<8x16xf32, #tpu.memory_space<vmem>>, vector<8x16xf32>
    tpu.vector_store %arg6[%c0_47, %c0_48], %247 {strides = array<i32>} : memref<8x16xf32, #tpu.memory_space<vmem>>, vector<8x16xf32>,
    return
  }
}

</mosaic_0001>

<llo_original>
// kernel: sequential_behaviour_lstm.1
$region0: #{sequential_behaviour_lstm.1}
  #allocation0 [shape = 'u32[]', space=smem, size = 0x4, offset = 0x4, fixed_abs, tag = 'smem constant byte address 0x4 - core index']
  #allocation1 [shape = 'u32[72,128]{1,0:T(1,128)}', space=vmem, size = 0x9000, scoped, tag = 'internal scratch']
  %s0 = inlined_call_operand.vmem [shape: f32[8,8,20], index: 0, kind: input, shape index: {}]
  %s1 = inlined_call_operand.vmem [shape: f32[20,512], index: 1, kind: input, shape index: {}]
  %s2 = inlined_call_operand.vmem [shape: f32[128,512], index: 2, kind: input, shape index: {}]
  %s3 = inlined_call_operand.vmem [shape: f32[1,512], index: 3, kind: input, shape index: {}]
  %s4 = inlined_call_operand.vmem [shape: f32[128,16], index: 4, kind: input, shape index: {}]
  %s5 = inlined_call_operand.vmem [shape: f32[1,16], index: 5, kind: input, shape index: {}]
  %s6 = inlined_call_operand.vmem [shape: f32[8,16], index: 6, kind: output, shape index: {}]
  %s7 = sld [smem:[#allocation0]]
  $region34: #{sequential_behaviour_lstm.1} parent=0
    _
  %s9 = ssub.s32 1, %s7
  %s10 = scalar_select 0, %s9, %s7
  // Predicated region
  $region2: #{sequential_behaviour_lstm.1} parent=0 // pred_check
    _
  $region3: #{sequential_behaviour_lstm.1} parent=0 // pred_check_branch
    %12 = sbr.rel (0) target = $region5
  $region4: #{sequential_behaviour_lstm.1} parent=0 // pred_region
    _
  $region5: #{sequential_behaviour_lstm.1} parent=0 // pred_fallthru
    _
  // Predicated region
  $region6: #{sequential_behaviour_lstm.1} parent=0 // pred_check
    _
  $region7: #{sequential_behaviour_lstm.1} parent=0 // pred_check_branch
    %14 = sbr.rel (0) target = $region9
  $region8: #{sequential_behaviour_lstm.1} parent=0 // pred_region
    _
  $region9: #{sequential_behaviour_lstm.1} parent=0 // pred_fallthru
    _
  // Predicated region
  $region10: #{sequential_behaviour_lstm.1} parent=0 // pred_check
    _
  $region11: #{sequential_behaviour_lstm.1} parent=0 // pred_check_branch
    %16 = sbr.rel (0) target = $region13
  $region12: #{sequential_behaviour_lstm.1} parent=0 // pred_region
    _
  $region13: #{sequential_behaviour_lstm.1} parent=0 // pred_fallthru
    _
  // Predicated region
  $region14: #{sequential_behaviour_lstm.1} parent=0 // pred_check
    _
  $region15: #{sequential_behaviour_lstm.1} parent=0 // pred_check_branch
    %18 = sbr.rel (0) target = $region17
  $region16: #{sequential_behaviour_lstm.1} parent=0 // pred_region
    _
  $region17: #{sequential_behaviour_lstm.1} parent=0 // pred_fallthru
    _
  // Predicated region
  $region18: #{sequential_behaviour_lstm.1} parent=0 // pred_check
    _
  $region19: #{sequential_behaviour_lstm.1} parent=0 // pred_check_branch
    %20 = sbr.rel (0) target = $region21
  $region20: #{sequential_behaviour_lstm.1} parent=0 // pred_region
    _
  $region21: #{sequential_behaviour_lstm.1} parent=0 // pred_fallthru
    _
  // Predicated region
  $region22: #{sequential_behaviour_lstm.1} parent=0 // pred_check
    _
  $region23: #{sequential_behaviour_lstm.1} parent=0 // pred_check_branch
    %22 = sbr.rel (0) target = $region25
  $region24: #{sequential_behaviour_lstm.1} parent=0 // pred_region
    _
  $region25: #{sequential_behaviour_lstm.1} parent=0 // pred_fallthru
    _
  %v23 = vld [vmem:[%s0] sm:$0xff]
  %v24 = vld [vmem:[%s0 + $0x8] sm:$0xff]
  %v25 = vld [vmem:[%s0 + $0x10] sm:$0xff]
  %v26 = vld [vmem:[%s0 + $0x18] sm:$0xff]
  %v27 = vld [vmem:[%s0 + $0x20] sm:$0xff]
  %v28 = vld [vmem:[%s0 + $0x28] sm:$0xff]
  %v29 = vld [vmem:[%s0 + $0x30] sm:$0xff]
  %v30 = vld [vmem:[%s0 + $0x38] sm:$0xff]
  %v31 = vld [vmem:[%s1] sm:$0xff]
  %v32 = vld [vmem:[%s1 + $0x8] sm:$0xff]
  %v33 = vld [vmem:[%s1 + $0x10] sm:$0xff]
  %v34 = vld [vmem:[%s1 + $0x18] sm:$0xff]
  %v35 = vld [vmem:[%s1 + $0x20] sm:$0xff]
  %v36 = vld [vmem:[%s1 + $0x28] sm:$0xff]
  %v37 = vld [vmem:[%s1 + $0x30] sm:$0xff]
  %v38 = vld [vmem:[%s1 + $0x38] sm:$0xff]
  %v39 = vld [vmem:[%s1 + $0x40] sm:$0xf]
  %v40 = vld [vmem:[%s1 + $0x48] sm:$0xf]
  %v41 = vld [vmem:[%s1 + $0x50] sm:$0xf]
  %v42 = vld [vmem:[%s1 + $0x58] sm:$0xf]
  %v43 = vld [vmem:[%s3] sm:$0xf]
  %v45 = vperm.slane %v43, 0
  %v46 = vperm.slane %v43, 1
  %v47 = vperm.slane %v43, 2
  %v48 = vperm.slane %v43, 3
  %vm53 = vcmask 162816
  %v55 = vsel %vm53, %v23, 0
  %v58 = vsel %vm53, %v24, 0
  %v61 = vsel %vm53, %v25, 0
  %v64 = vsel %vm53, %v26, 0
  %v67 = vsel %vm53, %v27, 0
  %v70 = vsel %vm53, %v28, 0
  %v73 = vsel %vm53, %v29, 0
  %v76 = vsel %vm53, %v30, 0
  %vm78 = vcmask 1043456
  %v80 = vsel %vm78, %v39, 0
  %v83 = vsel %vm78, %v40, 0
  %v86 = vsel %vm78, %v41, 0
  %v89 = vsel %vm78, %v42, 0
  %91 = vmatpush.msra.mxu0 0.0
  %92 = vmatpush.msra.mxu0 0.0
  %93 = vmatpush.msra.mxu0 0.0
  %94 = vmatpush.msra.mxu0 0.0
  %95 = vmatpush.msra.mxu0 0.0
  %96 = vmatpush.msra.mxu0 0.0
  %97 = vmatpush.msra.mxu0 0.0
  %98 = vmatpush.msra.mxu0 0.0
  %99 = vmatpush.msra.mxu0 0.0
  %100 = vmatpush.msra.mxu0 0.0
  %101 = vmatpush.msra.mxu0 0.0
  %102 = vmatpush.msra.mxu0 0.0
  %103 = vmatpush.msra.mxu0 0.0
  %104 = vmatpush.msra.mxu0 %v80
  %105 = vmatpush.msra.mxu0 %v35
  %106 = vmatpush.msra.mxu0 %v31
  %107 = vmatmul.f32.gmra.mxu0 %v55
  %v108 = vpop.f32.mrf.mxu0
  %v109 = vadd.f32 %v45, %v108
  %110 = vmatmul.f32.gmra.mxu0 %v58
  %v111 = vpop.f32.mrf.mxu0
  %v112 = vadd.f32 %v45, %v111
  %113 = vmatmul.f32.gmra.mxu0 %v61
  %v114 = vpop.f32.mrf.mxu0
  %v115 = vadd.f32 %v45, %v114
  %116 = vmatmul.f32.gmra.mxu0 %v64
  %v117 = vpop.f32.mrf.mxu0
  %v118 = vadd.f32 %v45, %v117
  %119 = vmatmul.f32.gmra.mxu0 %v67
  %v120 = vpop.f32.mrf.mxu0
  %v121 = vadd.f32 %v45, %v120
  %122 = vmatmul.f32.gmra.mxu0 %v70
  %v123 = vpop.f32.mrf.mxu0
  %v124 = vadd.f32 %v45, %v123
  %125 = vmatmul.f32.gmra.mxu0 %v73
  %v126 = vpop.f32.mrf.mxu0
  %v127 = vadd.f32 %v45, %v126
  %128 = vmatmul.f32.gmra.mxu0 %v76
  %v129 = vpop.f32.mrf.mxu0
  %v130 = vadd.f32 %v45, %v129
  %131 = vdwg.mxu0
  %132 = vmatpush.msra.mxu0 0.0
  %133 = vmatpush.msra.mxu0 0.0
  %134 = vmatpush.msra.mxu0 0.0
  %135 = vmatpush.msra.mxu0 0.0
  %136 = vmatpush.msra.mxu0 0.0
  %137 = vmatpush.msra.mxu0 0.0
  %138 = vmatpush.msra.mxu0 0.0
  %139 = vmatpush.msra.mxu0 0.0
  %140 = vmatpush.msra.mxu0 0.0
  %141 = vmatpush.msra.mxu0 0.0
  %142 = vmatpush.msra.mxu0 0.0
  %143 = vmatpush.msra.mxu0 0.0
  %144 = vmatpush.msra.mxu0 0.0
  %145 = vmatpush.msra.mxu0 %v83
  %146 = vmatpush.msra.mxu0 %v36
  %147 = vmatpush.msra.mxu0 %v32
  %148 = vmatmul.f32.gmra.mxu0 %v55
  %v149 = vpop.f32.mrf.mxu0
  %v150 = vadd.f32 %v46, %v149
  %151 = vmatmul.f32.gmra.mxu0 %v58
  %v152 = vpop.f32.mrf.mxu0
  %v153 = vadd.f32 %v46, %v152
  %154 = vmatmul.f32.gmra.mxu0 %v61
  %v155 = vpop.f32.mrf.mxu0
  %v156 = vadd.f32 %v46, %v155
  %157 = vmatmul.f32.gmra.mxu0 %v64
  %v158 = vpop.f32.mrf.mxu0
  %v159 = vadd.f32 %v46, %v158
  %160 = vmatmul.f32.gmra.mxu0 %v67
  %v161 = vpop.f32.mrf.mxu0
  %v162 = vadd.f32 %v46, %v161
  %163 = vmatmul.f32.gmra.mxu0 %v70
  %v164 = vpop.f32.mrf.mxu0
  %v165 = vadd.f32 %v46, %v164
  %166 = vmatmul.f32.gmra.mxu0 %v73
  %v167 = vpop.f32.mrf.mxu0
  %v168 = vadd.f32 %v46, %v167
  %169 = vmatmul.f32.gmra.mxu0 %v76
  %v170 = vpop.f32.mrf.mxu0
  %v171 = vadd.f32 %v46, %v170
  %172 = vdwg.mxu0
  %173 = vmatpush.msra.mxu0 0.0
  %174 = vmatpush.msra.mxu0 0.0
  %175 = vmatpush.msra.mxu0 0.0
  %176 = vmatpush.msra.mxu0 0.0
  %177 = vmatpush.msra.mxu0 0.0
  %178 = vmatpush.msra.mxu0 0.0
  %179 = vmatpush.msra.mxu0 0.0
  %180 = vmatpush.msra.mxu0 0.0
  %181 = vmatpush.msra.mxu0 0.0
  %182 = vmatpush.msra.mxu0 0.0
  %183 = vmatpush.msra.mxu0 0.0
  %184 = vmatpush.msra.mxu0 0.0
  %185 = vmatpush.msra.mxu0 0.0
  %186 = vmatpush.msra.mxu0 %v86
  %187 = vmatpush.msra.mxu0 %v37
  %188 = vmatpush.msra.mxu0 %v33
  %189 = vmatmul.f32.gmra.mxu0 %v55
  %v190 = vpop.f32.mrf.mxu0
  %v191 = vadd.f32 %v47, %v190
  %192 = vmatmul.f32.gmra.mxu0 %v58
  %v193 = vpop.f32.mrf.mxu0
  %v194 = vadd.f32 %v47, %v193
  %195 = vmatmul.f32.gmra.mxu0 %v61
  %v196 = vpop.f32.mrf.mxu0
  %v197 = vadd.f32 %v47, %v196
  %198 = vmatmul.f32.gmra.mxu0 %v64
  %v199 = vpop.f32.mrf.mxu0
  %v200 = vadd.f32 %v47, %v199
  %201 = vmatmul.f32.gmra.mxu0 %v67
  %v202 = vpop.f32.mrf.mxu0
  %v203 = vadd.f32 %v47, %v202
  %204 = vmatmul.f32.gmra.mxu0 %v70
  %v205 = vpop.f32.mrf.mxu0
  %v206 = vadd.f32 %v47, %v205
  %207 = vmatmul.f32.gmra.mxu0 %v73
  %v208 = vpop.f32.mrf.mxu0
  %v209 = vadd.f32 %v47, %v208
  %210 = vmatmul.f32.gmra.mxu0 %v76
  %v211 = vpop.f32.mrf.mxu0
  %v212 = vadd.f32 %v47, %v211
  %213 = vdwg.mxu0
  %214 = vmatpush.msra.mxu0 0.0
  %215 = vmatpush.msra.mxu0 0.0
  %216 = vmatpush.msra.mxu0 0.0
  %217 = vmatpush.msra.mxu0 0.0
  %218 = vmatpush.msra.mxu0 0.0
  %219 = vmatpush.msra.mxu0 0.0
  %220 = vmatpush.msra.mxu0 0.0
  %221 = vmatpush.msra.mxu0 0.0
  %222 = vmatpush.msra.mxu0 0.0
  %223 = vmatpush.msra.mxu0 0.0
  %224 = vmatpush.msra.mxu0 0.0
  %225 = vmatpush.msra.mxu0 0.0
  %226 = vmatpush.msra.mxu0 0.0
  %227 = vmatpush.msra.mxu0 %v89
  %228 = vmatpush.msra.mxu0 %v38
  %229 = vmatpush.msra.mxu0 %v34
  %230 = vmatmul.f32.gmra.mxu0 %v55
  %v231 = vpop.f32.mrf.mxu0
  %v232 = vadd.f32 %v48, %v231
  %233 = vmatmul.f32.gmra.mxu0 %v58
  %v234 = vpop.f32.mrf.mxu0
  %v235 = vadd.f32 %v48, %v234
  %236 = vmatmul.f32.gmra.mxu0 %v61
  %v237 = vpop.f32.mrf.mxu0
  %v238 = vadd.f32 %v48, %v237
  %239 = vmatmul.f32.gmra.mxu0 %v64
  %v240 = vpop.f32.mrf.mxu0
  %v241 = vadd.f32 %v48, %v240
  %242 = vmatmul.f32.gmra.mxu0 %v67
  %v243 = vpop.f32.mrf.mxu0
  %v244 = vadd.f32 %v48, %v243
  %245 = vmatmul.f32.gmra.mxu0 %v70
  %v246 = vpop.f32.mrf.mxu0
  %v247 = vadd.f32 %v48, %v246
  %248 = vmatmul.f32.gmra.mxu0 %v73
  %v249 = vpop.f32.mrf.mxu0
  %v250 = vadd.f32 %v48, %v249
  %251 = vmatmul.f32.gmra.mxu0 %v76
  %v252 = vpop.f32.mrf.mxu0
  %v253 = vadd.f32 %v48, %v252
  %254 = vdwg.mxu0
  %v255 = vld [vmem:[%s2] sm:$0xff]
  %v256 = vld [vmem:[%s2 + $0x8] sm:$0xff]
  %v257 = vld [vmem:[%s2 + $0x10] sm:$0xff]
  %v258 = vld [vmem:[%s2 + $0x18] sm:$0xff]
  %v259 = vld [vmem:[%s2 + $0x20] sm:$0xff]
  %v260 = vld [vmem:[%s2 + $0x28] sm:$0xff]
  %v261 = vld [vmem:[%s2 + $0x30] sm:$0xff]
  %v262 = vld [vmem:[%s2 + $0x38] sm:$0xff]
  %v263 = vld [vmem:[%s2 + $0x40] sm:$0xff]
  %v264 = vld [vmem:[%s2 + $0x48] sm:$0xff]
  %v265 = vld [vmem:[%s2 + $0x50] sm:$0xff]
  %v266 = vld [vmem:[%s2 + $0x58] sm:$0xff]
  %v267 = vld [vmem:[%s2 + $0x60] sm:$0xff]
  %v268 = vld [vmem:[%s2 + $0x68] sm:$0xff]
  %v269 = vld [vmem:[%s2 + $0x70] sm:$0xff]
  %v270 = vld [vmem:[%s2 + $0x78] sm:$0xff]
  %v271 = vld [vmem:[%s2 + $0x80] sm:$0xff]
  %v272 = vld [vmem:[%s2 + $0x88] sm:$0xff]
  %v273 = vld [vmem:[%s2 + $0x90] sm:$0xff]
  %v274 = vld [vmem:[%s2 + $0x98] sm:$0xff]
  %v275 = vld [vmem:[%s2 + $0xa0] sm:$0xff]
  %v276 = vld [vmem:[%s2 + $0xa8] sm:$0xff]
  %v277 = vld [vmem:[%s2 + $0xb0] sm:$0xff]
  %v278 = vld [vmem:[%s2 + $0xb8] sm:$0xff]
  %v279 = vld [vmem:[%s2 + $0xc0] sm:$0xff]
  %v280 = vld [vmem:[%s2 + $0xc8] sm:$0xff]
  %v281 = vld [vmem:[%s2 + $0xd0] sm:$0xff]
  %v282 = vld [vmem:[%s2 + $0xd8] sm:$0xff]
  %v283 = vld [vmem:[%s2 + $0xe0] sm:$0xff]
  %v284 = vld [vmem:[%s2 + $0xe8] sm:$0xff]
  %v285 = vld [vmem:[%s2 + $0xf0] sm:$0xff]
  %v286 = vld [vmem:[%s2 + $0xf8] sm:$0xff]
  %v287 = vld [vmem:[%s2 + $0x100] sm:$0xff]
  %v288 = vld [vmem:[%s2 + $0x108] sm:$0xff]
  %v289 = vld [vmem:[%s2 + $0x110] sm:$0xff]
  %v290 = vld [vmem:[%s2 + $0x118] sm:$0xff]
  %v291 = vld [vmem:[%s2 + $0x120] sm:$0xff]
  %v292 = vld [vmem:[%s2 + $0x128] sm:$0xff]
  %v293 = vld [vmem:[%s2 + $0x130] sm:$0xff]
  %v294 = vld [vmem:[%s2 + $0x138] sm:$0xff]
  %v295 = vld [vmem:[%s2 + $0x140] sm:$0xff]
  %v296 = vld [vmem:[%s2 + $0x148] sm:$0xff]
  %v297 = vld [vmem:[%s2 + $0x150] sm:$0xff]
  %v298 = vld [vmem:[%s2 + $0x158] sm:$0xff]
  %v299 = vld [vmem:[%s2 + $0x160] sm:$0xff]
  %v300 = vld [vmem:[%s2 + $0x168] sm:$0xff]
  %v301 = vld [vmem:[%s2 + $0x170] sm:$0xff]
  %v302 = vld [vmem:[%s2 + $0x178] sm:$0xff]
  %v303 = vld [vmem:[%s2 + $0x180] sm:$0xff]
  %v304 = vld [vmem:[%s2 + $0x188] sm:$0xff]
  %v305 = vld [vmem:[%s2 + $0x190] sm:$0xff]
  %v306 = vld [vmem:[%s2 + $0x198] sm:$0xff]
  %v307 = vld [vmem:[%s2 + $0x1a0] sm:$0xff]
  %v308 = vld [vmem:[%s2 + $0x1a8] sm:$0xff]
  %v309 = vld [vmem:[%s2 + $0x1b0] sm:$0xff]
  %v310 = vld [vmem:[%s2 + $0x1b8] sm:$0xff]
  %v311 = vld [vmem:[%s2 + $0x1c0] sm:$0xff]
  %v312 = vld [vmem:[%s2 + $0x1c8] sm:$0xff]
  %v313 = vld [vmem:[%s2 + $0x1d0] sm:$0xff]
  %v314 = vld [vmem:[%s2 + $0x1d8] sm:$0xff]
  %v315 = vld [vmem:[%s2 + $0x1e0] sm:$0xff]
  %v316 = vld [vmem:[%s2 + $0x1e8] sm:$0xff]
  %v317 = vld [vmem:[%s2 + $0x1f0] sm:$0xff]
  %v318 = vld [vmem:[%s2 + $0x1f8] sm:$0xff]
  %319 = vmatpush.msra.mxu0 %v315
  %320 = vmatpush.msra.mxu0 %v311
  %321 = vmatpush.msra.mxu0 %v307
  %322 = vmatpush.msra.mxu0 %v303
  %323 = vmatpush.msra.mxu0 %v299
  %324 = vmatpush.msra.mxu0 %v295
  %325 = vmatpush.msra.mxu0 %v291
  %326 = vmatpush.msra.mxu0 %v287
  %327 = vmatpush.msra.mxu0 %v283
  %328 = vmatpush.msra.mxu0 %v279
  %329 = vmatpush.msra.mxu0 %v275
  %330 = vmatpush.msra.mxu0 %v271
  %331 = vmatpush.msra.mxu0 %v267
  %332 = vmatpush.msra.mxu0 %v263
  %333 = vmatpush.msra.mxu0 %v259
  %334 = vmatpush.msra.mxu0 %v255
  %335 = vmatmul.f32.gmra.mxu0 0.0
  %v336 = vpop.f32.mrf.mxu0
  %v337 = vadd.f32 0.0, %v336
  %338 = vdwg.mxu0
  %339 = vmatpush.msra.mxu0 %v316
  %340 = vmatpush.msra.mxu0 %v312
  %341 = vmatpush.msra.mxu0 %v308
  %342 = vmatpush.msra.mxu0 %v304
  %343 = vmatpush.msra.mxu0 %v300
  %344 = vmatpush.msra.mxu0 %v296
  %345 = vmatpush.msra.mxu0 %v292
  %346 = vmatpush.msra.mxu0 %v288
  %347 = vmatpush.msra.mxu0 %v284
  %348 = vmatpush.msra.mxu0 %v280
  %349 = vmatpush.msra.mxu0 %v276
  %350 = vmatpush.msra.mxu0 %v272
  %351 = vmatpush.msra.mxu0 %v268
  %352 = vmatpush.msra.mxu0 %v264
  %353 = vmatpush.msra.mxu0 %v260
  %354 = vmatpush.msra.mxu0 %v256
  %355 = vmatmul.f32.gmra.mxu0 0.0
  %v356 = vpop.f32.mrf.mxu0
  %v357 = vadd.f32 0.0, %v356
  %358 = vdwg.mxu0
  %359 = vmatpush.msra.mxu0 %v317
  %360 = vmatpush.msra.mxu0 %v313
  %361 = vmatpush.msra.mxu0 %v309
  %362 = vmatpush.msra.mxu0 %v305
  %363 = vmatpush.msra.mxu0 %v301
  %364 = vmatpush.msra.mxu0 %v297
  %365 = vmatpush.msra.mxu0 %v293
  %366 = vmatpush.msra.mxu0 %v289
  %367 = vmatpush.msra.mxu0 %v285
  %368 = vmatpush.msra.mxu0 %v281
  %369 = vmatpush.msra.mxu0 %v277
  %370 = vmatpush.msra.mxu0 %v273
  %371 = vmatpush.msra.mxu0 %v269
  %372 = vmatpush.msra.mxu0 %v265
  %373 = vmatpush.msra.mxu0 %v261
  %374 = vmatpush.msra.mxu0 %v257
  %375 = vmatmul.f32.gmra.mxu0 0.0
  %v376 = vpop.f32.mrf.mxu0
  %v377 = vadd.f32 0.0, %v376
  %378 = vdwg.mxu0
  %379 = vmatpush.msra.mxu0 %v318
  %380 = vmatpush.msra.mxu0 %v314
  %381 = vmatpush.msra.mxu0 %v310
  %382 = vmatpush.msra.mxu0 %v306
  %383 = vmatpush.msra.mxu0 %v302
  %384 = vmatpush.msra.mxu0 %v298
  %385 = vmatpush.msra.mxu0 %v294
  %386 = vmatpush.msra.mxu0 %v290
  %387 = vmatpush.msra.mxu0 %v286
  %388 = vmatpush.msra.mxu0 %v282
  %389 = vmatpush.msra.mxu0 %v278
  %390 = vmatpush.msra.mxu0 %v274
  %391 = vmatpush.msra.mxu0 %v270
  %392 = vmatpush.msra.mxu0 %v266
  %393 = vmatpush.msra.mxu0 %v262
  %394 = vmatpush.msra.mxu0 %v258
  %395 = vmatmul.f32.gmra.mxu0 0.0
  %v396 = vpop.f32.mrf.mxu0
  %v397 = vadd.f32 0.0, %v396
  %398 = vdwg.mxu0
  %v403 = vrot.slane %v337, 1
  %v404 = vrot.slane %v357, 1
  %v405 = vrot.slane %v377, 1
  %v406 = vrot.slane %v397, 1
  %v407 = vrot.slane %v337, 2
  %v408 = vrot.slane %v357, 2
  %v409 = vrot.slane %v377, 2
  %v410 = vrot.slane %v397, 2
  %v411 = vrot.slane %v337, 3
  %v412 = vrot.slane %v357, 3
  %v413 = vrot.slane %v377, 3
  %v414 = vrot.slane %v397, 3
  %v415 = vrot.slane %v337, 4
  %v416 = vrot.slane %v357, 4
  %v417 = vrot.slane %v377, 4
  %v418 = vrot.slane %v397, 4
  %v419 = vrot.slane %v337, 5
  %v420 = vrot.slane %v357, 5
  %v421 = vrot.slane %v377, 5
  %v422 = vrot.slane %v397, 5
  %v423 = vrot.slane %v337, 6
  %v424 = vrot.slane %v357, 6
  %v425 = vrot.slane %v377, 6
  %v426 = vrot.slane %v397, 6
  %v427 = vrot.slane %v337, 7
  %v428 = vrot.slane %v357, 7
  %v429 = vrot.slane %v377, 7
  %v430 = vrot.slane %v397, 7
  %v463 = vadd.f32 %v109, %v337
  %v464 = vadd.f32 %v150, %v357
  %v465 = vadd.f32 %v191, %v377
  %v466 = vadd.f32 %v232, %v397
  %v467 = vadd.f32 %v112, %v403
  %v468 = vadd.f32 %v153, %v404
  %v469 = vadd.f32 %v194, %v405
  %v470 = vadd.f32 %v235, %v406
  %v471 = vadd.f32 %v115, %v407
  %v472 = vadd.f32 %v156, %v408
  %v473 = vadd.f32 %v197, %v409
  %v474 = vadd.f32 %v238, %v410
  %v475 = vadd.f32 %v118, %v411
  %v476 = vadd.f32 %v159, %v412
  %v477 = vadd.f32 %v200, %v413
  %v478 = vadd.f32 %v241, %v414
  %v479 = vadd.f32 %v121, %v415
  %v480 = vadd.f32 %v162, %v416
  %v481 = vadd.f32 %v203, %v417
  %v482 = vadd.f32 %v244, %v418
  %v483 = vadd.f32 %v124, %v419
  %v484 = vadd.f32 %v165, %v420
  %v485 = vadd.f32 %v206, %v421
  %v486 = vadd.f32 %v247, %v422
  %v487 = vadd.f32 %v127, %v423
  %v488 = vadd.f32 %v168, %v424
  %v489 = vadd.f32 %v209, %v425
  %v490 = vadd.f32 %v250, %v426
  %v491 = vadd.f32 %v130, %v427
  %v492 = vadd.f32 %v171, %v428
  %v493 = vadd.f32 %v212, %v429
  %v494 = vadd.f32 %v253, %v430
  %v495 = vxor.u32 %v463, 2147483648
  %v496 = vxor.u32 %v467, 2147483648
  %v497 = vxor.u32 %v471, 2147483648
  %v498 = vxor.u32 %v475, 2147483648
  %v499 = vxor.u32 %v479, 2147483648
  %v500 = vxor.u32 %v483, 2147483648
  %v501 = vxor.u32 %v487, 2147483648
  %v502 = vxor.u32 %v491, 2147483648
  %v503 = vmul.f32 %v495, 1.442695
  %v504 = vpow.pop %v503
  %v505 = vmul.f32 %v496, 1.442695
  %v506 = vpow.pop %v505
  %v507 = vmul.f32 %v497, 1.442695
  %v508 = vpow.pop %v507
  %v509 = vmul.f32 %v498, 1.442695
  %v510 = vpow.pop %v509
  %v511 = vmul.f32 %v499, 1.442695
  %v512 = vpow.pop %v511
  %v513 = vmul.f32 %v500, 1.442695
  %v514 = vpow.pop %v513
  %v515 = vmul.f32 %v501, 1.442695
  %v516 = vpow.pop %v515
  %v517 = vmul.f32 %v502, 1.442695
  %v518 = vpow.pop %v517
  %v519 = vadd.f32 %v504, 1.0
  %v520 = vadd.f32 %v506, 1.0
  %v521 = vadd.f32 %v508, 1.0
  %v522 = vadd.f32 %v510, 1.0
  %v523 = vadd.f32 %v512, 1.0
  %v524 = vadd.f32 %v514, 1.0
  %v525 = vadd.f32 %v516, 1.0
  %v526 = vadd.f32 %v518, 1.0
  %v527 = vrcp.pop %v519
  %v528 = vmul.f32 %v519, %v527
  %v529 = vsub.f32 1.0, %v528
  %v530 = vmul.f32 %v527, %v529
  %v531 = vadd.f32 %v527, %v530
  %vm532 = vweird.f32 %v519
  %vm533 = vweird.f32 %v527
  %vm534 = vmor %vm532, %vm533
  %v535 = vsel %vm534, %v527, %v531
  %v536 = vand.u32 2147483647, %v519
  %vm537 = vcmp.eq.f32.partialorder %v536, 8.507059e+37
  %v538 = vand.u32 %v519, 2147483648
  %v539 = vor.u32 1.1754944e-38, %v538
  %v540 = vsel %vm537, %v539, %v535
  %v541 = vmul.f32 1.0, %v540
  %v542 = vrcp.pop %v520
  %v543 = vmul.f32 %v520, %v542
  %v544 = vsub.f32 1.0, %v543
  %v545 = vmul.f32 %v542, %v544
  %v546 = vadd.f32 %v542, %v545
  %vm547 = vweird.f32 %v520
  %vm548 = vweird.f32 %v542
  %vm549 = vmor %vm547, %vm548
  %v550 = vsel %vm549, %v542, %v546
  %v551 = vand.u32 2147483647, %v520
  %vm552 = vcmp.eq.f32.partialorder %v551, 8.507059e+37
  %v553 = vand.u32 %v520, 2147483648
  %v554 = vor.u32 1.1754944e-38, %v553
  %v555 = vsel %vm552, %v554, %v550
  %v556 = vmul.f32 1.0, %v555
  %v557 = vrcp.pop %v521
  %v558 = vmul.f32 %v521, %v557
  %v559 = vsub.f32 1.0, %v558
  %v560 = vmul.f32 %v557, %v559
  %v561 = vadd.f32 %v557, %v560
  %vm562 = vweird.f32 %v521
  %vm563 = vweird.f32 %v557
  %vm564 = vmor %vm562, %vm563
  %v565 = vsel %vm564, %v557, %v561
  %v566 = vand.u32 2147483647, %v521
  %vm567 = vcmp.eq.f32.partialorder %v566, 8.507059e+37
  %v568 = vand.u32 %v521, 2147483648
  %v569 = vor.u32 1.1754944e-38, %v568
  %v570 = vsel %vm567, %v569, %v565
  %v571 = vmul.f32 1.0, %v570
  %v572 = vrcp.pop %v522
  %v573 = vmul.f32 %v522, %v572
  %v574 = vsub.f32 1.0, %v573
  %v575 = vmul.f32 %v572, %v574
  %v576 = vadd.f32 %v572, %v575
  %vm577 = vweird.f32 %v522
  %vm578 = vweird.f32 %v572
  %vm579 = vmor %vm577, %vm578
  %v580 = vsel %vm579, %v572, %v576
  %v581 = vand.u32 2147483647, %v522
  %vm582 = vcmp.eq.f32.partialorder %v581, 8.507059e+37
  %v583 = vand.u32 %v522, 2147483648
  %v584 = vor.u32 1.1754944e-38, %v583
  %v585 = vsel %vm582, %v584, %v580
  %v586 = vmul.f32 1.0, %v585
  %v587 = vrcp.pop %v523
  %v588 = vmul.f32 %v523, %v587
  %v589 = vsub.f32 1.0, %v588
  %v590 = vmul.f32 %v587, %v589
  %v591 = vadd.f32 %v587, %v590
  %vm592 = vweird.f32 %v523
  %vm593 = vweird.f32 %v587
  %vm594 = vmor %vm592, %vm593
  %v595 = vsel %vm594, %v587, %v591
  %v596 = vand.u32 2147483647, %v523
  %vm597 = vcmp.eq.f32.partialorder %v596, 8.507059e+37
  %v598 = vand.u32 %v523, 2147483648
  %v599 = vor.u32 1.1754944e-38, %v598
  %v600 = vsel %vm597, %v599, %v595
  %v601 = vmul.f32 1.0, %v600
  %v602 = vrcp.pop %v524
  %v603 = vmul.f32 %v524, %v602
  %v604 = vsub.f32 1.0, %v603
  %v605 = vmul.f32 %v602, %v604
  %v606 = vadd.f32 %v602, %v605
  %vm607 = vweird.f32 %v524
  %vm608 = vweird.f32 %v602
  %vm609 = vmor %vm607, %vm608
  %v610 = vsel %vm609, %v602, %v606
  %v611 = vand.u32 2147483647, %v524
  %vm612 = vcmp.eq.f32.partialorder %v611, 8.507059e+37
  %v613 = vand.u32 %v524, 2147483648
  %v614 = vor.u32 1.1754944e-38, %v613
  %v615 = vsel %vm612, %v614, %v610
  %v616 = vmul.f32 1.0, %v615
  %v617 = vrcp.pop %v525
  %v618 = vmul.f32 %v525, %v617
  %v619 = vsub.f32 1.0, %v618
  %v620 = vmul.f32 %v617, %v619
  %v621 = vadd.f32 %v617, %v620
  %vm622 = vweird.f32 %v525
  %vm623 = vweird.f32 %v617
  %vm624 = vmor %vm622, %vm623
  %v625 = vsel %vm624, %v617, %v621
  %v626 = vand.u32 2147483647, %v525
  %vm627 = vcmp.eq.f32.partialorder %v626, 8.507059e+37
  %v628 = vand.u32 %v525, 2147483648
  %v629 = vor.u32 1.1754944e-38, %v628
  %v630 = vsel %vm627, %v629, %v625
  %v631 = vmul.f32 1.0, %v630
  %v632 = vrcp.pop %v526
  %v633 = vmul.f32 %v526, %v632
  %v634 = vsub.f32 1.0, %v633
  %v635 = vmul.f32 %v632, %v634
  %v636 = vadd.f32 %v632, %v635
  %vm637 = vweird.f32 %v526
  %vm638 = vweird.f32 %v632
  %vm639 = vmor %vm637, %vm638
  %v640 = vsel %vm639, %v632, %v636
  %v641 = vand.u32 2147483647, %v526
  %vm642 = vcmp.eq.f32.partialorder %v641, 8.507059e+37
  %v643 = vand.u32 %v526, 2147483648
  %v644 = vor.u32 1.1754944e-38, %v643
  %v645 = vsel %vm642, %v644, %v640
  %v646 = vmul.f32 1.0, %v645
  %v647 = vxor.u32 %v464, 2147483648
  %v648 = vxor.u32 %v468, 2147483648
  %v649 = vxor.u32 %v472, 2147483648
  %v650 = vxor.u32 %v476, 2147483648
  %v651 = vxor.u32 %v480, 2147483648
  %v652 = vxor.u32 %v484, 2147483648
  %v653 = vxor.u32 %v488, 2147483648
  %v654 = vxor.u32 %v492, 2147483648
  %v655 = vmul.f32 %v647, 1.442695
  %v656 = vpow.pop %v655
  %v657 = vmul.f32 %v648, 1.442695
  %v658 = vpow.pop %v657
  %v659 = vmul.f32 %v649, 1.442695
  %v660 = vpow.pop %v659
  %v661 = vmul.f32 %v650, 1.442695
  %v662 = vpow.pop %v661
  %v663 = vmul.f32 %v651, 1.442695
  %v664 = vpow.pop %v663
  %v665 = vmul.f32 %v652, 1.442695
  %v666 = vpow.pop %v665
  %v667 = vmul.f32 %v653, 1.442695
  %v668 = vpow.pop %v667
  %v669 = vmul.f32 %v654, 1.442695
  %v670 = vpow.pop %v669
  %v671 = vadd.f32 %v656, 1.0
  %v672 = vadd.f32 %v658, 1.0
  %v673 = vadd.f32 %v660, 1.0
  %v674 = vadd.f32 %v662, 1.0
  %v675 = vadd.f32 %v664, 1.0
  %v676 = vadd.f32 %v666, 1.0
  %v677 = vadd.f32 %v668, 1.0
  %v678 = vadd.f32 %v670, 1.0
  %v679 = vrcp.pop %v671
  %v680 = vmul.f32 %v671, %v679
  %v681 = vsub.f32 1.0, %v680
  %v682 = vmul.f32 %v679, %v681
  %v683 = vadd.f32 %v679, %v682
  %vm684 = vweird.f32 %v671
  %vm685 = vweird.f32 %v679
  %vm686 = vmor %vm684, %vm685
  %v687 = vsel %vm686, %v679, %v683
  %v688 = vand.u32 2147483647, %v671
  %vm689 = vcmp.eq.f32.partialorder %v688, 8.507059e+37
  %v690 = vand.u32 %v671, 2147483648
  %v691 = vor.u32 1.1754944e-38, %v690
  %v692 = vsel %vm689, %v691, %v687
  %v693 = vmul.f32 1.0, %v692
  %v694 = vrcp.pop %v672
  %v695 = vmul.f32 %v672, %v694
  %v696 = vsub.f32 1.0, %v695
  %v697 = vmul.f32 %v694, %v696
  %v698 = vadd.f32 %v694, %v697
  %vm699 = vweird.f32 %v672
  %vm700 = vweird.f32 %v694
  %vm701 = vmor %vm699, %vm700
  %v702 = vsel %vm701, %v694, %v698
  %v703 = vand.u32 2147483647, %v672
  %vm704 = vcmp.eq.f32.partialorder %v703, 8.507059e+37
  %v705 = vand.u32 %v672, 2147483648
  %v706 = vor.u32 1.1754944e-38, %v705
  %v707 = vsel %vm704, %v706, %v702
  %v708 = vmul.f32 1.0, %v707
  %v709 = vrcp.pop %v673
  %v710 = vmul.f32 %v673, %v709
  %v711 = vsub.f32 1.0, %v710
  %v712 = vmul.f32 %v709, %v711
  %v713 = vadd.f32 %v709, %v712
  %vm714 = vweird.f32 %v673
  %vm715 = vweird.f32 %v709
  %vm716 = vmor %vm714, %vm715
  %v717 = vsel %vm716, %v709, %v713
  %v718 = vand.u32 2147483647, %v673
  %vm719 = vcmp.eq.f32.partialorder %v718, 8.507059e+37
  %v720 = vand.u32 %v673, 2147483648
  %v721 = vor.u32 1.1754944e-38, %v720
  %v722 = vsel %vm719, %v721, %v717
  %v723 = vmul.f32 1.0, %v722
  %v724 = vrcp.pop %v674
  %v725 = vmul.f32 %v674, %v724
  %v726 = vsub.f32 1.0, %v725
  %v727 = vmul.f32 %v724, %v726
  %v728 = vadd.f32 %v724, %v727
  %vm729 = vweird.f32 %v674
  %vm730 = vweird.f32 %v724
  %vm731 = vmor %vm729, %vm730
  %v732 = vsel %vm731, %v724, %v728
  %v733 = vand.u32 2147483647, %v674
  %vm734 = vcmp.eq.f32.partialorder %v733, 8.507059e+37
  %v735 = vand.u32 %v674, 2147483648
  %v736 = vor.u32 1.1754944e-38, %v735
  %v737 = vsel %vm734, %v736, %v732
  %v738 = vmul.f32 1.0, %v737
  %v739 = vrcp.pop %v675
  %v740 = vmul.f32 %v675, %v739
  %v741 = vsub.f32 1.0, %v740
  %v742 = vmul.f32 %v739, %v741
  %v743 = vadd.f32 %v739, %v742
  %vm744 = vweird.f32 %v675
  %vm745 = vweird.f32 %v739
  %vm746 = vmor %vm744, %vm745
  %v747 = vsel %vm746, %v739, %v743
  %v748 = vand.u32 2147483647, %v675
  %vm749 = vcmp.eq.f32.partialorder %v748, 8.507059e+37
  %v750 = vand.u32 %v675, 2147483648
  %v751 = vor.u32 1.1754944e-38, %v750
  %v752 = vsel %vm749, %v751, %v747
  %v753 = vmul.f32 1.0, %v752
  %v754 = vrcp.pop %v676
  %v755 = vmul.f32 %v676, %v754
  %v756 = vsub.f32 1.0, %v755
  %v757 = vmul.f32 %v754, %v756
  %v758 = vadd.f32 %v754, %v757
  %vm759 = vweird.f32 %v676
  %vm760 = vweird.f32 %v754
  %vm761 = vmor %vm759, %vm760
  %v762 = vsel %vm761, %v754, %v758
  %v763 = vand.u32 2147483647, %v676
  %vm764 = vcmp.eq.f32.partialorder %v763, 8.507059e+37
  %v765 = vand.u32 %v676, 2147483648
  %v766 = vor.u32 1.1754944e-38, %v765
  %v767 = vsel %vm764, %v766, %v762
  %v768 = vmul.f32 1.0, %v767
  %v769 = vrcp.pop %v677
  %v770 = vmul.f32 %v677, %v769
  %v771 = vsub.f32 1.0, %v770
  %v772 = vmul.f32 %v769, %v771
  %v773 = vadd.f32 %v769, %v772
  %vm774 = vweird.f32 %v677
  %vm775 = vweird.f32 %v769
  %vm776 = vmor %vm774, %vm775
  %v777 = vsel %vm776, %v769, %v773
  %v778 = vand.u32 2147483647, %v677
  %vm779 = vcmp.eq.f32.partialorder %v778, 8.507059e+37
  %v780 = vand.u32 %v677, 2147483648
  %v781 = vor.u32 1.1754944e-38, %v780
  %v782 = vsel %vm779, %v781, %v777
  %v783 = vmul.f32 1.0, %v782
  %v784 = vrcp.pop %v678
  %v785 = vmul.f32 %v678, %v784
  %v786 = vsub.f32 1.0, %v785
  %v787 = vmul.f32 %v784, %v786
  %v788 = vadd.f32 %v784, %v787
  %vm789 = vweird.f32 %v678
  %vm790 = vweird.f32 %v784
  %vm791 = vmor %vm789, %vm790
  %v792 = vsel %vm791, %v784, %v788
  %v793 = vand.u32 2147483647, %v678
  %vm794 = vcmp.eq.f32.partialorder %v793, 8.507059e+37
  %v795 = vand.u32 %v678, 2147483648
  %v796 = vor.u32 1.1754944e-38, %v795
  %v797 = vsel %vm794, %v796, %v792
  %v798 = vmul.f32 1.0, %v797
  %v799 = vtanh.pop %v465
  %v800 = vtanh.pop %v469
  %v801 = vtanh.pop %v473
  %v802 = vtanh.pop %v477
  %v803 = vtanh.pop %v481
  %v804 = vtanh.pop %v485
  %v805 = vtanh.pop %v489
  %v806 = vtanh.pop %v493
  %v807 = vxor.u32 %v466, 2147483648
  %v808 = vxor.u32 %v470, 2147483648
  %v809 = vxor.u32 %v474, 2147483648
  %v810 = vxor.u32 %v478, 2147483648
  %v811 = vxor.u32 %v482, 2147483648
  %v812 = vxor.u32 %v486, 2147483648
  %v813 = vxor.u32 %v490, 2147483648
  %v814 = vxor.u32 %v494, 2147483648
  %v815 = vmul.f32 %v807, 1.442695
  %v816 = vpow.pop %v815
  %v817 = vmul.f32 %v808, 1.442695
  %v818 = vpow.pop %v817
  %v819 = vmul.f32 %v809, 1.442695
  %v820 = vpow.pop %v819
  %v821 = vmul.f32 %v810, 1.442695
  %v822 = vpow.pop %v821
  %v823 = vmul.f32 %v811, 1.442695
  %v824 = vpow.pop %v823
  %v825 = vmul.f32 %v812, 1.442695
  %v826 = vpow.pop %v825
  %v827 = vmul.f32 %v813, 1.442695
  %v828 = vpow.pop %v827
  %v829 = vmul.f32 %v814, 1.442695
  %v830 = vpow.pop %v829
  %v831 = vadd.f32 %v816, 1.0
  %v832 = vadd.f32 %v818, 1.0
  %v833 = vadd.f32 %v820, 1.0
  %v834 = vadd.f32 %v822, 1.0
  %v835 = vadd.f32 %v824, 1.0
  %v836 = vadd.f32 %v826, 1.0
  %v837 = vadd.f32 %v828, 1.0
  %v838 = vadd.f32 %v830, 1.0
  %v839 = vrcp.pop %v831
  %v840 = vmul.f32 %v831, %v839
  %v841 = vsub.f32 1.0, %v840
  %v842 = vmul.f32 %v839, %v841
  %v843 = vadd.f32 %v839, %v842
  %vm844 = vweird.f32 %v831
  %vm845 = vweird.f32 %v839
  %vm846 = vmor %vm844, %vm845
  %v847 = vsel %vm846, %v839, %v843
  %v848 = vand.u32 2147483647, %v831
  %vm849 = vcmp.eq.f32.partialorder %v848, 8.507059e+37
  %v850 = vand.u32 %v831, 2147483648
  %v851 = vor.u32 1.1754944e-38, %v850
  %v852 = vsel %vm849, %v851, %v847
  %v853 = vmul.f32 1.0, %v852
  %v854 = vrcp.pop %v832
  %v855 = vmul.f32 %v832, %v854
  %v856 = vsub.f32 1.0, %v855
  %v857 = vmul.f32 %v854, %v856
  %v858 = vadd.f32 %v854, %v857
  %vm859 = vweird.f32 %v832
  %vm860 = vweird.f32 %v854
  %vm861 = vmor %vm859, %vm860
  %v862 = vsel %vm861, %v854, %v858
  %v863 = vand.u32 2147483647, %v832
  %vm864 = vcmp.eq.f32.partialorder %v863, 8.507059e+37
  %v865 = vand.u32 %v832, 2147483648
  %v866 = vor.u32 1.1754944e-38, %v865
  %v867 = vsel %vm864, %v866, %v862
  %v868 = vmul.f32 1.0, %v867
  %v869 = vrcp.pop %v833
  %v870 = vmul.f32 %v833, %v869
  %v871 = vsub.f32 1.0, %v870
  %v872 = vmul.f32 %v869, %v871
  %v873 = vadd.f32 %v869, %v872
  %vm874 = vweird.f32 %v833
  %vm875 = vweird.f32 %v869
  %vm876 = vmor %vm874, %vm875
  %v877 = vsel %vm876, %v869, %v873
  %v878 = vand.u32 2147483647, %v833
  %vm879 = vcmp.eq.f32.partialorder %v878, 8.507059e+37
  %v880 = vand.u32 %v833, 2147483648
  %v881 = vor.u32 1.1754944e-38, %v880
  %v882 = vsel %vm879, %v881, %v877
  %v883 = vmul.f32 1.0, %v882
  %v884 = vrcp.pop %v834
  %v885 = vmul.f32 %v834, %v884
  %v886 = vsub.f32 1.0, %v885
  %v887 = vmul.f32 %v884, %v886
  %v888 = vadd.f32 %v884, %v887
  %vm889 = vweird.f32 %v834
  %vm890 = vweird.f32 %v884
  %vm891 = vmor %vm889, %vm890
  %v892 = vsel %vm891, %v884, %v888
  %v893 = vand.u32 2147483647, %v834
  %vm894 = vcmp.eq.f32.partialorder %v893, 8.507059e+37
  %v895 = vand.u32 %v834, 2147483648
  %v896 = vor.u32 1.1754944e-38, %v895
  %v897 = vsel %vm894, %v896, %v892
  %v898 = vmul.f32 1.0, %v897
  %v899 = vrcp.pop %v835
  %v900 = vmul.f32 %v835, %v899
  %v901 = vsub.f32 1.0, %v900
  %v902 = vmul.f32 %v899, %v901
  %v903 = vadd.f32 %v899, %v902
  %vm904 = vweird.f32 %v835
  %vm905 = vweird.f32 %v899
  %vm906 = vmor %vm904, %vm905
  %v907 = vsel %vm906, %v899, %v903
  %v908 = vand.u32 2147483647, %v835
  %vm909 = vcmp.eq.f32.partialorder %v908, 8.507059e+37
  %v910 = vand.u32 %v835, 2147483648
  %v911 = vor.u32 1.1754944e-38, %v910
  %v912 = vsel %vm909, %v911, %v907
  %v913 = vmul.f32 1.0, %v912
  %v914 = vrcp.pop %v836
  %v915 = vmul.f32 %v836, %v914
  %v916 = vsub.f32 1.0, %v915
  %v917 = vmul.f32 %v914, %v916
  %v918 = vadd.f32 %v914, %v917
  %vm919 = vweird.f32 %v836
  %vm920 = vweird.f32 %v914
  %vm921 = vmor %vm919, %vm920
  %v922 = vsel %vm921, %v914, %v918
  %v923 = vand.u32 2147483647, %v836
  %vm924 = vcmp.eq.f32.partialorder %v923, 8.507059e+37
  %v925 = vand.u32 %v836, 2147483648
  %v926 = vor.u32 1.1754944e-38, %v925
  %v927 = vsel %vm924, %v926, %v922
  %v928 = vmul.f32 1.0, %v927
  %v929 = vrcp.pop %v837
  %v930 = vmul.f32 %v837, %v929
  %v931 = vsub.f32 1.0, %v930
  %v932 = vmul.f32 %v929, %v931
  %v933 = vadd.f32 %v929, %v932
  %vm934 = vweird.f32 %v837
  %vm935 = vweird.f32 %v929
  %vm936 = vmor %vm934, %vm935
  %v937 = vsel %vm936, %v929, %v933
  %v938 = vand.u32 2147483647, %v837
  %vm939 = vcmp.eq.f32.partialorder %v938, 8.507059e+37
  %v940 = vand.u32 %v837, 2147483648
  %v941 = vor.u32 1.1754944e-38, %v940
  %v942 = vsel %vm939, %v941, %v937
  %v943 = vmul.f32 1.0, %v942
  %v944 = vrcp.pop %v838
  %v945 = vmul.f32 %v838, %v944
  %v946 = vsub.f32 1.0, %v945
  %v947 = vmul.f32 %v944, %v946
  %v948 = vadd.f32 %v944, %v947
  %vm949 = vweird.f32 %v838
  %vm950 = vweird.f32 %v944
  %vm951 = vmor %vm949, %vm950
  %v952 = vsel %vm951, %v944, %v948
  %v953 = vand.u32 2147483647, %v838
  %vm954 = vcmp.eq.f32.partialorder %v953, 8.507059e+37
  %v955 = vand.u32 %v838, 2147483648
  %v956 = vor.u32 1.1754944e-38, %v955
  %v957 = vsel %vm954, %v956, %v952
  %v958 = vmul.f32 1.0, %v957
  %v959 = vmul.f32 %v693, 0.0
  %v960 = vmul.f32 %v708, 0.0
  %v961 = vmul.f32 %v723, 0.0
  %v962 = vmul.f32 %v738, 0.0
  %v963 = vmul.f32 %v753, 0.0
  %v964 = vmul.f32 %v768, 0.0
  %v965 = vmul.f32 %v783, 0.0
  %v966 = vmul.f32 %v798, 0.0
  %v967 = vmul.f32 %v541, %v799
  %v968 = vmul.f32 %v556, %v800
  %v969 = vmul.f32 %v571, %v801
  %v970 = vmul.f32 %v586, %v802
  %v971 = vmul.f32 %v601, %v803
  %v972 = vmul.f32 %v616, %v804
  %v973 = vmul.f32 %v631, %v805
  %v974 = vmul.f32 %v646, %v806
  %v975 = vadd.f32 %v959, %v967
  %v976 = vadd.f32 %v960, %v968
  %v977 = vadd.f32 %v961, %v969
  %v978 = vadd.f32 %v962, %v970
  %v979 = vadd.f32 %v963, %v971
  %v980 = vadd.f32 %v964, %v972
  %v981 = vadd.f32 %v965, %v973
  %v982 = vadd.f32 %v966, %v974
  %v983 = vtanh.pop %v975
  %v984 = vtanh.pop %v976
  %v985 = vtanh.pop %v977
  %v986 = vtanh.pop %v978
  %v987 = vtanh.pop %v979
  %v988 = vtanh.pop %v980
  %v989 = vtanh.pop %v981
  %v990 = vtanh.pop %v982
  %v991 = vmul.f32 %v853, %v983
  %v992 = vmul.f32 %v868, %v984
  %v993 = vmul.f32 %v883, %v985
  %v994 = vmul.f32 %v898, %v986
  %v995 = vmul.f32 %v913, %v987
  %v996 = vmul.f32 %v928, %v988
  %v997 = vmul.f32 %v943, %v989
  %v998 = vmul.f32 %v958, %v990
  %v1007 = vrot.slane %v992, 7
  %vm1008 = vcmask 1041409
  %v1009 = vsel %vm1008, %v1007, %v991
  %v1010 = vrot.slane %v993, 6
  %vm1011 = vcmask 1042434
  %v1012 = vsel %vm1011, %v1010, %v1009
  %v1013 = vrot.slane %v994, 5
  %vm1014 = vcmask 1043459
  %v1015 = vsel %vm1014, %v1013, %v1012
  %v1016 = vrot.slane %v995, 4
  %vm1017 = vcmask 1044484
  %v1018 = vsel %vm1017, %v1016, %v1015
  %v1019 = vrot.slane %v996, 3
  %vm1020 = vcmask 1045509
  %v1021 = vsel %vm1020, %v1019, %v1018
  %v1022 = vrot.slane %v997, 2
  %vm1023 = vcmask 1046534
  %v1024 = vsel %vm1023, %v1022, %v1021
  %v1025 = vrot.slane %v998, 1
  %vm1026 = vcmask 1047559
  %v1027 = vsel %vm1026, %v1025, %v1024
  %1029 = vmatpush.msra.mxu0 %v315
  %1030 = vmatpush.msra.mxu0 %v311
  %1031 = vmatpush.msra.mxu0 %v307
  %1032 = vmatpush.msra.mxu0 %v303
  %1033 = vmatpush.msra.mxu0 %v299
  %1034 = vmatpush.msra.mxu0 %v295
  %1035 = vmatpush.msra.mxu0 %v291
  %1036 = vmatpush.msra.mxu0 %v287
  %1037 = vmatpush.msra.mxu0 %v283
  %1038 = vmatpush.msra.mxu0 %v279
  %1039 = vmatpush.msra.mxu0 %v275
  %1040 = vmatpush.msra.mxu0 %v271
  %1041 = vmatpush.msra.mxu0 %v267
  %1042 = vmatpush.msra.mxu0 %v263
  %1043 = vmatpush.msra.mxu0 %v259
  %1044 = vmatpush.msra.mxu0 %v255
  %1045 = vmatmul.f32.gmra.mxu0 %v1027
  %v1046 = vpop.f32.mrf.mxu0
  %v1047 = vadd.f32 0.0, %v1046
  %1048 = vdwg.mxu0
  %1049 = vmatpush.msra.mxu0 %v316
  %1050 = vmatpush.msra.mxu0 %v312
  %1051 = vmatpush.msra.mxu0 %v308
  %1052 = vmatpush.msra.mxu0 %v304
  %1053 = vmatpush.msra.mxu0 %v300
  %1054 = vmatpush.msra.mxu0 %v296
  %1055 = vmatpush.msra.mxu0 %v292
  %1056 = vmatpush.msra.mxu0 %v288
  %1057 = vmatpush.msra.mxu0 %v284
  %1058 = vmatpush.msra.mxu0 %v280
  %1059 = vmatpush.msra.mxu0 %v276
  %1060 = vmatpush.msra.mxu0 %v272
  %1061 = vmatpush.msra.mxu0 %v268
  %1062 = vmatpush.msra.mxu0 %v264
  %1063 = vmatpush.msra.mxu0 %v260
  %1064 = vmatpush.msra.mxu0 %v256
  %1065 = vmatmul.f32.gmra.mxu0 %v1027
  %v1066 = vpop.f32.mrf.mxu0
  %v1067 = vadd.f32 0.0, %v1066
  %1068 = vdwg.mxu0
  %1069 = vmatpush.msra.mxu0 %v317
  %1070 = vmatpush.msra.mxu0 %v313
  %1071 = vmatpush.msra.mxu0 %v309
  %1072 = vmatpush.msra.mxu0 %v305
  %1073 = vmatpush.msra.mxu0 %v301
  %1074 = vmatpush.msra.mxu0 %v297
  %1075 = vmatpush.msra.mxu0 %v293
  %1076 = vmatpush.msra.mxu0 %v289
  %1077 = vmatpush.msra.mxu0 %v285
  %1078 = vmatpush.msra.mxu0 %v281
  %1079 = vmatpush.msra.mxu0 %v277
  %1080 = vmatpush.msra.mxu0 %v273
  %1081 = vmatpush.msra.mxu0 %v269
  %1082 = vmatpush.msra.mxu0 %v265
  %1083 = vmatpush.msra.mxu0 %v261
  %1084 = vmatpush.msra.mxu0 %v257
  %1085 = vmatmul.f32.gmra.mxu0 %v1027
  %v1086 = vpop.f32.mrf.mxu0
  %v1087 = vadd.f32 0.0, %v1086
  %1088 = vdwg.mxu0
  %1089 = vmatpush.msra.mxu0 %v318
  %1090 = vmatpush.msra.mxu0 %v314
  %1091 = vmatpush.msra.mxu0 %v310
  %1092 = vmatpush.msra.mxu0 %v306
  %1093 = vmatpush.msra.mxu0 %v302
  %1094 = vmatpush.msra.mxu0 %v298
  %1095 = vmatpush.msra.mxu0 %v294
  %1096 = vmatpush.msra.mxu0 %v290
  %1097 = vmatpush.msra.mxu0 %v286
  %1098 = vmatpush.msra.mxu0 %v282
  %1099 = vmatpush.msra.mxu0 %v278
  %1100 = vmatpush.msra.mxu0 %v274
  %1101 = vmatpush.msra.mxu0 %v270
  %1102 = vmatpush.msra.mxu0 %v266
  %1103 = vmatpush.msra.mxu0 %v262
  %1104 = vmatpush.msra.mxu0 %v258
  %1105 = vmatmul.f32.gmra.mxu0 %v1027
  %v1106 = vpop.f32.mrf.mxu0
  %v1107 = vadd.f32 0.0, %v1106
  %1108 = vdwg.mxu0
  %v1113 = vrot.slane %v1047, 7
  %v1114 = vrot.slane %v1067, 7
  %v1115 = vrot.slane %v1087, 7
  %v1116 = vrot.slane %v1107, 7
  %v1117 = vrot.slane %v1047, 1
  %v1118 = vrot.slane %v1067, 1
  %v1119 = vrot.slane %v1087, 1
  %v1120 = vrot.slane %v1107, 1
  %v1121 = vrot.slane %v1047, 2
  %v1122 = vrot.slane %v1067, 2
  %v1123 = vrot.slane %v1087, 2
  %v1124 = vrot.slane %v1107, 2
  %v1125 = vrot.slane %v1047, 3
  %v1126 = vrot.slane %v1067, 3
  %v1127 = vrot.slane %v1087, 3
  %v1128 = vrot.slane %v1107, 3
  %v1129 = vrot.slane %v1047, 4
  %v1130 = vrot.slane %v1067, 4
  %v1131 = vrot.slane %v1087, 4
  %v1132 = vrot.slane %v1107, 4
  %v1133 = vrot.slane %v1047, 5
  %v1134 = vrot.slane %v1067, 5
  %v1135 = vrot.slane %v1087, 5
  %v1136 = vrot.slane %v1107, 5
  %v1137 = vrot.slane %v1047, 6
  %v1138 = vrot.slane %v1067, 6
  %v1139 = vrot.slane %v1087, 6
  %v1140 = vrot.slane %v1107, 6
  %v1173 = vadd.f32 %v109, %v1113
  %v1174 = vadd.f32 %v150, %v1114
  %v1175 = vadd.f32 %v191, %v1115
  %v1176 = vadd.f32 %v232, %v1116
  %v1177 = vadd.f32 %v112, %v1047
  %v1178 = vadd.f32 %v153, %v1067
  %v1179 = vadd.f32 %v194, %v1087
  %v1180 = vadd.f32 %v235, %v1107
  %v1181 = vadd.f32 %v115, %v1117
  %v1182 = vadd.f32 %v156, %v1118
  %v1183 = vadd.f32 %v197, %v1119
  %v1184 = vadd.f32 %v238, %v1120
  %v1185 = vadd.f32 %v118, %v1121
  %v1186 = vadd.f32 %v159, %v1122
  %v1187 = vadd.f32 %v200, %v1123
  %v1188 = vadd.f32 %v241, %v1124
  %v1189 = vadd.f32 %v121, %v1125
  %v1190 = vadd.f32 %v162, %v1126
  %v1191 = vadd.f32 %v203, %v1127
  %v1192 = vadd.f32 %v244, %v1128
  %v1193 = vadd.f32 %v124, %v1129
  %v1194 = vadd.f32 %v165, %v1130
  %v1195 = vadd.f32 %v206, %v1131
  %v1196 = vadd.f32 %v247, %v1132
  %v1197 = vadd.f32 %v127, %v1133
  %v1198 = vadd.f32 %v168, %v1134
  %v1199 = vadd.f32 %v209, %v1135
  %v1200 = vadd.f32 %v250, %v1136
  %v1201 = vadd.f32 %v130, %v1137
  %v1202 = vadd.f32 %v171, %v1138
  %v1203 = vadd.f32 %v212, %v1139
  %v1204 = vadd.f32 %v253, %v1140
  %v1205 = vxor.u32 %v1173, 2147483648
  %v1206 = vxor.u32 %v1177, 2147483648
  %v1207 = vxor.u32 %v1181, 2147483648
  %v1208 = vxor.u32 %v1185, 2147483648
  %v1209 = vxor.u32 %v1189, 2147483648
  %v1210 = vxor.u32 %v1193, 2147483648
  %v1211 = vxor.u32 %v1197, 2147483648
  %v1212 = vxor.u32 %v1201, 2147483648
  %v1213 = vmul.f32 %v1205, 1.442695
  %v1214 = vpow.pop %v1213
  %v1215 = vmul.f32 %v1206, 1.442695
  %v1216 = vpow.pop %v1215
  %v1217 = vmul.f32 %v1207, 1.442695
  %v1218 = vpow.pop %v1217
  %v1219 = vmul.f32 %v1208, 1.442695
  %v1220 = vpow.pop %v1219
  %v1221 = vmul.f32 %v1209, 1.442695
  %v1222 = vpow.pop %v1221
  %v1223 = vmul.f32 %v1210, 1.442695
  %v1224 = vpow.pop %v1223
  %v1225 = vmul.f32 %v1211, 1.442695
  %v1226 = vpow.pop %v1225
  %v1227 = vmul.f32 %v1212, 1.442695
  %v1228 = vpow.pop %v1227
  %v1229 = vadd.f32 %v1214, 1.0
  %v1230 = vadd.f32 %v1216, 1.0
  %v1231 = vadd.f32 %v1218, 1.0
  %v1232 = vadd.f32 %v1220, 1.0
  %v1233 = vadd.f32 %v1222, 1.0
  %v1234 = vadd.f32 %v1224, 1.0
  %v1235 = vadd.f32 %v1226, 1.0
  %v1236 = vadd.f32 %v1228, 1.0
  %v1237 = vrcp.pop %v1229
  %v1238 = vmul.f32 %v1229, %v1237
  %v1239 = vsub.f32 1.0, %v1238
  %v1240 = vmul.f32 %v1237, %v1239
  %v1241 = vadd.f32 %v1237, %v1240
  %vm1242 = vweird.f32 %v1229
  %vm1243 = vweird.f32 %v1237
  %vm1244 = vmor %vm1242, %vm1243
  %v1245 = vsel %vm1244, %v1237, %v1241
  %v1246 = vand.u32 2147483647, %v1229
  %vm1247 = vcmp.eq.f32.partialorder %v1246, 8.507059e+37
  %v1248 = vand.u32 %v1229, 2147483648
  %v1249 = vor.u32 1.1754944e-38, %v1248
  %v1250 = vsel %vm1247, %v1249, %v1245
  %v1251 = vmul.f32 1.0, %v1250
  %v1252 = vrcp.pop %v1230
  %v1253 = vmul.f32 %v1230, %v1252
  %v1254 = vsub.f32 1.0, %v1253
  %v1255 = vmul.f32 %v1252, %v1254
  %v1256 = vadd.f32 %v1252, %v1255
  %vm1257 = vweird.f32 %v1230
  %vm1258 = vweird.f32 %v1252
  %vm1259 = vmor %vm1257, %vm1258
  %v1260 = vsel %vm1259, %v1252, %v1256
  %v1261 = vand.u32 2147483647, %v1230
  %vm1262 = vcmp.eq.f32.partialorder %v1261, 8.507059e+37
  %v1263 = vand.u32 %v1230, 2147483648
  %v1264 = vor.u32 1.1754944e-38, %v1263
  %v1265 = vsel %vm1262, %v1264, %v1260
  %v1266 = vmul.f32 1.0, %v1265
  %v1267 = vrcp.pop %v1231
  %v1268 = vmul.f32 %v1231, %v1267
  %v1269 = vsub.f32 1.0, %v1268
  %v1270 = vmul.f32 %v1267, %v1269
  %v1271 = vadd.f32 %v1267, %v1270
  %vm1272 = vweird.f32 %v1231
  %vm1273 = vweird.f32 %v1267
  %vm1274 = vmor %vm1272, %vm1273
  %v1275 = vsel %vm1274, %v1267, %v1271
  %v1276 = vand.u32 2147483647, %v1231
  %vm1277 = vcmp.eq.f32.partialorder %v1276, 8.507059e+37
  %v1278 = vand.u32 %v1231, 2147483648
  %v1279 = vor.u32 1.1754944e-38, %v1278
  %v1280 = vsel %vm1277, %v1279, %v1275
  %v1281 = vmul.f32 1.0, %v1280
  %v1282 = vrcp.pop %v1232
  %v1283 = vmul.f32 %v1232, %v1282
  %v1284 = vsub.f32 1.0, %v1283
  %v1285 = vmul.f32 %v1282, %v1284
  %v1286 = vadd.f32 %v1282, %v1285
  %vm1287 = vweird.f32 %v1232
  %vm1288 = vweird.f32 %v1282
  %vm1289 = vmor %vm1287, %vm1288
  %v1290 = vsel %vm1289, %v1282, %v1286
  %v1291 = vand.u32 2147483647, %v1232
  %vm1292 = vcmp.eq.f32.partialorder %v1291, 8.507059e+37
  %v1293 = vand.u32 %v1232, 2147483648
  %v1294 = vor.u32 1.1754944e-38, %v1293
  %v1295 = vsel %vm1292, %v1294, %v1290
  %v1296 = vmul.f32 1.0, %v1295
  %v1297 = vrcp.pop %v1233
  %v1298 = vmul.f32 %v1233, %v1297
  %v1299 = vsub.f32 1.0, %v1298
  %v1300 = vmul.f32 %v1297, %v1299
  %v1301 = vadd.f32 %v1297, %v1300
  %vm1302 = vweird.f32 %v1233
  %vm1303 = vweird.f32 %v1297
  %vm1304 = vmor %vm1302, %vm1303
  %v1305 = vsel %vm1304, %v1297, %v1301
  %v1306 = vand.u32 2147483647, %v1233
  %vm1307 = vcmp.eq.f32.partialorder %v1306, 8.507059e+37
  %v1308 = vand.u32 %v1233, 2147483648
  %v1309 = vor.u32 1.1754944e-38, %v1308
  %v1310 = vsel %vm1307, %v1309, %v1305
  %v1311 = vmul.f32 1.0, %v1310
  %v1312 = vrcp.pop %v1234
  %v1313 = vmul.f32 %v1234, %v1312
  %v1314 = vsub.f32 1.0, %v1313
  %v1315 = vmul.f32 %v1312, %v1314
  %v1316 = vadd.f32 %v1312, %v1315
  %vm1317 = vweird.f32 %v1234
  %vm1318 = vweird.f32 %v1312
  %vm1319 = vmor %vm1317, %vm1318
  %v1320 = vsel %vm1319, %v1312, %v1316
  %v1321 = vand.u32 2147483647, %v1234
  %vm1322 = vcmp.eq.f32.partialorder %v1321, 8.507059e+37
  %v1323 = vand.u32 %v1234, 2147483648
  %v1324 = vor.u32 1.1754944e-38, %v1323
  %v1325 = vsel %vm1322, %v1324, %v1320
  %v1326 = vmul.f32 1.0, %v1325
  %v1327 = vrcp.pop %v1235
  %v1328 = vmul.f32 %v1235, %v1327
  %v1329 = vsub.f32 1.0, %v1328
  %v1330 = vmul.f32 %v1327, %v1329
  %v1331 = vadd.f32 %v1327, %v1330
  %vm1332 = vweird.f32 %v1235
  %vm1333 = vweird.f32 %v1327
  %vm1334 = vmor %vm1332, %vm1333
  %v1335 = vsel %vm1334, %v1327, %v1331
  %v1336 = vand.u32 2147483647, %v1235
  %vm1337 = vcmp.eq.f32.partialorder %v1336, 8.507059e+37
  %v1338 = vand.u32 %v1235, 2147483648
  %v1339 = vor.u32 1.1754944e-38, %v1338
  %v1340 = vsel %vm1337, %v1339, %v1335
  %v1341 = vmul.f32 1.0, %v1340
  %v1342 = vrcp.pop %v1236
  %v1343 = vmul.f32 %v1236, %v1342
  %v1344 = vsub.f32 1.0, %v1343
  %v1345 = vmul.f32 %v1342, %v1344
  %v1346 = vadd.f32 %v1342, %v1345
  %vm1347 = vweird.f32 %v1236
  %vm1348 = vweird.f32 %v1342
  %vm1349 = vmor %vm1347, %vm1348
  %v1350 = vsel %vm1349, %v1342, %v1346
  %v1351 = vand.u32 2147483647, %v1236
  %vm1352 = vcmp.eq.f32.partialorder %v1351, 8.507059e+37
  %v1353 = vand.u32 %v1236, 2147483648
  %v1354 = vor.u32 1.1754944e-38, %v1353
  %v1355 = vsel %vm1352, %v1354, %v1350
  %v1356 = vmul.f32 1.0, %v1355
  %v1357 = vxor.u32 %v1174, 2147483648
  %v1358 = vxor.u32 %v1178, 2147483648
  %v1359 = vxor.u32 %v1182, 2147483648
  %v1360 = vxor.u32 %v1186, 2147483648
  %v1361 = vxor.u32 %v1190, 2147483648
  %v1362 = vxor.u32 %v1194, 2147483648
  %v1363 = vxor.u32 %v1198, 2147483648
  %v1364 = vxor.u32 %v1202, 2147483648
  %v1365 = vmul.f32 %v1357, 1.442695
  %v1366 = vpow.pop %v1365
  %v1367 = vmul.f32 %v1358, 1.442695
  %v1368 = vpow.pop %v1367
  %v1369 = vmul.f32 %v1359, 1.442695
  %v1370 = vpow.pop %v1369
  %v1371 = vmul.f32 %v1360, 1.442695
  %v1372 = vpow.pop %v1371
  %v1373 = vmul.f32 %v1361, 1.442695
  %v1374 = vpow.pop %v1373
  %v1375 = vmul.f32 %v1362, 1.442695
  %v1376 = vpow.pop %v1375
  %v1377 = vmul.f32 %v1363, 1.442695
  %v1378 = vpow.pop %v1377
  %v1379 = vmul.f32 %v1364, 1.442695
  %v1380 = vpow.pop %v1379
  %v1381 = vadd.f32 %v1366, 1.0
  %v1382 = vadd.f32 %v1368, 1.0
  %v1383 = vadd.f32 %v1370, 1.0
  %v1384 = vadd.f32 %v1372, 1.0
  %v1385 = vadd.f32 %v1374, 1.0
  %v1386 = vadd.f32 %v1376, 1.0
  %v1387 = vadd.f32 %v1378, 1.0
  %v1388 = vadd.f32 %v1380, 1.0
  %v1389 = vrcp.pop %v1381
  %v1390 = vmul.f32 %v1381, %v1389
  %v1391 = vsub.f32 1.0, %v1390
  %v1392 = vmul.f32 %v1389, %v1391
  %v1393 = vadd.f32 %v1389, %v1392
  %vm1394 = vweird.f32 %v1381
  %vm1395 = vweird.f32 %v1389
  %vm1396 = vmor %vm1394, %vm1395
  %v1397 = vsel %vm1396, %v1389, %v1393
  %v1398 = vand.u32 2147483647, %v1381
  %vm1399 = vcmp.eq.f32.partialorder %v1398, 8.507059e+37
  %v1400 = vand.u32 %v1381, 2147483648
  %v1401 = vor.u32 1.1754944e-38, %v1400
  %v1402 = vsel %vm1399, %v1401, %v1397
  %v1403 = vmul.f32 1.0, %v1402
  %v1404 = vrcp.pop %v1382
  %v1405 = vmul.f32 %v1382, %v1404
  %v1406 = vsub.f32 1.0, %v1405
  %v1407 = vmul.f32 %v1404, %v1406
  %v1408 = vadd.f32 %v1404, %v1407
  %vm1409 = vweird.f32 %v1382
  %vm1410 = vweird.f32 %v1404
  %vm1411 = vmor %vm1409, %vm1410
  %v1412 = vsel %vm1411, %v1404, %v1408
  %v1413 = vand.u32 2147483647, %v1382
  %vm1414 = vcmp.eq.f32.partialorder %v1413, 8.507059e+37
  %v1415 = vand.u32 %v1382, 2147483648
  %v1416 = vor.u32 1.1754944e-38, %v1415
  %v1417 = vsel %vm1414, %v1416, %v1412
  %v1418 = vmul.f32 1.0, %v1417
  %v1419 = vrcp.pop %v1383
  %v1420 = vmul.f32 %v1383, %v1419
  %v1421 = vsub.f32 1.0, %v1420
  %v1422 = vmul.f32 %v1419, %v1421
  %v1423 = vadd.f32 %v1419, %v1422
  %vm1424 = vweird.f32 %v1383
  %vm1425 = vweird.f32 %v1419
  %vm1426 = vmor %vm1424, %vm1425
  %v1427 = vsel %vm1426, %v1419, %v1423
  %v1428 = vand.u32 2147483647, %v1383
  %vm1429 = vcmp.eq.f32.partialorder %v1428, 8.507059e+37
  %v1430 = vand.u32 %v1383, 2147483648
  %v1431 = vor.u32 1.1754944e-38, %v1430
  %v1432 = vsel %vm1429, %v1431, %v1427
  %v1433 = vmul.f32 1.0, %v1432
  %v1434 = vrcp.pop %v1384
  %v1435 = vmul.f32 %v1384, %v1434
  %v1436 = vsub.f32 1.0, %v1435
  %v1437 = vmul.f32 %v1434, %v1436
  %v1438 = vadd.f32 %v1434, %v1437
  %vm1439 = vweird.f32 %v1384
  %vm1440 = vweird.f32 %v1434
  %vm1441 = vmor %vm1439, %vm1440
  %v1442 = vsel %vm1441, %v1434, %v1438
  %v1443 = vand.u32 2147483647, %v1384
  %vm1444 = vcmp.eq.f32.partialorder %v1443, 8.507059e+37
  %v1445 = vand.u32 %v1384, 2147483648
  %v1446 = vor.u32 1.1754944e-38, %v1445
  %v1447 = vsel %vm1444, %v1446, %v1442
  %v1448 = vmul.f32 1.0, %v1447
  %v1449 = vrcp.pop %v1385
  %v1450 = vmul.f32 %v1385, %v1449
  %v1451 = vsub.f32 1.0, %v1450
  %v1452 = vmul.f32 %v1449, %v1451
  %v1453 = vadd.f32 %v1449, %v1452
  %vm1454 = vweird.f32 %v1385
  %vm1455 = vweird.f32 %v1449
  %vm1456 = vmor %vm1454, %vm1455
  %v1457 = vsel %vm1456, %v1449, %v1453
  %v1458 = vand.u32 2147483647, %v1385
  %vm1459 = vcmp.eq.f32.partialorder %v1458, 8.507059e+37
  %v1460 = vand.u32 %v1385, 2147483648
  %v1461 = vor.u32 1.1754944e-38, %v1460
  %v1462 = vsel %vm1459, %v1461, %v1457
  %v1463 = vmul.f32 1.0, %v1462
  %v1464 = vrcp.pop %v1386
  %v1465 = vmul.f32 %v1386, %v1464
  %v1466 = vsub.f32 1.0, %v1465
  %v1467 = vmul.f32 %v1464, %v1466
  %v1468 = vadd.f32 %v1464, %v1467
  %vm1469 = vweird.f32 %v1386
  %vm1470 = vweird.f32 %v1464
  %vm1471 = vmor %vm1469, %vm1470
  %v1472 = vsel %vm1471, %v1464, %v1468
  %v1473 = vand.u32 2147483647, %v1386
  %vm1474 = vcmp.eq.f32.partialorder %v1473, 8.507059e+37
  %v1475 = vand.u32 %v1386, 2147483648
  %v1476 = vor.u32 1.1754944e-38, %v1475
  %v1477 = vsel %vm1474, %v1476, %v1472
  %v1478 = vmul.f32 1.0, %v1477
  %v1479 = vrcp.pop %v1387
  %v1480 = vmul.f32 %v1387, %v1479
  %v1481 = vsub.f32 1.0, %v1480
  %v1482 = vmul.f32 %v1479, %v1481
  %v1483 = vadd.f32 %v1479, %v1482
  %vm1484 = vweird.f32 %v1387
  %vm1485 = vweird.f32 %v1479
  %vm1486 = vmor %vm1484, %vm1485
  %v1487 = vsel %vm1486, %v1479, %v1483
  %v1488 = vand.u32 2147483647, %v1387
  %vm1489 = vcmp.eq.f32.partialorder %v1488, 8.507059e+37
  %v1490 = vand.u32 %v1387, 2147483648
  %v1491 = vor.u32 1.1754944e-38, %v1490
  %v1492 = vsel %vm1489, %v1491, %v1487
  %v1493 = vmul.f32 1.0, %v1492
  %v1494 = vrcp.pop %v1388
  %v1495 = vmul.f32 %v1388, %v1494
  %v1496 = vsub.f32 1.0, %v1495
  %v1497 = vmul.f32 %v1494, %v1496
  %v1498 = vadd.f32 %v1494, %v1497
  %vm1499 = vweird.f32 %v1388
  %vm1500 = vweird.f32 %v1494
  %vm1501 = vmor %vm1499, %vm1500
  %v1502 = vsel %vm1501, %v1494, %v1498
  %v1503 = vand.u32 2147483647, %v1388
  %vm1504 = vcmp.eq.f32.partialorder %v1503, 8.507059e+37
  %v1505 = vand.u32 %v1388, 2147483648
  %v1506 = vor.u32 1.1754944e-38, %v1505
  %v1507 = vsel %vm1504, %v1506, %v1502
  %v1508 = vmul.f32 1.0, %v1507
  %v1509 = vtanh.pop %v1175
  %v1510 = vtanh.pop %v1179
  %v1511 = vtanh.pop %v1183
  %v1512 = vtanh.pop %v1187
  %v1513 = vtanh.pop %v1191
  %v1514 = vtanh.pop %v1195
  %v1515 = vtanh.pop %v1199
  %v1516 = vtanh.pop %v1203
  %v1517 = vxor.u32 %v1176, 2147483648
  %v1518 = vxor.u32 %v1180, 2147483648
  %v1519 = vxor.u32 %v1184, 2147483648
  %v1520 = vxor.u32 %v1188, 2147483648
  %v1521 = vxor.u32 %v1192, 2147483648
  %v1522 = vxor.u32 %v1196, 2147483648
  %v1523 = vxor.u32 %v1200, 2147483648
  %v1524 = vxor.u32 %v1204, 2147483648
  %v1525 = vmul.f32 %v1517, 1.442695
  %v1526 = vpow.pop %v1525
  %v1527 = vmul.f32 %v1518, 1.442695
  %v1528 = vpow.pop %v1527
  %v1529 = vmul.f32 %v1519, 1.442695
  %v1530 = vpow.pop %v1529
  %v1531 = vmul.f32 %v1520, 1.442695
  %v1532 = vpow.pop %v1531
  %v1533 = vmul.f32 %v1521, 1.442695
  %v1534 = vpow.pop %v1533
  %v1535 = vmul.f32 %v1522, 1.442695
  %v1536 = vpow.pop %v1535
  %v1537 = vmul.f32 %v1523, 1.442695
  %v1538 = vpow.pop %v1537
  %v1539 = vmul.f32 %v1524, 1.442695
  %v1540 = vpow.pop %v1539
  %v1541 = vadd.f32 %v1526, 1.0
  %v1542 = vadd.f32 %v1528, 1.0
  %v1543 = vadd.f32 %v1530, 1.0
  %v1544 = vadd.f32 %v1532, 1.0
  %v1545 = vadd.f32 %v1534, 1.0
  %v1546 = vadd.f32 %v1536, 1.0
  %v1547 = vadd.f32 %v1538, 1.0
  %v1548 = vadd.f32 %v1540, 1.0
  %v1549 = vrcp.pop %v1541
  %v1550 = vmul.f32 %v1541, %v1549
  %v1551 = vsub.f32 1.0, %v1550
  %v1552 = vmul.f32 %v1549, %v1551
  %v1553 = vadd.f32 %v1549, %v1552
  %vm1554 = vweird.f32 %v1541
  %vm1555 = vweird.f32 %v1549
  %vm1556 = vmor %vm1554, %vm1555
  %v1557 = vsel %vm1556, %v1549, %v1553
  %v1558 = vand.u32 2147483647, %v1541
  %vm1559 = vcmp.eq.f32.partialorder %v1558, 8.507059e+37
  %v1560 = vand.u32 %v1541, 2147483648
  %v1561 = vor.u32 1.1754944e-38, %v1560
  %v1562 = vsel %vm1559, %v1561, %v1557
  %v1563 = vmul.f32 1.0, %v1562
  %v1564 = vrcp.pop %v1542
  %v1565 = vmul.f32 %v1542, %v1564
  %v1566 = vsub.f32 1.0, %v1565
  %v1567 = vmul.f32 %v1564, %v1566
  %v1568 = vadd.f32 %v1564, %v1567
  %vm1569 = vweird.f32 %v1542
  %vm1570 = vweird.f32 %v1564
  %vm1571 = vmor %vm1569, %vm1570
  %v1572 = vsel %vm1571, %v1564, %v1568
  %v1573 = vand.u32 2147483647, %v1542
  %vm1574 = vcmp.eq.f32.partialorder %v1573, 8.507059e+37
  %v1575 = vand.u32 %v1542, 2147483648
  %v1576 = vor.u32 1.1754944e-38, %v1575
  %v1577 = vsel %vm1574, %v1576, %v1572
  %v1578 = vmul.f32 1.0, %v1577
  %v1579 = vrcp.pop %v1543
  %v1580 = vmul.f32 %v1543, %v1579
  %v1581 = vsub.f32 1.0, %v1580
  %v1582 = vmul.f32 %v1579, %v1581
  %v1583 = vadd.f32 %v1579, %v1582
  %vm1584 = vweird.f32 %v1543
  %vm1585 = vweird.f32 %v1579
  %vm1586 = vmor %vm1584, %vm1585
  %v1587 = vsel %vm1586, %v1579, %v1583
  %v1588 = vand.u32 2147483647, %v1543
  %vm1589 = vcmp.eq.f32.partialorder %v1588, 8.507059e+37
  %v1590 = vand.u32 %v1543, 2147483648
  %v1591 = vor.u32 1.1754944e-38, %v1590
  %v1592 = vsel %vm1589, %v1591, %v1587
  %v1593 = vmul.f32 1.0, %v1592
  %v1594 = vrcp.pop %v1544
  %v1595 = vmul.f32 %v1544, %v1594
  %v1596 = vsub.f32 1.0, %v1595
  %v1597 = vmul.f32 %v1594, %v1596
  %v1598 = vadd.f32 %v1594, %v1597
  %vm1599 = vweird.f32 %v1544
  %vm1600 = vweird.f32 %v1594
  %vm1601 = vmor %vm1599, %vm1600
  %v1602 = vsel %vm1601, %v1594, %v1598
  %v1603 = vand.u32 2147483647, %v1544
  %vm1604 = vcmp.eq.f32.partialorder %v1603, 8.507059e+37
  %v1605 = vand.u32 %v1544, 2147483648
  %v1606 = vor.u32 1.1754944e-38, %v1605
  %v1607 = vsel %vm1604, %v1606, %v1602
  %v1608 = vmul.f32 1.0, %v1607
  %v1609 = vrcp.pop %v1545
  %v1610 = vmul.f32 %v1545, %v1609
  %v1611 = vsub.f32 1.0, %v1610
  %v1612 = vmul.f32 %v1609, %v1611
  %v1613 = vadd.f32 %v1609, %v1612
  %vm1614 = vweird.f32 %v1545
  %vm1615 = vweird.f32 %v1609
  %vm1616 = vmor %vm1614, %vm1615
  %v1617 = vsel %vm1616, %v1609, %v1613
  %v1618 = vand.u32 2147483647, %v1545
  %vm1619 = vcmp.eq.f32.partialorder %v1618, 8.507059e+37
  %v1620 = vand.u32 %v1545, 2147483648
  %v1621 = vor.u32 1.1754944e-38, %v1620
  %v1622 = vsel %vm1619, %v1621, %v1617
  %v1623 = vmul.f32 1.0, %v1622
  %v1624 = vrcp.pop %v1546
  %v1625 = vmul.f32 %v1546, %v1624
  %v1626 = vsub.f32 1.0, %v1625
  %v1627 = vmul.f32 %v1624, %v1626
  %v1628 = vadd.f32 %v1624, %v1627
  %vm1629 = vweird.f32 %v1546
  %vm1630 = vweird.f32 %v1624
  %vm1631 = vmor %vm1629, %vm1630
  %v1632 = vsel %vm1631, %v1624, %v1628
  %v1633 = vand.u32 2147483647, %v1546
  %vm1634 = vcmp.eq.f32.partialorder %v1633, 8.507059e+37
  %v1635 = vand.u32 %v1546, 2147483648
  %v1636 = vor.u32 1.1754944e-38, %v1635
  %v1637 = vsel %vm1634, %v1636, %v1632
  %v1638 = vmul.f32 1.0, %v1637
  %v1639 = vrcp.pop %v1547
  %v1640 = vmul.f32 %v1547, %v1639
  %v1641 = vsub.f32 1.0, %v1640
  %v1642 = vmul.f32 %v1639, %v1641
  %v1643 = vadd.f32 %v1639, %v1642
  %vm1644 = vweird.f32 %v1547
  %vm1645 = vweird.f32 %v1639
  %vm1646 = vmor %vm1644, %vm1645
  %v1647 = vsel %vm1646, %v1639, %v1643
  %v1648 = vand.u32 2147483647, %v1547
  %vm1649 = vcmp.eq.f32.partialorder %v1648, 8.507059e+37
  %v1650 = vand.u32 %v1547, 2147483648
  %v1651 = vor.u32 1.1754944e-38, %v1650
  %v1652 = vsel %vm1649, %v1651, %v1647
  %v1653 = vmul.f32 1.0, %v1652
  %v1654 = vrcp.pop %v1548
  %v1655 = vmul.f32 %v1548, %v1654
  %v1656 = vsub.f32 1.0, %v1655
  %v1657 = vmul.f32 %v1654, %v1656
  %v1658 = vadd.f32 %v1654, %v1657
  %vm1659 = vweird.f32 %v1548
  %vm1660 = vweird.f32 %v1654
  %vm1661 = vmor %vm1659, %vm1660
  %v1662 = vsel %vm1661, %v1654, %v1658
  %v1663 = vand.u32 2147483647, %v1548
  %vm1664 = vcmp.eq.f32.partialorder %v1663, 8.507059e+37
  %v1665 = vand.u32 %v1548, 2147483648
  %v1666 = vor.u32 1.1754944e-38, %v1665
  %v1667 = vsel %vm1664, %v1666, %v1662
  %v1668 = vmul.f32 1.0, %v1667
  %v1677 = vrot.slane %v975, 7
  %v1678 = vrot.slane %v976, 7
  %v1679 = vrot.slane %v977, 7
  %v1680 = vrot.slane %v978, 7
  %v1681 = vrot.slane %v979, 7
  %v1682 = vrot.slane %v980, 7
  %v1683 = vrot.slane %v981, 7
  %v1684 = vrot.slane %v982, 7
  %v1693 = vmul.f32 %v1403, %v1677
  %v1694 = vmul.f32 %v1418, %v1678
  %v1695 = vmul.f32 %v1433, %v1679
  %v1696 = vmul.f32 %v1448, %v1680
  %v1697 = vmul.f32 %v1463, %v1681
  %v1698 = vmul.f32 %v1478, %v1682
  %v1699 = vmul.f32 %v1493, %v1683
  %v1700 = vmul.f32 %v1508, %v1684
  %v1701 = vmul.f32 %v1251, %v1509
  %v1702 = vmul.f32 %v1266, %v1510
  %v1703 = vmul.f32 %v1281, %v1511
  %v1704 = vmul.f32 %v1296, %v1512
  %v1705 = vmul.f32 %v1311, %v1513
  %v1706 = vmul.f32 %v1326, %v1514
  %v1707 = vmul.f32 %v1341, %v1515
  %v1708 = vmul.f32 %v1356, %v1516
  %v1709 = vadd.f32 %v1693, %v1701
  %v1710 = vadd.f32 %v1694, %v1702
  %v1711 = vadd.f32 %v1695, %v1703
  %v1712 = vadd.f32 %v1696, %v1704
  %v1713 = vadd.f32 %v1697, %v1705
  %v1714 = vadd.f32 %v1698, %v1706
  %v1715 = vadd.f32 %v1699, %v1707
  %v1716 = vadd.f32 %v1700, %v1708
  %v1717 = vtanh.pop %v1709
  %v1718 = vtanh.pop %v1710
  %v1719 = vtanh.pop %v1711
  %v1720 = vtanh.pop %v1712
  %v1721 = vtanh.pop %v1713
  %v1722 = vtanh.pop %v1714
  %v1723 = vtanh.pop %v1715
  %v1724 = vtanh.pop %v1716
  %v1725 = vmul.f32 %v1563, %v1717
  %v1726 = vmul.f32 %v1578, %v1718
  %v1727 = vmul.f32 %v1593, %v1719
  %v1728 = vmul.f32 %v1608, %v1720
  %v1729 = vmul.f32 %v1623, %v1721
  %v1730 = vmul.f32 %v1638, %v1722
  %v1731 = vmul.f32 %v1653, %v1723
  %v1732 = vmul.f32 %v1668, %v1724
  %v1741 = vrot.slane %v1725, 1
  %v1742 = vsel %vm1008, %v1726, %v1741
  %v1743 = vrot.slane %v1727, 7
  %v1744 = vsel %vm1011, %v1743, %v1742
  %v1745 = vrot.slane %v1728, 6
  %v1746 = vsel %vm1014, %v1745, %v1744
  %v1747 = vrot.slane %v1729, 5
  %v1748 = vsel %vm1017, %v1747, %v1746
  %v1749 = vrot.slane %v1730, 4
  %v1750 = vsel %vm1020, %v1749, %v1748
  %v1751 = vrot.slane %v1731, 3
  %v1752 = vsel %vm1023, %v1751, %v1750
  %v1753 = vrot.slane %v1732, 2
  %v1754 = vsel %vm1026, %v1753, %v1752
  %1756 = vmatpush.msra.mxu0 %v315
  %1757 = vmatpush.msra.mxu0 %v311
  %1758 = vmatpush.msra.mxu0 %v307
  %1759 = vmatpush.msra.mxu0 %v303
  %1760 = vmatpush.msra.mxu0 %v299
  %1761 = vmatpush.msra.mxu0 %v295
  %1762 = vmatpush.msra.mxu0 %v291
  %1763 = vmatpush.msra.mxu0 %v287
  %1764 = vmatpush.msra.mxu0 %v283
  %1765 = vmatpush.msra.mxu0 %v279
  %1766 = vmatpush.msra.mxu0 %v275
  %1767 = vmatpush.msra.mxu0 %v271
  %1768 = vmatpush.msra.mxu0 %v267
  %1769 = vmatpush.msra.mxu0 %v263
  %1770 = vmatpush.msra.mxu0 %v259
  %1771 = vmatpush.msra.mxu0 %v255
  %1772 = vmatmul.f32.gmra.mxu0 %v1754
  %v1773 = vpop.f32.mrf.mxu0
  %v1774 = vadd.f32 0.0, %v1773
  %1775 = vdwg.mxu0
  %1776 = vmatpush.msra.mxu0 %v316
  %1777 = vmatpush.msra.mxu0 %v312
  %1778 = vmatpush.msra.mxu0 %v308
  %1779 = vmatpush.msra.mxu0 %v304
  %1780 = vmatpush.msra.mxu0 %v300
  %1781 = vmatpush.msra.mxu0 %v296
  %1782 = vmatpush.msra.mxu0 %v292
  %1783 = vmatpush.msra.mxu0 %v288
  %1784 = vmatpush.msra.mxu0 %v284
  %1785 = vmatpush.msra.mxu0 %v280
  %1786 = vmatpush.msra.mxu0 %v276
  %1787 = vmatpush.msra.mxu0 %v272
  %1788 = vmatpush.msra.mxu0 %v268
  %1789 = vmatpush.msra.mxu0 %v264
  %1790 = vmatpush.msra.mxu0 %v260
  %1791 = vmatpush.msra.mxu0 %v256
  %1792 = vmatmul.f32.gmra.mxu0 %v1754
  %v1793 = vpop.f32.mrf.mxu0
  %v1794 = vadd.f32 0.0, %v1793
  %1795 = vdwg.mxu0
  %1796 = vmatpush.msra.mxu0 %v317
  %1797 = vmatpush.msra.mxu0 %v313
  %1798 = vmatpush.msra.mxu0 %v309
  %1799 = vmatpush.msra.mxu0 %v305
  %1800 = vmatpush.msra.mxu0 %v301
  %1801 = vmatpush.msra.mxu0 %v297
  %1802 = vmatpush.msra.mxu0 %v293
  %1803 = vmatpush.msra.mxu0 %v289
  %1804 = vmatpush.msra.mxu0 %v285
  %1805 = vmatpush.msra.mxu0 %v281
  %1806 = vmatpush.msra.mxu0 %v277
  %1807 = vmatpush.msra.mxu0 %v273
  %1808 = vmatpush.msra.mxu0 %v269
  %1809 = vmatpush.msra.mxu0 %v265
  %1810 = vmatpush.msra.mxu0 %v261
  %1811 = vmatpush.msra.mxu0 %v257
  %1812 = vmatmul.f32.gmra.mxu0 %v1754
  %v1813 = vpop.f32.mrf.mxu0
  %v1814 = vadd.f32 0.0, %v1813
  %1815 = vdwg.mxu0
  %1816 = vmatpush.msra.mxu0 %v318
  %1817 = vmatpush.msra.mxu0 %v314
  %1818 = vmatpush.msra.mxu0 %v310
  %1819 = vmatpush.msra.mxu0 %v306
  %1820 = vmatpush.msra.mxu0 %v302
  %1821 = vmatpush.msra.mxu0 %v298
  %1822 = vmatpush.msra.mxu0 %v294
  %1823 = vmatpush.msra.mxu0 %v290
  %1824 = vmatpush.msra.mxu0 %v286
  %1825 = vmatpush.msra.mxu0 %v282
  %1826 = vmatpush.msra.mxu0 %v278
  %1827 = vmatpush.msra.mxu0 %v274
  %1828 = vmatpush.msra.mxu0 %v270
  %1829 = vmatpush.msra.mxu0 %v266
  %1830 = vmatpush.msra.mxu0 %v262
  %1831 = vmatpush.msra.mxu0 %v258
  %1832 = vmatmul.f32.gmra.mxu0 %v1754
  %v1833 = vpop.f32.mrf.mxu0
  %v1834 = vadd.f32 0.0, %v1833
  %1835 = vdwg.mxu0
  %v1840 = vrot.slane %v1774, 6
  %v1841 = vrot.slane %v1794, 6
  %v1842 = vrot.slane %v1814, 6
  %v1843 = vrot.slane %v1834, 6
  %v1844 = vrot.slane %v1774, 7
  %v1845 = vrot.slane %v1794, 7
  %v1846 = vrot.slane %v1814, 7
  %v1847 = vrot.slane %v1834, 7
  %v1848 = vrot.slane %v1774, 1
  %v1849 = vrot.slane %v1794, 1
  %v1850 = vrot.slane %v1814, 1
  %v1851 = vrot.slane %v1834, 1
  %v1852 = vrot.slane %v1774, 2
  %v1853 = vrot.slane %v1794, 2
  %v1854 = vrot.slane %v1814, 2
  %v1855 = vrot.slane %v1834, 2
  %v1856 = vrot.slane %v1774, 3
  %v1857 = vrot.slane %v1794, 3
  %v1858 = vrot.slane %v1814, 3
  %v1859 = vrot.slane %v1834, 3
  %v1860 = vrot.slane %v1774, 4
  %v1861 = vrot.slane %v1794, 4
  %v1862 = vrot.slane %v1814, 4
  %v1863 = vrot.slane %v1834, 4
  %v1864 = vrot.slane %v1774, 5
  %v1865 = vrot.slane %v1794, 5
  %v1866 = vrot.slane %v1814, 5
  %v1867 = vrot.slane %v1834, 5
  %v1900 = vadd.f32 %v109, %v1840
  %v1901 = vadd.f32 %v150, %v1841
  %v1902 = vadd.f32 %v191, %v1842
  %v1903 = vadd.f32 %v232, %v1843
  %v1904 = vadd.f32 %v112, %v1844
  %v1905 = vadd.f32 %v153, %v1845
  %v1906 = vadd.f32 %v194, %v1846
  %v1907 = vadd.f32 %v235, %v1847
  %v1908 = vadd.f32 %v115, %v1774
  %v1909 = vadd.f32 %v156, %v1794
  %v1910 = vadd.f32 %v197, %v1814
  %v1911 = vadd.f32 %v238, %v1834
  %v1912 = vadd.f32 %v118, %v1848
  %v1913 = vadd.f32 %v159, %v1849
  %v1914 = vadd.f32 %v200, %v1850
  %v1915 = vadd.f32 %v241, %v1851
  %v1916 = vadd.f32 %v121, %v1852
  %v1917 = vadd.f32 %v162, %v1853
  %v1918 = vadd.f32 %v203, %v1854
  %v1919 = vadd.f32 %v244, %v1855
  %v1920 = vadd.f32 %v124, %v1856
  %v1921 = vadd.f32 %v165, %v1857
  %v1922 = vadd.f32 %v206, %v1858
  %v1923 = vadd.f32 %v247, %v1859
  %v1924 = vadd.f32 %v127, %v1860
  %v1925 = vadd.f32 %v168, %v1861
  %v1926 = vadd.f32 %v209, %v1862
  %v1927 = vadd.f32 %v250, %v1863
  %v1928 = vadd.f32 %v130, %v1864
  %v1929 = vadd.f32 %v171, %v1865
  %v1930 = vadd.f32 %v212, %v1866
  %v1931 = vadd.f32 %v253, %v1867
  %v1932 = vxor.u32 %v1900, 2147483648
  %v1933 = vxor.u32 %v1904, 2147483648
  %v1934 = vxor.u32 %v1908, 2147483648
  %v1935 = vxor.u32 %v1912, 2147483648
  %v1936 = vxor.u32 %v1916, 2147483648
  %v1937 = vxor.u32 %v1920, 2147483648
  %v1938 = vxor.u32 %v1924, 2147483648
  %v1939 = vxor.u32 %v1928, 2147483648
  %v1940 = vmul.f32 %v1932, 1.442695
  %v1941 = vpow.pop %v1940
  %v1942 = vmul.f32 %v1933, 1.442695
  %v1943 = vpow.pop %v1942
  %v1944 = vmul.f32 %v1934, 1.442695
  %v1945 = vpow.pop %v1944
  %v1946 = vmul.f32 %v1935, 1.442695
  %v1947 = vpow.pop %v1946
  %v1948 = vmul.f32 %v1936, 1.442695
  %v1949 = vpow.pop %v1948
  %v1950 = vmul.f32 %v1937, 1.442695
  %v1951 = vpow.pop %v1950
  %v1952 = vmul.f32 %v1938, 1.442695
  %v1953 = vpow.pop %v1952
  %v1954 = vmul.f32 %v1939, 1.442695
  %v1955 = vpow.pop %v1954
  %v1956 = vadd.f32 %v1941, 1.0
  %v1957 = vadd.f32 %v1943, 1.0
  %v1958 = vadd.f32 %v1945, 1.0
  %v1959 = vadd.f32 %v1947, 1.0
  %v1960 = vadd.f32 %v1949, 1.0
  %v1961 = vadd.f32 %v1951, 1.0
  %v1962 = vadd.f32 %v1953, 1.0
  %v1963 = vadd.f32 %v1955, 1.0
  %v1964 = vrcp.pop %v1956
  %v1965 = vmul.f32 %v1956, %v1964
  %v1966 = vsub.f32 1.0, %v1965
  %v1967 = vmul.f32 %v1964, %v1966
  %v1968 = vadd.f32 %v1964, %v1967
  %vm1969 = vweird.f32 %v1956
  %vm1970 = vweird.f32 %v1964
  %vm1971 = vmor %vm1969, %vm1970
  %v1972 = vsel %vm1971, %v1964, %v1968
  %v1973 = vand.u32 2147483647, %v1956
  %vm1974 = vcmp.eq.f32.partialorder %v1973, 8.507059e+37
  %v1975 = vand.u32 %v1956, 2147483648
  %v1976 = vor.u32 1.1754944e-38, %v1975
  %v1977 = vsel %vm1974, %v1976, %v1972
  %v1978 = vmul.f32 1.0, %v1977
  %v1979 = vrcp.pop %v1957
  %v1980 = vmul.f32 %v1957, %v1979
  %v1981 = vsub.f32 1.0, %v1980
  %v1982 = vmul.f32 %v1979, %v1981
  %v1983 = vadd.f32 %v1979, %v1982
  %vm1984 = vweird.f32 %v1957
  %vm1985 = vweird.f32 %v1979
  %vm1986 = vmor %vm1984, %vm1985
  %v1987 = vsel %vm1986, %v1979, %v1983
  %v1988 = vand.u32 2147483647, %v1957
  %vm1989 = vcmp.eq.f32.partialorder %v1988, 8.507059e+37
  %v1990 = vand.u32 %v1957, 2147483648
  %v1991 = vor.u32 1.1754944e-38, %v1990
  %v1992 = vsel %vm1989, %v1991, %v1987
  %v1993 = vmul.f32 1.0, %v1992
  %v1994 = vrcp.pop %v1958
  %v1995 = vmul.f32 %v1958, %v1994
  %v1996 = vsub.f32 1.0, %v1995
  %v1997 = vmul.f32 %v1994, %v1996
  %v1998 = vadd.f32 %v1994, %v1997
  %vm1999 = vweird.f32 %v1958
  %vm2000 = vweird.f32 %v1994
  %vm2001 = vmor %vm1999, %vm2000
  %v2002 = vsel %vm2001, %v1994, %v1998
  %v2003 = vand.u32 2147483647, %v1958
  %vm2004 = vcmp.eq.f32.partialorder %v2003, 8.507059e+37
  %v2005 = vand.u32 %v1958, 2147483648
  %v2006 = vor.u32 1.1754944e-38, %v2005
  %v2007 = vsel %vm2004, %v2006, %v2002
  %v2008 = vmul.f32 1.0, %v2007
  %v2009 = vrcp.pop %v1959
  %v2010 = vmul.f32 %v1959, %v2009
  %v2011 = vsub.f32 1.0, %v2010
  %v2012 = vmul.f32 %v2009, %v2011
  %v2013 = vadd.f32 %v2009, %v2012
  %vm2014 = vweird.f32 %v1959
  %vm2015 = vweird.f32 %v2009
  %vm2016 = vmor %vm2014, %vm2015
  %v2017 = vsel %vm2016, %v2009, %v2013
  %v2018 = vand.u32 2147483647, %v1959
  %vm2019 = vcmp.eq.f32.partialorder %v2018, 8.507059e+37
  %v2020 = vand.u32 %v1959, 2147483648
  %v2021 = vor.u32 1.1754944e-38, %v2020
  %v2022 = vsel %vm2019, %v2021, %v2017
  %v2023 = vmul.f32 1.0, %v2022
  %v2024 = vrcp.pop %v1960
  %v2025 = vmul.f32 %v1960, %v2024
  %v2026 = vsub.f32 1.0, %v2025
  %v2027 = vmul.f32 %v2024, %v2026
  %v2028 = vadd.f32 %v2024, %v2027
  %vm2029 = vweird.f32 %v1960
  %vm2030 = vweird.f32 %v2024
  %vm2031 = vmor %vm2029, %vm2030
  %v2032 = vsel %vm2031, %v2024, %v2028
  %v2033 = vand.u32 2147483647, %v1960
  %vm2034 = vcmp.eq.f32.partialorder %v2033, 8.507059e+37
  %v2035 = vand.u32 %v1960, 2147483648
  %v2036 = vor.u32 1.1754944e-38, %v2035
  %v2037 = vsel %vm2034, %v2036, %v2032
  %v2038 = vmul.f32 1.0, %v2037
  %v2039 = vrcp.pop %v1961
  %v2040 = vmul.f32 %v1961, %v2039
  %v2041 = vsub.f32 1.0, %v2040
  %v2042 = vmul.f32 %v2039, %v2041
  %v2043 = vadd.f32 %v2039, %v2042
  %vm2044 = vweird.f32 %v1961
  %vm2045 = vweird.f32 %v2039
  %vm2046 = vmor %vm2044, %vm2045
  %v2047 = vsel %vm2046, %v2039, %v2043
  %v2048 = vand.u32 2147483647, %v1961
  %vm2049 = vcmp.eq.f32.partialorder %v2048, 8.507059e+37
  %v2050 = vand.u32 %v1961, 2147483648
  %v2051 = vor.u32 1.1754944e-38, %v2050
  %v2052 = vsel %vm2049, %v2051, %v2047
  %v2053 = vmul.f32 1.0, %v2052
  %v2054 = vrcp.pop %v1962
  %v2055 = vmul.f32 %v1962, %v2054
  %v2056 = vsub.f32 1.0, %v2055
  %v2057 = vmul.f32 %v2054, %v2056
  %v2058 = vadd.f32 %v2054, %v2057
  %vm2059 = vweird.f32 %v1962
  %vm2060 = vweird.f32 %v2054
  %vm2061 = vmor %vm2059, %vm2060
  %v2062 = vsel %vm2061, %v2054, %v2058
  %v2063 = vand.u32 2147483647, %v1962
  %vm2064 = vcmp.eq.f32.partialorder %v2063, 8.507059e+37
  %v2065 = vand.u32 %v1962, 2147483648
  %v2066 = vor.u32 1.1754944e-38, %v2065
  %v2067 = vsel %vm2064, %v2066, %v2062
  %v2068 = vmul.f32 1.0, %v2067
  %v2069 = vrcp.pop %v1963
  %v2070 = vmul.f32 %v1963, %v2069
  %v2071 = vsub.f32 1.0, %v2070
  %v2072 = vmul.f32 %v2069, %v2071
  %v2073 = vadd.f32 %v2069, %v2072
  %vm2074 = vweird.f32 %v1963
  %vm2075 = vweird.f32 %v2069
  %vm2076 = vmor %vm2074, %vm2075
  %v2077 = vsel %vm2076, %v2069, %v2073
  %v2078 = vand.u32 2147483647, %v1963
  %vm2079 = vcmp.eq.f32.partialorder %v2078, 8.507059e+37
  %v2080 = vand.u32 %v1963, 2147483648
  %v2081 = vor.u32 1.1754944e-38, %v2080
  %v2082 = vsel %vm2079, %v2081, %v2077
  %v2083 = vmul.f32 1.0, %v2082
  %v2084 = vxor.u32 %v1901, 2147483648
  %v2085 = vxor.u32 %v1905, 2147483648
  %v2086 = vxor.u32 %v1909, 2147483648
  %v2087 = vxor.u32 %v1913, 2147483648
  %v2088 = vxor.u32 %v1917, 2147483648
  %v2089 = vxor.u32 %v1921, 2147483648
  %v2090 = vxor.u32 %v1925, 2147483648
  %v2091 = vxor.u32 %v1929, 2147483648
  %v2092 = vmul.f32 %v2084, 1.442695
  %v2093 = vpow.pop %v2092
  %v2094 = vmul.f32 %v2085, 1.442695
  %v2095 = vpow.pop %v2094
  %v2096 = vmul.f32 %v2086, 1.442695
  %v2097 = vpow.pop %v2096
  %v2098 = vmul.f32 %v2087, 1.442695
  %v2099 = vpow.pop %v2098
  %v2100 = vmul.f32 %v2088, 1.442695
  %v2101 = vpow.pop %v2100
  %v2102 = vmul.f32 %v2089, 1.442695
  %v2103 = vpow.pop %v2102
  %v2104 = vmul.f32 %v2090, 1.442695
  %v2105 = vpow.pop %v2104
  %v2106 = vmul.f32 %v2091, 1.442695
  %v2107 = vpow.pop %v2106
  %v2108 = vadd.f32 %v2093, 1.0
  %v2109 = vadd.f32 %v2095, 1.0
  %v2110 = vadd.f32 %v2097, 1.0
  %v2111 = vadd.f32 %v2099, 1.0
  %v2112 = vadd.f32 %v2101, 1.0
  %v2113 = vadd.f32 %v2103, 1.0
  %v2114 = vadd.f32 %v2105, 1.0
  %v2115 = vadd.f32 %v2107, 1.0
  %v2116 = vrcp.pop %v2108
  %v2117 = vmul.f32 %v2108, %v2116
  %v2118 = vsub.f32 1.0, %v2117
  %v2119 = vmul.f32 %v2116, %v2118
  %v2120 = vadd.f32 %v2116, %v2119
  %vm2121 = vweird.f32 %v2108
  %vm2122 = vweird.f32 %v2116
  %vm2123 = vmor %vm2121, %vm2122
  %v2124 = vsel %vm2123, %v2116, %v2120
  %v2125 = vand.u32 2147483647, %v2108
  %vm2126 = vcmp.eq.f32.partialorder %v2125, 8.507059e+37
  %v2127 = vand.u32 %v2108, 2147483648
  %v2128 = vor.u32 1.1754944e-38, %v2127
  %v2129 = vsel %vm2126, %v2128, %v2124
  %v2130 = vmul.f32 1.0, %v2129
  %v2131 = vrcp.pop %v2109
  %v2132 = vmul.f32 %v2109, %v2131
  %v2133 = vsub.f32 1.0, %v2132
  %v2134 = vmul.f32 %v2131, %v2133
  %v2135 = vadd.f32 %v2131, %v2134
  %vm2136 = vweird.f32 %v2109
  %vm2137 = vweird.f32 %v2131
  %vm2138 = vmor %vm2136, %vm2137
  %v2139 = vsel %vm2138, %v2131, %v2135
  %v2140 = vand.u32 2147483647, %v2109
  %vm2141 = vcmp.eq.f32.partialorder %v2140, 8.507059e+37
  %v2142 = vand.u32 %v2109, 2147483648
  %v2143 = vor.u32 1.1754944e-38, %v2142
  %v2144 = vsel %vm2141, %v2143, %v2139
  %v2145 = vmul.f32 1.0, %v2144
  %v2146 = vrcp.pop %v2110
  %v2147 = vmul.f32 %v2110, %v2146
  %v2148 = vsub.f32 1.0, %v2147
  %v2149 = vmul.f32 %v2146, %v2148
  %v2150 = vadd.f32 %v2146, %v2149
  %vm2151 = vweird.f32 %v2110
  %vm2152 = vweird.f32 %v2146
  %vm2153 = vmor %vm2151, %vm2152
  %v2154 = vsel %vm2153, %v2146, %v2150
  %v2155 = vand.u32 2147483647, %v2110
  %vm2156 = vcmp.eq.f32.partialorder %v2155, 8.507059e+37
  %v2157 = vand.u32 %v2110, 2147483648
  %v2158 = vor.u32 1.1754944e-38, %v2157
  %v2159 = vsel %vm2156, %v2158, %v2154
  %v2160 = vmul.f32 1.0, %v2159
  %v2161 = vrcp.pop %v2111
  %v2162 = vmul.f32 %v2111, %v2161
  %v2163 = vsub.f32 1.0, %v2162
  %v2164 = vmul.f32 %v2161, %v2163
  %v2165 = vadd.f32 %v2161, %v2164
  %vm2166 = vweird.f32 %v2111
  %vm2167 = vweird.f32 %v2161
  %vm2168 = vmor %vm2166, %vm2167
  %v2169 = vsel %vm2168, %v2161, %v2165
  %v2170 = vand.u32 2147483647, %v2111
  %vm2171 = vcmp.eq.f32.partialorder %v2170, 8.507059e+37
  %v2172 = vand.u32 %v2111, 2147483648
  %v2173 = vor.u32 1.1754944e-38, %v2172
  %v2174 = vsel %vm2171, %v2173, %v2169
  %v2175 = vmul.f32 1.0, %v2174
  %v2176 = vrcp.pop %v2112
  %v2177 = vmul.f32 %v2112, %v2176
  %v2178 = vsub.f32 1.0, %v2177
  %v2179 = vmul.f32 %v2176, %v2178
  %v2180 = vadd.f32 %v2176, %v2179
  %vm2181 = vweird.f32 %v2112
  %vm2182 = vweird.f32 %v2176
  %vm2183 = vmor %vm2181, %vm2182
  %v2184 = vsel %vm2183, %v2176, %v2180
  %v2185 = vand.u32 2147483647, %v2112
  %vm2186 = vcmp.eq.f32.partialorder %v2185, 8.507059e+37
  %v2187 = vand.u32 %v2112, 2147483648
  %v2188 = vor.u32 1.1754944e-38, %v2187
  %v2189 = vsel %vm2186, %v2188, %v2184
  %v2190 = vmul.f32 1.0, %v2189
  %v2191 = vrcp.pop %v2113
  %v2192 = vmul.f32 %v2113, %v2191
  %v2193 = vsub.f32 1.0, %v2192
  %v2194 = vmul.f32 %v2191, %v2193
  %v2195 = vadd.f32 %v2191, %v2194
  %vm2196 = vweird.f32 %v2113
  %vm2197 = vweird.f32 %v2191
  %vm2198 = vmor %vm2196, %vm2197
  %v2199 = vsel %vm2198, %v2191, %v2195
  %v2200 = vand.u32 2147483647, %v2113
  %vm2201 = vcmp.eq.f32.partialorder %v2200, 8.507059e+37
  %v2202 = vand.u32 %v2113, 2147483648
  %v2203 = vor.u32 1.1754944e-38, %v2202
  %v2204 = vsel %vm2201, %v2203, %v2199
  %v2205 = vmul.f32 1.0, %v2204
  %v2206 = vrcp.pop %v2114
  %v2207 = vmul.f32 %v2114, %v2206
  %v2208 = vsub.f32 1.0, %v2207
  %v2209 = vmul.f32 %v2206, %v2208
  %v2210 = vadd.f32 %v2206, %v2209
  %vm2211 = vweird.f32 %v2114
  %vm2212 = vweird.f32 %v2206
  %vm2213 = vmor %vm2211, %vm2212
  %v2214 = vsel %vm2213, %v2206, %v2210
  %v2215 = vand.u32 2147483647, %v2114
  %vm2216 = vcmp.eq.f32.partialorder %v2215, 8.507059e+37
  %v2217 = vand.u32 %v2114, 2147483648
  %v2218 = vor.u32 1.1754944e-38, %v2217
  %v2219 = vsel %vm2216, %v2218, %v2214
  %v2220 = vmul.f32 1.0, %v2219
  %v2221 = vrcp.pop %v2115
  %v2222 = vmul.f32 %v2115, %v2221
  %v2223 = vsub.f32 1.0, %v2222
  %v2224 = vmul.f32 %v2221, %v2223
  %v2225 = vadd.f32 %v2221, %v2224
  %vm2226 = vweird.f32 %v2115
  %vm2227 = vweird.f32 %v2221
  %vm2228 = vmor %vm2226, %vm2227
  %v2229 = vsel %vm2228, %v2221, %v2225
  %v2230 = vand.u32 2147483647, %v2115
  %vm2231 = vcmp.eq.f32.partialorder %v2230, 8.507059e+37
  %v2232 = vand.u32 %v2115, 2147483648
  %v2233 = vor.u32 1.1754944e-38, %v2232
  %v2234 = vsel %vm2231, %v2233, %v2229
  %v2235 = vmul.f32 1.0, %v2234
  %v2236 = vtanh.pop %v1902
  %v2237 = vtanh.pop %v1906
  %v2238 = vtanh.pop %v1910
  %v2239 = vtanh.pop %v1914
  %v2240 = vtanh.pop %v1918
  %v2241 = vtanh.pop %v1922
  %v2242 = vtanh.pop %v1926
  %v2243 = vtanh.pop %v1930
  %v2244 = vxor.u32 %v1903, 2147483648
  %v2245 = vxor.u32 %v1907, 2147483648
  %v2246 = vxor.u32 %v1911, 2147483648
  %v2247 = vxor.u32 %v1915, 2147483648
  %v2248 = vxor.u32 %v1919, 2147483648
  %v2249 = vxor.u32 %v1923, 2147483648
  %v2250 = vxor.u32 %v1927, 2147483648
  %v2251 = vxor.u32 %v1931, 2147483648
  %v2252 = vmul.f32 %v2244, 1.442695
  %v2253 = vpow.pop %v2252
  %v2254 = vmul.f32 %v2245, 1.442695
  %v2255 = vpow.pop %v2254
  %v2256 = vmul.f32 %v2246, 1.442695
  %v2257 = vpow.pop %v2256
  %v2258 = vmul.f32 %v2247, 1.442695
  %v2259 = vpow.pop %v2258
  %v2260 = vmul.f32 %v2248, 1.442695
  %v2261 = vpow.pop %v2260
  %v2262 = vmul.f32 %v2249, 1.442695
  %v2263 = vpow.pop %v2262
  %v2264 = vmul.f32 %v2250, 1.442695
  %v2265 = vpow.pop %v2264
  %v2266 = vmul.f32 %v2251, 1.442695
  %v2267 = vpow.pop %v2266
  %v2268 = vadd.f32 %v2253, 1.0
  %v2269 = vadd.f32 %v2255, 1.0
  %v2270 = vadd.f32 %v2257, 1.0
  %v2271 = vadd.f32 %v2259, 1.0
  %v2272 = vadd.f32 %v2261, 1.0
  %v2273 = vadd.f32 %v2263, 1.0
  %v2274 = vadd.f32 %v2265, 1.0
  %v2275 = vadd.f32 %v2267, 1.0
  %v2276 = vrcp.pop %v2268
  %v2277 = vmul.f32 %v2268, %v2276
  %v2278 = vsub.f32 1.0, %v2277
  %v2279 = vmul.f32 %v2276, %v2278
  %v2280 = vadd.f32 %v2276, %v2279
  %vm2281 = vweird.f32 %v2268
  %vm2282 = vweird.f32 %v2276
  %vm2283 = vmor %vm2281, %vm2282
  %v2284 = vsel %vm2283, %v2276, %v2280
  %v2285 = vand.u32 2147483647, %v2268
  %vm2286 = vcmp.eq.f32.partialorder %v2285, 8.507059e+37
  %v2287 = vand.u32 %v2268, 2147483648
  %v2288 = vor.u32 1.1754944e-38, %v2287
  %v2289 = vsel %vm2286, %v2288, %v2284
  %v2290 = vmul.f32 1.0, %v2289
  %v2291 = vrcp.pop %v2269
  %v2292 = vmul.f32 %v2269, %v2291
  %v2293 = vsub.f32 1.0, %v2292
  %v2294 = vmul.f32 %v2291, %v2293
  %v2295 = vadd.f32 %v2291, %v2294
  %vm2296 = vweird.f32 %v2269
  %vm2297 = vweird.f32 %v2291
  %vm2298 = vmor %vm2296, %vm2297
  %v2299 = vsel %vm2298, %v2291, %v2295
  %v2300 = vand.u32 2147483647, %v2269
  %vm2301 = vcmp.eq.f32.partialorder %v2300, 8.507059e+37
  %v2302 = vand.u32 %v2269, 2147483648
  %v2303 = vor.u32 1.1754944e-38, %v2302
  %v2304 = vsel %vm2301, %v2303, %v2299
  %v2305 = vmul.f32 1.0, %v2304
  %v2306 = vrcp.pop %v2270
  %v2307 = vmul.f32 %v2270, %v2306
  %v2308 = vsub.f32 1.0, %v2307
  %v2309 = vmul.f32 %v2306, %v2308
  %v2310 = vadd.f32 %v2306, %v2309
  %vm2311 = vweird.f32 %v2270
  %vm2312 = vweird.f32 %v2306
  %vm2313 = vmor %vm2311, %vm2312
  %v2314 = vsel %vm2313, %v2306, %v2310
  %v2315 = vand.u32 2147483647, %v2270
  %vm2316 = vcmp.eq.f32.partialorder %v2315, 8.507059e+37
  %v2317 = vand.u32 %v2270, 2147483648
  %v2318 = vor.u32 1.1754944e-38, %v2317
  %v2319 = vsel %vm2316, %v2318, %v2314
  %v2320 = vmul.f32 1.0, %v2319
  %v2321 = vrcp.pop %v2271
  %v2322 = vmul.f32 %v2271, %v2321
  %v2323 = vsub.f32 1.0, %v2322
  %v2324 = vmul.f32 %v2321, %v2323
  %v2325 = vadd.f32 %v2321, %v2324
  %vm2326 = vweird.f32 %v2271
  %vm2327 = vweird.f32 %v2321
  %vm2328 = vmor %vm2326, %vm2327
  %v2329 = vsel %vm2328, %v2321, %v2325
  %v2330 = vand.u32 2147483647, %v2271
  %vm2331 = vcmp.eq.f32.partialorder %v2330, 8.507059e+37
  %v2332 = vand.u32 %v2271, 2147483648
  %v2333 = vor.u32 1.1754944e-38, %v2332
  %v2334 = vsel %vm2331, %v2333, %v2329
  %v2335 = vmul.f32 1.0, %v2334
  %v2336 = vrcp.pop %v2272
  %v2337 = vmul.f32 %v2272, %v2336
  %v2338 = vsub.f32 1.0, %v2337
  %v2339 = vmul.f32 %v2336, %v2338
  %v2340 = vadd.f32 %v2336, %v2339
  %vm2341 = vweird.f32 %v2272
  %vm2342 = vweird.f32 %v2336
  %vm2343 = vmor %vm2341, %vm2342
  %v2344 = vsel %vm2343, %v2336, %v2340
  %v2345 = vand.u32 2147483647, %v2272
  %vm2346 = vcmp.eq.f32.partialorder %v2345, 8.507059e+37
  %v2347 = vand.u32 %v2272, 2147483648
  %v2348 = vor.u32 1.1754944e-38, %v2347
  %v2349 = vsel %vm2346, %v2348, %v2344
  %v2350 = vmul.f32 1.0, %v2349
  %v2351 = vrcp.pop %v2273
  %v2352 = vmul.f32 %v2273, %v2351
  %v2353 = vsub.f32 1.0, %v2352
  %v2354 = vmul.f32 %v2351, %v2353
  %v2355 = vadd.f32 %v2351, %v2354
  %vm2356 = vweird.f32 %v2273
  %vm2357 = vweird.f32 %v2351
  %vm2358 = vmor %vm2356, %vm2357
  %v2359 = vsel %vm2358, %v2351, %v2355
  %v2360 = vand.u32 2147483647, %v2273
  %vm2361 = vcmp.eq.f32.partialorder %v2360, 8.507059e+37
  %v2362 = vand.u32 %v2273, 2147483648
  %v2363 = vor.u32 1.1754944e-38, %v2362
  %v2364 = vsel %vm2361, %v2363, %v2359
  %v2365 = vmul.f32 1.0, %v2364
  %v2366 = vrcp.pop %v2274
  %v2367 = vmul.f32 %v2274, %v2366
  %v2368 = vsub.f32 1.0, %v2367
  %v2369 = vmul.f32 %v2366, %v2368
  %v2370 = vadd.f32 %v2366, %v2369
  %vm2371 = vweird.f32 %v2274
  %vm2372 = vweird.f32 %v2366
  %vm2373 = vmor %vm2371, %vm2372
  %v2374 = vsel %vm2373, %v2366, %v2370
  %v2375 = vand.u32 2147483647, %v2274
  %vm2376 = vcmp.eq.f32.partialorder %v2375, 8.507059e+37
  %v2377 = vand.u32 %v2274, 2147483648
  %v2378 = vor.u32 1.1754944e-38, %v2377
  %v2379 = vsel %vm2376, %v2378, %v2374
  %v2380 = vmul.f32 1.0, %v2379
  %v2381 = vrcp.pop %v2275
  %v2382 = vmul.f32 %v2275, %v2381
  %v2383 = vsub.f32 1.0, %v2382
  %v2384 = vmul.f32 %v2381, %v2383
  %v2385 = vadd.f32 %v2381, %v2384
  %vm2386 = vweird.f32 %v2275
  %vm2387 = vweird.f32 %v2381
  %vm2388 = vmor %vm2386, %vm2387
  %v2389 = vsel %vm2388, %v2381, %v2385
  %v2390 = vand.u32 2147483647, %v2275
  %vm2391 = vcmp.eq.f32.partialorder %v2390, 8.507059e+37
  %v2392 = vand.u32 %v2275, 2147483648
  %v2393 = vor.u32 1.1754944e-38, %v2392
  %v2394 = vsel %vm2391, %v2393, %v2389
  %v2395 = vmul.f32 1.0, %v2394
  %v2404 = vrot.slane %v1709, 7
  %v2405 = vrot.slane %v1710, 7
  %v2406 = vrot.slane %v1711, 7
  %v2407 = vrot.slane %v1712, 7
  %v2408 = vrot.slane %v1713, 7
  %v2409 = vrot.slane %v1714, 7
  %v2410 = vrot.slane %v1715, 7
  %v2411 = vrot.slane %v1716, 7
  %v2420 = vmul.f32 %v2130, %v2404
  %v2421 = vmul.f32 %v2145, %v2405
  %v2422 = vmul.f32 %v2160, %v2406
  %v2423 = vmul.f32 %v2175, %v2407
  %v2424 = vmul.f32 %v2190, %v2408
  %v2425 = vmul.f32 %v2205, %v2409
  %v2426 = vmul.f32 %v2220, %v2410
  %v2427 = vmul.f32 %v2235, %v2411
  %v2428 = vmul.f32 %v1978, %v2236
  %v2429 = vmul.f32 %v1993, %v2237
  %v2430 = vmul.f32 %v2008, %v2238
  %v2431 = vmul.f32 %v2023, %v2239
  %v2432 = vmul.f32 %v2038, %v2240
  %v2433 = vmul.f32 %v2053, %v2241
  %v2434 = vmul.f32 %v2068, %v2242
  %v2435 = vmul.f32 %v2083, %v2243
  %v2436 = vadd.f32 %v2420, %v2428
  %v2437 = vadd.f32 %v2421, %v2429
  %v2438 = vadd.f32 %v2422, %v2430
  %v2439 = vadd.f32 %v2423, %v2431
  %v2440 = vadd.f32 %v2424, %v2432
  %v2441 = vadd.f32 %v2425, %v2433
  %v2442 = vadd.f32 %v2426, %v2434
  %v2443 = vadd.f32 %v2427, %v2435
  %v2444 = vtanh.pop %v2436
  %v2445 = vtanh.pop %v2437
  %v2446 = vtanh.pop %v2438
  %v2447 = vtanh.pop %v2439
  %v2448 = vtanh.pop %v2440
  %v2449 = vtanh.pop %v2441
  %v2450 = vtanh.pop %v2442
  %v2451 = vtanh.pop %v2443
  %v2452 = vmul.f32 %v2290, %v2444
  %v2453 = vmul.f32 %v2305, %v2445
  %v2454 = vmul.f32 %v2320, %v2446
  %v2455 = vmul.f32 %v2335, %v2447
  %v2456 = vmul.f32 %v2350, %v2448
  %v2457 = vmul.f32 %v2365, %v2449
  %v2458 = vmul.f32 %v2380, %v2450
  %v2459 = vmul.f32 %v2395, %v2451
  %v2468 = vrot.slane %v2452, 2
  %v2469 = vrot.slane %v2453, 1
  %v2470 = vsel %vm1008, %v2469, %v2468
  %v2471 = vsel %vm1011, %v2454, %v2470
  %v2472 = vrot.slane %v2455, 7
  %v2473 = vsel %vm1014, %v2472, %v2471
  %v2474 = vrot.slane %v2456, 6
  %v2475 = vsel %vm1017, %v2474, %v2473
  %v2476 = vrot.slane %v2457, 5
  %v2477 = vsel %vm1020, %v2476, %v2475
  %v2478 = vrot.slane %v2458, 4
  %v2479 = vsel %vm1023, %v2478, %v2477
  %v2480 = vrot.slane %v2459, 3
  %v2481 = vsel %vm1026, %v2480, %v2479
  %2483 = vmatpush.msra.mxu0 %v315
  %2484 = vmatpush.msra.mxu0 %v311
  %2485 = vmatpush.msra.mxu0 %v307
  %2486 = vmatpush.msra.mxu0 %v303
  %2487 = vmatpush.msra.mxu0 %v299
  %2488 = vmatpush.msra.mxu0 %v295
  %2489 = vmatpush.msra.mxu0 %v291
  %2490 = vmatpush.msra.mxu0 %v287
  %2491 = vmatpush.msra.mxu0 %v283
  %2492 = vmatpush.msra.mxu0 %v279
  %2493 = vmatpush.msra.mxu0 %v275
  %2494 = vmatpush.msra.mxu0 %v271
  %2495 = vmatpush.msra.mxu0 %v267
  %2496 = vmatpush.msra.mxu0 %v263
  %2497 = vmatpush.msra.mxu0 %v259
  %2498 = vmatpush.msra.mxu0 %v255
  %2499 = vmatmul.f32.gmra.mxu0 %v2481
  %v2500 = vpop.f32.mrf.mxu0
  %v2501 = vadd.f32 0.0, %v2500
  %2502 = vdwg.mxu0
  %2503 = vmatpush.msra.mxu0 %v316
  %2504 = vmatpush.msra.mxu0 %v312
  %2505 = vmatpush.msra.mxu0 %v308
  %2506 = vmatpush.msra.mxu0 %v304
  %2507 = vmatpush.msra.mxu0 %v300
  %2508 = vmatpush.msra.mxu0 %v296
  %2509 = vmatpush.msra.mxu0 %v292
  %2510 = vmatpush.msra.mxu0 %v288
  %2511 = vmatpush.msra.mxu0 %v284
  %2512 = vmatpush.msra.mxu0 %v280
  %2513 = vmatpush.msra.mxu0 %v276
  %2514 = vmatpush.msra.mxu0 %v272
  %2515 = vmatpush.msra.mxu0 %v268
  %2516 = vmatpush.msra.mxu0 %v264
  %2517 = vmatpush.msra.mxu0 %v260
  %2518 = vmatpush.msra.mxu0 %v256
  %2519 = vmatmul.f32.gmra.mxu0 %v2481
  %v2520 = vpop.f32.mrf.mxu0
  %v2521 = vadd.f32 0.0, %v2520
  %2522 = vdwg.mxu0
  %2523 = vmatpush.msra.mxu0 %v317
  %2524 = vmatpush.msra.mxu0 %v313
  %2525 = vmatpush.msra.mxu0 %v309
  %2526 = vmatpush.msra.mxu0 %v305
  %2527 = vmatpush.msra.mxu0 %v301
  %2528 = vmatpush.msra.mxu0 %v297
  %2529 = vmatpush.msra.mxu0 %v293
  %2530 = vmatpush.msra.mxu0 %v289
  %2531 = vmatpush.msra.mxu0 %v285
  %2532 = vmatpush.msra.mxu0 %v281
  %2533 = vmatpush.msra.mxu0 %v277
  %2534 = vmatpush.msra.mxu0 %v273
  %2535 = vmatpush.msra.mxu0 %v269
  %2536 = vmatpush.msra.mxu0 %v265
  %2537 = vmatpush.msra.mxu0 %v261
  %2538 = vmatpush.msra.mxu0 %v257
  %2539 = vmatmul.f32.gmra.mxu0 %v2481
  %v2540 = vpop.f32.mrf.mxu0
  %v2541 = vadd.f32 0.0, %v2540
  %2542 = vdwg.mxu0
  %2543 = vmatpush.msra.mxu0 %v318
  %2544 = vmatpush.msra.mxu0 %v314
  %2545 = vmatpush.msra.mxu0 %v310
  %2546 = vmatpush.msra.mxu0 %v306
  %2547 = vmatpush.msra.mxu0 %v302
  %2548 = vmatpush.msra.mxu0 %v298
  %2549 = vmatpush.msra.mxu0 %v294
  %2550 = vmatpush.msra.mxu0 %v290
  %2551 = vmatpush.msra.mxu0 %v286
  %2552 = vmatpush.msra.mxu0 %v282
  %2553 = vmatpush.msra.mxu0 %v278
  %2554 = vmatpush.msra.mxu0 %v274
  %2555 = vmatpush.msra.mxu0 %v270
  %2556 = vmatpush.msra.mxu0 %v266
  %2557 = vmatpush.msra.mxu0 %v262
  %2558 = vmatpush.msra.mxu0 %v258
  %2559 = vmatmul.f32.gmra.mxu0 %v2481
  %v2560 = vpop.f32.mrf.mxu0
  %v2561 = vadd.f32 0.0, %v2560
  %2562 = vdwg.mxu0
  %v2567 = vrot.slane %v2501, 5
  %v2568 = vrot.slane %v2521, 5
  %v2569 = vrot.slane %v2541, 5
  %v2570 = vrot.slane %v2561, 5
  %v2571 = vrot.slane %v2501, 6
  %v2572 = vrot.slane %v2521, 6
  %v2573 = vrot.slane %v2541, 6
  %v2574 = vrot.slane %v2561, 6
  %v2575 = vrot.slane %v2501, 7
  %v2576 = vrot.slane %v2521, 7
  %v2577 = vrot.slane %v2541, 7
  %v2578 = vrot.slane %v2561, 7
  %v2579 = vrot.slane %v2501, 1
  %v2580 = vrot.slane %v2521, 1
  %v2581 = vrot.slane %v2541, 1
  %v2582 = vrot.slane %v2561, 1
  %v2583 = vrot.slane %v2501, 2
  %v2584 = vrot.slane %v2521, 2
  %v2585 = vrot.slane %v2541, 2
  %v2586 = vrot.slane %v2561, 2
  %v2587 = vrot.slane %v2501, 3
  %v2588 = vrot.slane %v2521, 3
  %v2589 = vrot.slane %v2541, 3
  %v2590 = vrot.slane %v2561, 3
  %v2591 = vrot.slane %v2501, 4
  %v2592 = vrot.slane %v2521, 4
  %v2593 = vrot.slane %v2541, 4
  %v2594 = vrot.slane %v2561, 4
  %v2627 = vadd.f32 %v109, %v2567
  %v2628 = vadd.f32 %v150, %v2568
  %v2629 = vadd.f32 %v191, %v2569
  %v2630 = vadd.f32 %v232, %v2570
  %v2631 = vadd.f32 %v112, %v2571
  %v2632 = vadd.f32 %v153, %v2572
  %v2633 = vadd.f32 %v194, %v2573
  %v2634 = vadd.f32 %v235, %v2574
  %v2635 = vadd.f32 %v115, %v2575
  %v2636 = vadd.f32 %v156, %v2576
  %v2637 = vadd.f32 %v197, %v2577
  %v2638 = vadd.f32 %v238, %v2578
  %v2639 = vadd.f32 %v118, %v2501
  %v2640 = vadd.f32 %v159, %v2521
  %v2641 = vadd.f32 %v200, %v2541
  %v2642 = vadd.f32 %v241, %v2561
  %v2643 = vadd.f32 %v121, %v2579
  %v2644 = vadd.f32 %v162, %v2580
  %v2645 = vadd.f32 %v203, %v2581
  %v2646 = vadd.f32 %v244, %v2582
  %v2647 = vadd.f32 %v124, %v2583
  %v2648 = vadd.f32 %v165, %v2584
  %v2649 = vadd.f32 %v206, %v2585
  %v2650 = vadd.f32 %v247, %v2586
  %v2651 = vadd.f32 %v127, %v2587
  %v2652 = vadd.f32 %v168, %v2588
  %v2653 = vadd.f32 %v209, %v2589
  %v2654 = vadd.f32 %v250, %v2590
  %v2655 = vadd.f32 %v130, %v2591
  %v2656 = vadd.f32 %v171, %v2592
  %v2657 = vadd.f32 %v212, %v2593
  %v2658 = vadd.f32 %v253, %v2594
  %v2659 = vxor.u32 %v2627, 2147483648
  %v2660 = vxor.u32 %v2631, 2147483648
  %v2661 = vxor.u32 %v2635, 2147483648
  %v2662 = vxor.u32 %v2639, 2147483648
  %v2663 = vxor.u32 %v2643, 2147483648
  %v2664 = vxor.u32 %v2647, 2147483648
  %v2665 = vxor.u32 %v2651, 2147483648
  %v2666 = vxor.u32 %v2655, 2147483648
  %v2667 = vmul.f32 %v2659, 1.442695
  %v2668 = vpow.pop %v2667
  %v2669 = vmul.f32 %v2660, 1.442695
  %v2670 = vpow.pop %v2669
  %v2671 = vmul.f32 %v2661, 1.442695
  %v2672 = vpow.pop %v2671
  %v2673 = vmul.f32 %v2662, 1.442695
  %v2674 = vpow.pop %v2673
  %v2675 = vmul.f32 %v2663, 1.442695
  %v2676 = vpow.pop %v2675
  %v2677 = vmul.f32 %v2664, 1.442695
  %v2678 = vpow.pop %v2677
  %v2679 = vmul.f32 %v2665, 1.442695
  %v2680 = vpow.pop %v2679
  %v2681 = vmul.f32 %v2666, 1.442695
  %v2682 = vpow.pop %v2681
  %v2683 = vadd.f32 %v2668, 1.0
  %v2684 = vadd.f32 %v2670, 1.0
  %v2685 = vadd.f32 %v2672, 1.0
  %v2686 = vadd.f32 %v2674, 1.0
  %v2687 = vadd.f32 %v2676, 1.0
  %v2688 = vadd.f32 %v2678, 1.0
  %v2689 = vadd.f32 %v2680, 1.0
  %v2690 = vadd.f32 %v2682, 1.0
  %v2691 = vrcp.pop %v2683
  %v2692 = vmul.f32 %v2683, %v2691
  %v2693 = vsub.f32 1.0, %v2692
  %v2694 = vmul.f32 %v2691, %v2693
  %v2695 = vadd.f32 %v2691, %v2694
  %vm2696 = vweird.f32 %v2683
  %vm2697 = vweird.f32 %v2691
  %vm2698 = vmor %vm2696, %vm2697
  %v2699 = vsel %vm2698, %v2691, %v2695
  %v2700 = vand.u32 2147483647, %v2683
  %vm2701 = vcmp.eq.f32.partialorder %v2700, 8.507059e+37
  %v2702 = vand.u32 %v2683, 2147483648
  %v2703 = vor.u32 1.1754944e-38, %v2702
  %v2704 = vsel %vm2701, %v2703, %v2699
  %v2705 = vmul.f32 1.0, %v2704
  %v2706 = vrcp.pop %v2684
  %v2707 = vmul.f32 %v2684, %v2706
  %v2708 = vsub.f32 1.0, %v2707
  %v2709 = vmul.f32 %v2706, %v2708
  %v2710 = vadd.f32 %v2706, %v2709
  %vm2711 = vweird.f32 %v2684
  %vm2712 = vweird.f32 %v2706
  %vm2713 = vmor %vm2711, %vm2712
  %v2714 = vsel %vm2713, %v2706, %v2710
  %v2715 = vand.u32 2147483647, %v2684
  %vm2716 = vcmp.eq.f32.partialorder %v2715, 8.507059e+37
  %v2717 = vand.u32 %v2684, 2147483648
  %v2718 = vor.u32 1.1754944e-38, %v2717
  %v2719 = vsel %vm2716, %v2718, %v2714
  %v2720 = vmul.f32 1.0, %v2719
  %v2721 = vrcp.pop %v2685
  %v2722 = vmul.f32 %v2685, %v2721
  %v2723 = vsub.f32 1.0, %v2722
  %v2724 = vmul.f32 %v2721, %v2723
  %v2725 = vadd.f32 %v2721, %v2724
  %vm2726 = vweird.f32 %v2685
  %vm2727 = vweird.f32 %v2721
  %vm2728 = vmor %vm2726, %vm2727
  %v2729 = vsel %vm2728, %v2721, %v2725
  %v2730 = vand.u32 2147483647, %v2685
  %vm2731 = vcmp.eq.f32.partialorder %v2730, 8.507059e+37
  %v2732 = vand.u32 %v2685, 2147483648
  %v2733 = vor.u32 1.1754944e-38, %v2732
  %v2734 = vsel %vm2731, %v2733, %v2729
  %v2735 = vmul.f32 1.0, %v2734
  %v2736 = vrcp.pop %v2686
  %v2737 = vmul.f32 %v2686, %v2736
  %v2738 = vsub.f32 1.0, %v2737
  %v2739 = vmul.f32 %v2736, %v2738
  %v2740 = vadd.f32 %v2736, %v2739
  %vm2741 = vweird.f32 %v2686
  %vm2742 = vweird.f32 %v2736
  %vm2743 = vmor %vm2741, %vm2742
  %v2744 = vsel %vm2743, %v2736, %v2740
  %v2745 = vand.u32 2147483647, %v2686
  %vm2746 = vcmp.eq.f32.partialorder %v2745, 8.507059e+37
  %v2747 = vand.u32 %v2686, 2147483648
  %v2748 = vor.u32 1.1754944e-38, %v2747
  %v2749 = vsel %vm2746, %v2748, %v2744
  %v2750 = vmul.f32 1.0, %v2749
  %v2751 = vrcp.pop %v2687
  %v2752 = vmul.f32 %v2687, %v2751
  %v2753 = vsub.f32 1.0, %v2752
  %v2754 = vmul.f32 %v2751, %v2753
  %v2755 = vadd.f32 %v2751, %v2754
  %vm2756 = vweird.f32 %v2687
  %vm2757 = vweird.f32 %v2751
  %vm2758 = vmor %vm2756, %vm2757
  %v2759 = vsel %vm2758, %v2751, %v2755
  %v2760 = vand.u32 2147483647, %v2687
  %vm2761 = vcmp.eq.f32.partialorder %v2760, 8.507059e+37
  %v2762 = vand.u32 %v2687, 2147483648
  %v2763 = vor.u32 1.1754944e-38, %v2762
  %v2764 = vsel %vm2761, %v2763, %v2759
  %v2765 = vmul.f32 1.0, %v2764
  %v2766 = vrcp.pop %v2688
  %v2767 = vmul.f32 %v2688, %v2766
  %v2768 = vsub.f32 1.0, %v2767
  %v2769 = vmul.f32 %v2766, %v2768
  %v2770 = vadd.f32 %v2766, %v2769
  %vm2771 = vweird.f32 %v2688
  %vm2772 = vweird.f32 %v2766
  %vm2773 = vmor %vm2771, %vm2772
  %v2774 = vsel %vm2773, %v2766, %v2770
  %v2775 = vand.u32 2147483647, %v2688
  %vm2776 = vcmp.eq.f32.partialorder %v2775, 8.507059e+37
  %v2777 = vand.u32 %v2688, 2147483648
  %v2778 = vor.u32 1.1754944e-38, %v2777
  %v2779 = vsel %vm2776, %v2778, %v2774
  %v2780 = vmul.f32 1.0, %v2779
  %v2781 = vrcp.pop %v2689
  %v2782 = vmul.f32 %v2689, %v2781
  %v2783 = vsub.f32 1.0, %v2782
  %v2784 = vmul.f32 %v2781, %v2783
  %v2785 = vadd.f32 %v2781, %v2784
  %vm2786 = vweird.f32 %v2689
  %vm2787 = vweird.f32 %v2781
  %vm2788 = vmor %vm2786, %vm2787
  %v2789 = vsel %vm2788, %v2781, %v2785
  %v2790 = vand.u32 2147483647, %v2689
  %vm2791 = vcmp.eq.f32.partialorder %v2790, 8.507059e+37
  %v2792 = vand.u32 %v2689, 2147483648
  %v2793 = vor.u32 1.1754944e-38, %v2792
  %v2794 = vsel %vm2791, %v2793, %v2789
  %v2795 = vmul.f32 1.0, %v2794
  %v2796 = vrcp.pop %v2690
  %v2797 = vmul.f32 %v2690, %v2796
  %v2798 = vsub.f32 1.0, %v2797
  %v2799 = vmul.f32 %v2796, %v2798
  %v2800 = vadd.f32 %v2796, %v2799
  %vm2801 = vweird.f32 %v2690
  %vm2802 = vweird.f32 %v2796
  %vm2803 = vmor %vm2801, %vm2802
  %v2804 = vsel %vm2803, %v2796, %v2800
  %v2805 = vand.u32 2147483647, %v2690
  %vm2806 = vcmp.eq.f32.partialorder %v2805, 8.507059e+37
  %v2807 = vand.u32 %v2690, 2147483648
  %v2808 = vor.u32 1.1754944e-38, %v2807
  %v2809 = vsel %vm2806, %v2808, %v2804
  %v2810 = vmul.f32 1.0, %v2809
  %v2811 = vxor.u32 %v2628, 2147483648
  %v2812 = vxor.u32 %v2632, 2147483648
  %v2813 = vxor.u32 %v2636, 2147483648
  %v2814 = vxor.u32 %v2640, 2147483648
  %v2815 = vxor.u32 %v2644, 2147483648
  %v2816 = vxor.u32 %v2648, 2147483648
  %v2817 = vxor.u32 %v2652, 2147483648
  %v2818 = vxor.u32 %v2656, 2147483648
  %v2819 = vmul.f32 %v2811, 1.442695
  %v2820 = vpow.pop %v2819
  %v2821 = vmul.f32 %v2812, 1.442695
  %v2822 = vpow.pop %v2821
  %v2823 = vmul.f32 %v2813, 1.442695
  %v2824 = vpow.pop %v2823
  %v2825 = vmul.f32 %v2814, 1.442695
  %v2826 = vpow.pop %v2825
  %v2827 = vmul.f32 %v2815, 1.442695
  %v2828 = vpow.pop %v2827
  %v2829 = vmul.f32 %v2816, 1.442695
  %v2830 = vpow.pop %v2829
  %v2831 = vmul.f32 %v2817, 1.442695
  %v2832 = vpow.pop %v2831
  %v2833 = vmul.f32 %v2818, 1.442695
  %v2834 = vpow.pop %v2833
  %v2835 = vadd.f32 %v2820, 1.0
  %v2836 = vadd.f32 %v2822, 1.0
  %v2837 = vadd.f32 %v2824, 1.0
  %v2838 = vadd.f32 %v2826, 1.0
  %v2839 = vadd.f32 %v2828, 1.0
  %v2840 = vadd.f32 %v2830, 1.0
  %v2841 = vadd.f32 %v2832, 1.0
  %v2842 = vadd.f32 %v2834, 1.0
  %v2843 = vrcp.pop %v2835
  %v2844 = vmul.f32 %v2835, %v2843
  %v2845 = vsub.f32 1.0, %v2844
  %v2846 = vmul.f32 %v2843, %v2845
  %v2847 = vadd.f32 %v2843, %v2846
  %vm2848 = vweird.f32 %v2835
  %vm2849 = vweird.f32 %v2843
  %vm2850 = vmor %vm2848, %vm2849
  %v2851 = vsel %vm2850, %v2843, %v2847
  %v2852 = vand.u32 2147483647, %v2835
  %vm2853 = vcmp.eq.f32.partialorder %v2852, 8.507059e+37
  %v2854 = vand.u32 %v2835, 2147483648
  %v2855 = vor.u32 1.1754944e-38, %v2854
  %v2856 = vsel %vm2853, %v2855, %v2851
  %v2857 = vmul.f32 1.0, %v2856
  %v2858 = vrcp.pop %v2836
  %v2859 = vmul.f32 %v2836, %v2858
  %v2860 = vsub.f32 1.0, %v2859
  %v2861 = vmul.f32 %v2858, %v2860
  %v2862 = vadd.f32 %v2858, %v2861
  %vm2863 = vweird.f32 %v2836
  %vm2864 = vweird.f32 %v2858
  %vm2865 = vmor %vm2863, %vm2864
  %v2866 = vsel %vm2865, %v2858, %v2862
  %v2867 = vand.u32 2147483647, %v2836
  %vm2868 = vcmp.eq.f32.partialorder %v2867, 8.507059e+37
  %v2869 = vand.u32 %v2836, 2147483648
  %v2870 = vor.u32 1.1754944e-38, %v2869
  %v2871 = vsel %vm2868, %v2870, %v2866
  %v2872 = vmul.f32 1.0, %v2871
  %v2873 = vrcp.pop %v2837
  %v2874 = vmul.f32 %v2837, %v2873
  %v2875 = vsub.f32 1.0, %v2874
  %v2876 = vmul.f32 %v2873, %v2875
  %v2877 = vadd.f32 %v2873, %v2876
  %vm2878 = vweird.f32 %v2837
  %vm2879 = vweird.f32 %v2873
  %vm2880 = vmor %vm2878, %vm2879
  %v2881 = vsel %vm2880, %v2873, %v2877
  %v2882 = vand.u32 2147483647, %v2837
  %vm2883 = vcmp.eq.f32.partialorder %v2882, 8.507059e+37
  %v2884 = vand.u32 %v2837, 2147483648
  %v2885 = vor.u32 1.1754944e-38, %v2884
  %v2886 = vsel %vm2883, %v2885, %v2881
  %v2887 = vmul.f32 1.0, %v2886
  %v2888 = vrcp.pop %v2838
  %v2889 = vmul.f32 %v2838, %v2888
  %v2890 = vsub.f32 1.0, %v2889
  %v2891 = vmul.f32 %v2888, %v2890
  %v2892 = vadd.f32 %v2888, %v2891
  %vm2893 = vweird.f32 %v2838
  %vm2894 = vweird.f32 %v2888
  %vm2895 = vmor %vm2893, %vm2894
  %v2896 = vsel %vm2895, %v2888, %v2892
  %v2897 = vand.u32 2147483647, %v2838
  %vm2898 = vcmp.eq.f32.partialorder %v2897, 8.507059e+37
  %v2899 = vand.u32 %v2838, 2147483648
  %v2900 = vor.u32 1.1754944e-38, %v2899
  %v2901 = vsel %vm2898, %v2900, %v2896
  %v2902 = vmul.f32 1.0, %v2901
  %v2903 = vrcp.pop %v2839
  %v2904 = vmul.f32 %v2839, %v2903
  %v2905 = vsub.f32 1.0, %v2904
  %v2906 = vmul.f32 %v2903, %v2905
  %v2907 = vadd.f32 %v2903, %v2906
  %vm2908 = vweird.f32 %v2839
  %vm2909 = vweird.f32 %v2903
  %vm2910 = vmor %vm2908, %vm2909
  %v2911 = vsel %vm2910, %v2903, %v2907
  %v2912 = vand.u32 2147483647, %v2839
  %vm2913 = vcmp.eq.f32.partialorder %v2912, 8.507059e+37
  %v2914 = vand.u32 %v2839, 2147483648
  %v2915 = vor.u32 1.1754944e-38, %v2914
  %v2916 = vsel %vm2913, %v2915, %v2911
  %v2917 = vmul.f32 1.0, %v2916
  %v2918 = vrcp.pop %v2840
  %v2919 = vmul.f32 %v2840, %v2918
  %v2920 = vsub.f32 1.0, %v2919
  %v2921 = vmul.f32 %v2918, %v2920
  %v2922 = vadd.f32 %v2918, %v2921
  %vm2923 = vweird.f32 %v2840
  %vm2924 = vweird.f32 %v2918
  %vm2925 = vmor %vm2923, %vm2924
  %v2926 = vsel %vm2925, %v2918, %v2922
  %v2927 = vand.u32 2147483647, %v2840
  %vm2928 = vcmp.eq.f32.partialorder %v2927, 8.507059e+37
  %v2929 = vand.u32 %v2840, 2147483648
  %v2930 = vor.u32 1.1754944e-38, %v2929
  %v2931 = vsel %vm2928, %v2930, %v2926
  %v2932 = vmul.f32 1.0, %v2931
  %v2933 = vrcp.pop %v2841
  %v2934 = vmul.f32 %v2841, %v2933
  %v2935 = vsub.f32 1.0, %v2934
  %v2936 = vmul.f32 %v2933, %v2935
  %v2937 = vadd.f32 %v2933, %v2936
  %vm2938 = vweird.f32 %v2841
  %vm2939 = vweird.f32 %v2933
  %vm2940 = vmor %vm2938, %vm2939
  %v2941 = vsel %vm2940, %v2933, %v2937
  %v2942 = vand.u32 2147483647, %v2841
  %vm2943 = vcmp.eq.f32.partialorder %v2942, 8.507059e+37
  %v2944 = vand.u32 %v2841, 2147483648
  %v2945 = vor.u32 1.1754944e-38, %v2944
  %v2946 = vsel %vm2943, %v2945, %v2941
  %v2947 = vmul.f32 1.0, %v2946
  %v2948 = vrcp.pop %v2842
  %v2949 = vmul.f32 %v2842, %v2948
  %v2950 = vsub.f32 1.0, %v2949
  %v2951 = vmul.f32 %v2948, %v2950
  %v2952 = vadd.f32 %v2948, %v2951
  %vm2953 = vweird.f32 %v2842
  %vm2954 = vweird.f32 %v2948
  %vm2955 = vmor %vm2953, %vm2954
  %v2956 = vsel %vm2955, %v2948, %v2952
  %v2957 = vand.u32 2147483647, %v2842
  %vm2958 = vcmp.eq.f32.partialorder %v2957, 8.507059e+37
  %v2959 = vand.u32 %v2842, 2147483648
  %v2960 = vor.u32 1.1754944e-38, %v2959
  %v2961 = vsel %vm2958, %v2960, %v2956
  %v2962 = vmul.f32 1.0, %v2961
  %v2963 = vtanh.pop %v2629
  %v2964 = vtanh.pop %v2633
  %v2965 = vtanh.pop %v2637
  %v2966 = vtanh.pop %v2641
  %v2967 = vtanh.pop %v2645
  %v2968 = vtanh.pop %v2649
  %v2969 = vtanh.pop %v2653
  %v2970 = vtanh.pop %v2657
  %v2971 = vxor.u32 %v2630, 2147483648
  %v2972 = vxor.u32 %v2634, 2147483648
  %v2973 = vxor.u32 %v2638, 2147483648
  %v2974 = vxor.u32 %v2642, 2147483648
  %v2975 = vxor.u32 %v2646, 2147483648
  %v2976 = vxor.u32 %v2650, 2147483648
  %v2977 = vxor.u32 %v2654, 2147483648
  %v2978 = vxor.u32 %v2658, 2147483648
  %v2979 = vmul.f32 %v2971, 1.442695
  %v2980 = vpow.pop %v2979
  %v2981 = vmul.f32 %v2972, 1.442695
  %v2982 = vpow.pop %v2981
  %v2983 = vmul.f32 %v2973, 1.442695
  %v2984 = vpow.pop %v2983
  %v2985 = vmul.f32 %v2974, 1.442695
  %v2986 = vpow.pop %v2985
  %v2987 = vmul.f32 %v2975, 1.442695
  %v2988 = vpow.pop %v2987
  %v2989 = vmul.f32 %v2976, 1.442695
  %v2990 = vpow.pop %v2989
  %v2991 = vmul.f32 %v2977, 1.442695
  %v2992 = vpow.pop %v2991
  %v2993 = vmul.f32 %v2978, 1.442695
  %v2994 = vpow.pop %v2993
  %v2995 = vadd.f32 %v2980, 1.0
  %v2996 = vadd.f32 %v2982, 1.0
  %v2997 = vadd.f32 %v2984, 1.0
  %v2998 = vadd.f32 %v2986, 1.0
  %v2999 = vadd.f32 %v2988, 1.0
  %v3000 = vadd.f32 %v2990, 1.0
  %v3001 = vadd.f32 %v2992, 1.0
  %v3002 = vadd.f32 %v2994, 1.0
  %v3003 = vrcp.pop %v2995
  %v3004 = vmul.f32 %v2995, %v3003
  %v3005 = vsub.f32 1.0, %v3004
  %v3006 = vmul.f32 %v3003, %v3005
  %v3007 = vadd.f32 %v3003, %v3006
  %vm3008 = vweird.f32 %v2995
  %vm3009 = vweird.f32 %v3003
  %vm3010 = vmor %vm3008, %vm3009
  %v3011 = vsel %vm3010, %v3003, %v3007
  %v3012 = vand.u32 2147483647, %v2995
  %vm3013 = vcmp.eq.f32.partialorder %v3012, 8.507059e+37
  %v3014 = vand.u32 %v2995, 2147483648
  %v3015 = vor.u32 1.1754944e-38, %v3014
  %v3016 = vsel %vm3013, %v3015, %v3011
  %v3017 = vmul.f32 1.0, %v3016
  %v3018 = vrcp.pop %v2996
  %v3019 = vmul.f32 %v2996, %v3018
  %v3020 = vsub.f32 1.0, %v3019
  %v3021 = vmul.f32 %v3018, %v3020
  %v3022 = vadd.f32 %v3018, %v3021
  %vm3023 = vweird.f32 %v2996
  %vm3024 = vweird.f32 %v3018
  %vm3025 = vmor %vm3023, %vm3024
  %v3026 = vsel %vm3025, %v3018, %v3022
  %v3027 = vand.u32 2147483647, %v2996
  %vm3028 = vcmp.eq.f32.partialorder %v3027, 8.507059e+37
  %v3029 = vand.u32 %v2996, 2147483648
  %v3030 = vor.u32 1.1754944e-38, %v3029
  %v3031 = vsel %vm3028, %v3030, %v3026
  %v3032 = vmul.f32 1.0, %v3031
  %v3033 = vrcp.pop %v2997
  %v3034 = vmul.f32 %v2997, %v3033
  %v3035 = vsub.f32 1.0, %v3034
  %v3036 = vmul.f32 %v3033, %v3035
  %v3037 = vadd.f32 %v3033, %v3036
  %vm3038 = vweird.f32 %v2997
  %vm3039 = vweird.f32 %v3033
  %vm3040 = vmor %vm3038, %vm3039
  %v3041 = vsel %vm3040, %v3033, %v3037
  %v3042 = vand.u32 2147483647, %v2997
  %vm3043 = vcmp.eq.f32.partialorder %v3042, 8.507059e+37
  %v3044 = vand.u32 %v2997, 2147483648
  %v3045 = vor.u32 1.1754944e-38, %v3044
  %v3046 = vsel %vm3043, %v3045, %v3041
  %v3047 = vmul.f32 1.0, %v3046
  %v3048 = vrcp.pop %v2998
  %v3049 = vmul.f32 %v2998, %v3048
  %v3050 = vsub.f32 1.0, %v3049
  %v3051 = vmul.f32 %v3048, %v3050
  %v3052 = vadd.f32 %v3048, %v3051
  %vm3053 = vweird.f32 %v2998
  %vm3054 = vweird.f32 %v3048
  %vm3055 = vmor %vm3053, %vm3054
  %v3056 = vsel %vm3055, %v3048, %v3052
  %v3057 = vand.u32 2147483647, %v2998
  %vm3058 = vcmp.eq.f32.partialorder %v3057, 8.507059e+37
  %v3059 = vand.u32 %v2998, 2147483648
  %v3060 = vor.u32 1.1754944e-38, %v3059
  %v3061 = vsel %vm3058, %v3060, %v3056
  %v3062 = vmul.f32 1.0, %v3061
  %v3063 = vrcp.pop %v2999
  %v3064 = vmul.f32 %v2999, %v3063
  %v3065 = vsub.f32 1.0, %v3064
  %v3066 = vmul.f32 %v3063, %v3065
  %v3067 = vadd.f32 %v3063, %v3066
  %vm3068 = vweird.f32 %v2999
  %vm3069 = vweird.f32 %v3063
  %vm3070 = vmor %vm3068, %vm3069
  %v3071 = vsel %vm3070, %v3063, %v3067
  %v3072 = vand.u32 2147483647, %v2999
  %vm3073 = vcmp.eq.f32.partialorder %v3072, 8.507059e+37
  %v3074 = vand.u32 %v2999, 2147483648
  %v3075 = vor.u32 1.1754944e-38, %v3074
  %v3076 = vsel %vm3073, %v3075, %v3071
  %v3077 = vmul.f32 1.0, %v3076
  %v3078 = vrcp.pop %v3000
  %v3079 = vmul.f32 %v3000, %v3078
  %v3080 = vsub.f32 1.0, %v3079
  %v3081 = vmul.f32 %v3078, %v3080
  %v3082 = vadd.f32 %v3078, %v3081
  %vm3083 = vweird.f32 %v3000
  %vm3084 = vweird.f32 %v3078
  %vm3085 = vmor %vm3083, %vm3084
  %v3086 = vsel %vm3085, %v3078, %v3082
  %v3087 = vand.u32 2147483647, %v3000
  %vm3088 = vcmp.eq.f32.partialorder %v3087, 8.507059e+37
  %v3089 = vand.u32 %v3000, 2147483648
  %v3090 = vor.u32 1.1754944e-38, %v3089
  %v3091 = vsel %vm3088, %v3090, %v3086
  %v3092 = vmul.f32 1.0, %v3091
  %v3093 = vrcp.pop %v3001
  %v3094 = vmul.f32 %v3001, %v3093
  %v3095 = vsub.f32 1.0, %v3094
  %v3096 = vmul.f32 %v3093, %v3095
  %v3097 = vadd.f32 %v3093, %v3096
  %vm3098 = vweird.f32 %v3001
  %vm3099 = vweird.f32 %v3093
  %vm3100 = vmor %vm3098, %vm3099
  %v3101 = vsel %vm3100, %v3093, %v3097
  %v3102 = vand.u32 2147483647, %v3001
  %vm3103 = vcmp.eq.f32.partialorder %v3102, 8.507059e+37
  %v3104 = vand.u32 %v3001, 2147483648
  %v3105 = vor.u32 1.1754944e-38, %v3104
  %v3106 = vsel %vm3103, %v3105, %v3101
  %v3107 = vmul.f32 1.0, %v3106
  %v3108 = vrcp.pop %v3002
  %v3109 = vmul.f32 %v3002, %v3108
  %v3110 = vsub.f32 1.0, %v3109
  %v3111 = vmul.f32 %v3108, %v3110
  %v3112 = vadd.f32 %v3108, %v3111
  %vm3113 = vweird.f32 %v3002
  %vm3114 = vweird.f32 %v3108
  %vm3115 = vmor %vm3113, %vm3114
  %v3116 = vsel %vm3115, %v3108, %v3112
  %v3117 = vand.u32 2147483647, %v3002
  %vm3118 = vcmp.eq.f32.partialorder %v3117, 8.507059e+37
  %v3119 = vand.u32 %v3002, 2147483648
  %v3120 = vor.u32 1.1754944e-38, %v3119
  %v3121 = vsel %vm3118, %v3120, %v3116
  %v3122 = vmul.f32 1.0, %v3121
  %v3131 = vrot.slane %v2436, 7
  %v3132 = vrot.slane %v2437, 7
  %v3133 = vrot.slane %v2438, 7
  %v3134 = vrot.slane %v2439, 7
  %v3135 = vrot.slane %v2440, 7
  %v3136 = vrot.slane %v2441, 7
  %v3137 = vrot.slane %v2442, 7
  %v3138 = vrot.slane %v2443, 7
  %v3147 = vmul.f32 %v2857, %v3131
  %v3148 = vmul.f32 %v2872, %v3132
  %v3149 = vmul.f32 %v2887, %v3133
  %v3150 = vmul.f32 %v2902, %v3134
  %v3151 = vmul.f32 %v2917, %v3135
  %v3152 = vmul.f32 %v2932, %v3136
  %v3153 = vmul.f32 %v2947, %v3137
  %v3154 = vmul.f32 %v2962, %v3138
  %v3155 = vmul.f32 %v2705, %v2963
  %v3156 = vmul.f32 %v2720, %v2964
  %v3157 = vmul.f32 %v2735, %v2965
  %v3158 = vmul.f32 %v2750, %v2966
  %v3159 = vmul.f32 %v2765, %v2967
  %v3160 = vmul.f32 %v2780, %v2968
  %v3161 = vmul.f32 %v2795, %v2969
  %v3162 = vmul.f32 %v2810, %v2970
  %v3163 = vadd.f32 %v3147, %v3155
  %v3164 = vadd.f32 %v3148, %v3156
  %v3165 = vadd.f32 %v3149, %v3157
  %v3166 = vadd.f32 %v3150, %v3158
  %v3167 = vadd.f32 %v3151, %v3159
  %v3168 = vadd.f32 %v3152, %v3160
  %v3169 = vadd.f32 %v3153, %v3161
  %v3170 = vadd.f32 %v3154, %v3162
  %v3171 = vtanh.pop %v3163
  %v3172 = vtanh.pop %v3164
  %v3173 = vtanh.pop %v3165
  %v3174 = vtanh.pop %v3166
  %v3175 = vtanh.pop %v3167
  %v3176 = vtanh.pop %v3168
  %v3177 = vtanh.pop %v3169
  %v3178 = vtanh.pop %v3170
  %v3179 = vmul.f32 %v3017, %v3171
  %v3180 = vmul.f32 %v3032, %v3172
  %v3181 = vmul.f32 %v3047, %v3173
  %v3182 = vmul.f32 %v3062, %v3174
  %v3183 = vmul.f32 %v3077, %v3175
  %v3184 = vmul.f32 %v3092, %v3176
  %v3185 = vmul.f32 %v3107, %v3177
  %v3186 = vmul.f32 %v3122, %v3178
  %v3195 = vrot.slane %v3179, 3
  %v3196 = vrot.slane %v3180, 2
  %v3197 = vsel %vm1008, %v3196, %v3195
  %v3198 = vrot.slane %v3181, 1
  %v3199 = vsel %vm1011, %v3198, %v3197
  %v3200 = vsel %vm1014, %v3182, %v3199
  %v3201 = vrot.slane %v3183, 7
  %v3202 = vsel %vm1017, %v3201, %v3200
  %v3203 = vrot.slane %v3184, 6
  %v3204 = vsel %vm1020, %v3203, %v3202
  %v3205 = vrot.slane %v3185, 5
  %v3206 = vsel %vm1023, %v3205, %v3204
  %v3207 = vrot.slane %v3186, 4
  %v3208 = vsel %vm1026, %v3207, %v3206
  %3210 = vmatpush.msra.mxu0 %v315
  %3211 = vmatpush.msra.mxu0 %v311
  %3212 = vmatpush.msra.mxu0 %v307
  %3213 = vmatpush.msra.mxu0 %v303
  %3214 = vmatpush.msra.mxu0 %v299
  %3215 = vmatpush.msra.mxu0 %v295
  %3216 = vmatpush.msra.mxu0 %v291
  %3217 = vmatpush.msra.mxu0 %v287
  %3218 = vmatpush.msra.mxu0 %v283
  %3219 = vmatpush.msra.mxu0 %v279
  %3220 = vmatpush.msra.mxu0 %v275
  %3221 = vmatpush.msra.mxu0 %v271
  %3222 = vmatpush.msra.mxu0 %v267
  %3223 = vmatpush.msra.mxu0 %v263
  %3224 = vmatpush.msra.mxu0 %v259
  %3225 = vmatpush.msra.mxu0 %v255
  %3226 = vmatmul.f32.gmra.mxu0 %v3208
  %v3227 = vpop.f32.mrf.mxu0
  %v3228 = vadd.f32 0.0, %v3227
  %3229 = vdwg.mxu0
  %3230 = vmatpush.msra.mxu0 %v316
  %3231 = vmatpush.msra.mxu0 %v312
  %3232 = vmatpush.msra.mxu0 %v308
  %3233 = vmatpush.msra.mxu0 %v304
  %3234 = vmatpush.msra.mxu0 %v300
  %3235 = vmatpush.msra.mxu0 %v296
  %3236 = vmatpush.msra.mxu0 %v292
  %3237 = vmatpush.msra.mxu0 %v288
  %3238 = vmatpush.msra.mxu0 %v284
  %3239 = vmatpush.msra.mxu0 %v280
  %3240 = vmatpush.msra.mxu0 %v276
  %3241 = vmatpush.msra.mxu0 %v272
  %3242 = vmatpush.msra.mxu0 %v268
  %3243 = vmatpush.msra.mxu0 %v264
  %3244 = vmatpush.msra.mxu0 %v260
  %3245 = vmatpush.msra.mxu0 %v256
  %3246 = vmatmul.f32.gmra.mxu0 %v3208
  %v3247 = vpop.f32.mrf.mxu0
  %v3248 = vadd.f32 0.0, %v3247
  %3249 = vdwg.mxu0
  %3250 = vmatpush.msra.mxu0 %v317
  %3251 = vmatpush.msra.mxu0 %v313
  %3252 = vmatpush.msra.mxu0 %v309
  %3253 = vmatpush.msra.mxu0 %v305
  %3254 = vmatpush.msra.mxu0 %v301
  %3255 = vmatpush.msra.mxu0 %v297
  %3256 = vmatpush.msra.mxu0 %v293
  %3257 = vmatpush.msra.mxu0 %v289
  %3258 = vmatpush.msra.mxu0 %v285
  %3259 = vmatpush.msra.mxu0 %v281
  %3260 = vmatpush.msra.mxu0 %v277
  %3261 = vmatpush.msra.mxu0 %v273
  %3262 = vmatpush.msra.mxu0 %v269
  %3263 = vmatpush.msra.mxu0 %v265
  %3264 = vmatpush.msra.mxu0 %v261
  %3265 = vmatpush.msra.mxu0 %v257
  %3266 = vmatmul.f32.gmra.mxu0 %v3208
  %v3267 = vpop.f32.mrf.mxu0
  %v3268 = vadd.f32 0.0, %v3267
  %3269 = vdwg.mxu0
  %3270 = vmatpush.msra.mxu0 %v318
  %3271 = vmatpush.msra.mxu0 %v314
  %3272 = vmatpush.msra.mxu0 %v310
  %3273 = vmatpush.msra.mxu0 %v306
  %3274 = vmatpush.msra.mxu0 %v302
  %3275 = vmatpush.msra.mxu0 %v298
  %3276 = vmatpush.msra.mxu0 %v294
  %3277 = vmatpush.msra.mxu0 %v290
  %3278 = vmatpush.msra.mxu0 %v286
  %3279 = vmatpush.msra.mxu0 %v282
  %3280 = vmatpush.msra.mxu0 %v278
  %3281 = vmatpush.msra.mxu0 %v274
  %3282 = vmatpush.msra.mxu0 %v270
  %3283 = vmatpush.msra.mxu0 %v266
  %3284 = vmatpush.msra.mxu0 %v262
  %3285 = vmatpush.msra.mxu0 %v258
  %3286 = vmatmul.f32.gmra.mxu0 %v3208
  %v3287 = vpop.f32.mrf.mxu0
  %v3288 = vadd.f32 0.0, %v3287
  %3289 = vdwg.mxu0
  %v3294 = vrot.slane %v3228, 4
  %v3295 = vrot.slane %v3248, 4
  %v3296 = vrot.slane %v3268, 4
  %v3297 = vrot.slane %v3288, 4
  %v3298 = vrot.slane %v3228, 5
  %v3299 = vrot.slane %v3248, 5
  %v3300 = vrot.slane %v3268, 5
  %v3301 = vrot.slane %v3288, 5
  %v3302 = vrot.slane %v3228, 6
  %v3303 = vrot.slane %v3248, 6
  %v3304 = vrot.slane %v3268, 6
  %v3305 = vrot.slane %v3288, 6
  %v3306 = vrot.slane %v3228, 7
  %v3307 = vrot.slane %v3248, 7
  %v3308 = vrot.slane %v3268, 7
  %v3309 = vrot.slane %v3288, 7
  %v3310 = vrot.slane %v3228, 1
  %v3311 = vrot.slane %v3248, 1
  %v3312 = vrot.slane %v3268, 1
  %v3313 = vrot.slane %v3288, 1
  %v3314 = vrot.slane %v3228, 2
  %v3315 = vrot.slane %v3248, 2
  %v3316 = vrot.slane %v3268, 2
  %v3317 = vrot.slane %v3288, 2
  %v3318 = vrot.slane %v3228, 3
  %v3319 = vrot.slane %v3248, 3
  %v3320 = vrot.slane %v3268, 3
  %v3321 = vrot.slane %v3288, 3
  %v3354 = vadd.f32 %v109, %v3294
  %v3355 = vadd.f32 %v150, %v3295
  %v3356 = vadd.f32 %v191, %v3296
  %v3357 = vadd.f32 %v232, %v3297
  %v3358 = vadd.f32 %v112, %v3298
  %v3359 = vadd.f32 %v153, %v3299
  %v3360 = vadd.f32 %v194, %v3300
  %v3361 = vadd.f32 %v235, %v3301
  %v3362 = vadd.f32 %v115, %v3302
  %v3363 = vadd.f32 %v156, %v3303
  %v3364 = vadd.f32 %v197, %v3304
  %v3365 = vadd.f32 %v238, %v3305
  %v3366 = vadd.f32 %v118, %v3306
  %v3367 = vadd.f32 %v159, %v3307
  %v3368 = vadd.f32 %v200, %v3308
  %v3369 = vadd.f32 %v241, %v3309
  %v3370 = vadd.f32 %v121, %v3228
  %v3371 = vadd.f32 %v162, %v3248
  %v3372 = vadd.f32 %v203, %v3268
  %v3373 = vadd.f32 %v244, %v3288
  %v3374 = vadd.f32 %v124, %v3310
  %v3375 = vadd.f32 %v165, %v3311
  %v3376 = vadd.f32 %v206, %v3312
  %v3377 = vadd.f32 %v247, %v3313
  %v3378 = vadd.f32 %v127, %v3314
  %v3379 = vadd.f32 %v168, %v3315
  %v3380 = vadd.f32 %v209, %v3316
  %v3381 = vadd.f32 %v250, %v3317
  %v3382 = vadd.f32 %v130, %v3318
  %v3383 = vadd.f32 %v171, %v3319
  %v3384 = vadd.f32 %v212, %v3320
  %v3385 = vadd.f32 %v253, %v3321
  %v3386 = vxor.u32 %v3354, 2147483648
  %v3387 = vxor.u32 %v3358, 2147483648
  %v3388 = vxor.u32 %v3362, 2147483648
  %v3389 = vxor.u32 %v3366, 2147483648
  %v3390 = vxor.u32 %v3370, 2147483648
  %v3391 = vxor.u32 %v3374, 2147483648
  %v3392 = vxor.u32 %v3378, 2147483648
  %v3393 = vxor.u32 %v3382, 2147483648
  %v3394 = vmul.f32 %v3386, 1.442695
  %v3395 = vpow.pop %v3394
  %v3396 = vmul.f32 %v3387, 1.442695
  %v3397 = vpow.pop %v3396
  %v3398 = vmul.f32 %v3388, 1.442695
  %v3399 = vpow.pop %v3398
  %v3400 = vmul.f32 %v3389, 1.442695
  %v3401 = vpow.pop %v3400
  %v3402 = vmul.f32 %v3390, 1.442695
  %v3403 = vpow.pop %v3402
  %v3404 = vmul.f32 %v3391, 1.442695
  %v3405 = vpow.pop %v3404
  %v3406 = vmul.f32 %v3392, 1.442695
  %v3407 = vpow.pop %v3406
  %v3408 = vmul.f32 %v3393, 1.442695
  %v3409 = vpow.pop %v3408
  %v3410 = vadd.f32 %v3395, 1.0
  %v3411 = vadd.f32 %v3397, 1.0
  %v3412 = vadd.f32 %v3399, 1.0
  %v3413 = vadd.f32 %v3401, 1.0
  %v3414 = vadd.f32 %v3403, 1.0
  %v3415 = vadd.f32 %v3405, 1.0
  %v3416 = vadd.f32 %v3407, 1.0
  %v3417 = vadd.f32 %v3409, 1.0
  %v3418 = vrcp.pop %v3410
  %v3419 = vmul.f32 %v3410, %v3418
  %v3420 = vsub.f32 1.0, %v3419
  %v3421 = vmul.f32 %v3418, %v3420
  %v3422 = vadd.f32 %v3418, %v3421
  %vm3423 = vweird.f32 %v3410
  %vm3424 = vweird.f32 %v3418
  %vm3425 = vmor %vm3423, %vm3424
  %v3426 = vsel %vm3425, %v3418, %v3422
  %v3427 = vand.u32 2147483647, %v3410
  %vm3428 = vcmp.eq.f32.partialorder %v3427, 8.507059e+37
  %v3429 = vand.u32 %v3410, 2147483648
  %v3430 = vor.u32 1.1754944e-38, %v3429
  %v3431 = vsel %vm3428, %v3430, %v3426
  %v3432 = vmul.f32 1.0, %v3431
  %v3433 = vrcp.pop %v3411
  %v3434 = vmul.f32 %v3411, %v3433
  %v3435 = vsub.f32 1.0, %v3434
  %v3436 = vmul.f32 %v3433, %v3435
  %v3437 = vadd.f32 %v3433, %v3436
  %vm3438 = vweird.f32 %v3411
  %vm3439 = vweird.f32 %v3433
  %vm3440 = vmor %vm3438, %vm3439
  %v3441 = vsel %vm3440, %v3433, %v3437
  %v3442 = vand.u32 2147483647, %v3411
  %vm3443 = vcmp.eq.f32.partialorder %v3442, 8.507059e+37
  %v3444 = vand.u32 %v3411, 2147483648
  %v3445 = vor.u32 1.1754944e-38, %v3444
  %v3446 = vsel %vm3443, %v3445, %v3441
  %v3447 = vmul.f32 1.0, %v3446
  %v3448 = vrcp.pop %v3412
  %v3449 = vmul.f32 %v3412, %v3448
  %v3450 = vsub.f32 1.0, %v3449
  %v3451 = vmul.f32 %v3448, %v3450
  %v3452 = vadd.f32 %v3448, %v3451
  %vm3453 = vweird.f32 %v3412
  %vm3454 = vweird.f32 %v3448
  %vm3455 = vmor %vm3453, %vm3454
  %v3456 = vsel %vm3455, %v3448, %v3452
  %v3457 = vand.u32 2147483647, %v3412
  %vm3458 = vcmp.eq.f32.partialorder %v3457, 8.507059e+37
  %v3459 = vand.u32 %v3412, 2147483648
  %v3460 = vor.u32 1.1754944e-38, %v3459
  %v3461 = vsel %vm3458, %v3460, %v3456
  %v3462 = vmul.f32 1.0, %v3461
  %v3463 = vrcp.pop %v3413
  %v3464 = vmul.f32 %v3413, %v3463
  %v3465 = vsub.f32 1.0, %v3464
  %v3466 = vmul.f32 %v3463, %v3465
  %v3467 = vadd.f32 %v3463, %v3466
  %vm3468 = vweird.f32 %v3413
  %vm3469 = vweird.f32 %v3463
  %vm3470 = vmor %vm3468, %vm3469
  %v3471 = vsel %vm3470, %v3463, %v3467
  %v3472 = vand.u32 2147483647, %v3413
  %vm3473 = vcmp.eq.f32.partialorder %v3472, 8.507059e+37
  %v3474 = vand.u32 %v3413, 2147483648
  %v3475 = vor.u32 1.1754944e-38, %v3474
  %v3476 = vsel %vm3473, %v3475, %v3471
  %v3477 = vmul.f32 1.0, %v3476
  %v3478 = vrcp.pop %v3414
  %v3479 = vmul.f32 %v3414, %v3478
  %v3480 = vsub.f32 1.0, %v3479
  %v3481 = vmul.f32 %v3478, %v3480
  %v3482 = vadd.f32 %v3478, %v3481
  %vm3483 = vweird.f32 %v3414
  %vm3484 = vweird.f32 %v3478
  %vm3485 = vmor %vm3483, %vm3484
  %v3486 = vsel %vm3485, %v3478, %v3482
  %v3487 = vand.u32 2147483647, %v3414
  %vm3488 = vcmp.eq.f32.partialorder %v3487, 8.507059e+37
  %v3489 = vand.u32 %v3414, 2147483648
  %v3490 = vor.u32 1.1754944e-38, %v3489
  %v3491 = vsel %vm3488, %v3490, %v3486
  %v3492 = vmul.f32 1.0, %v3491
  %v3493 = vrcp.pop %v3415
  %v3494 = vmul.f32 %v3415, %v3493
  %v3495 = vsub.f32 1.0, %v3494
  %v3496 = vmul.f32 %v3493, %v3495
  %v3497 = vadd.f32 %v3493, %v3496
  %vm3498 = vweird.f32 %v3415
  %vm3499 = vweird.f32 %v3493
  %vm3500 = vmor %vm3498, %vm3499
  %v3501 = vsel %vm3500, %v3493, %v3497
  %v3502 = vand.u32 2147483647, %v3415
  %vm3503 = vcmp.eq.f32.partialorder %v3502, 8.507059e+37
  %v3504 = vand.u32 %v3415, 2147483648
  %v3505 = vor.u32 1.1754944e-38, %v3504
  %v3506 = vsel %vm3503, %v3505, %v3501
  %v3507 = vmul.f32 1.0, %v3506
  %v3508 = vrcp.pop %v3416
  %v3509 = vmul.f32 %v3416, %v3508
  %v3510 = vsub.f32 1.0, %v3509
  %v3511 = vmul.f32 %v3508, %v3510
  %v3512 = vadd.f32 %v3508, %v3511
  %vm3513 = vweird.f32 %v3416
  %vm3514 = vweird.f32 %v3508
  %vm3515 = vmor %vm3513, %vm3514
  %v3516 = vsel %vm3515, %v3508, %v3512
  %v3517 = vand.u32 2147483647, %v3416
  %vm3518 = vcmp.eq.f32.partialorder %v3517, 8.507059e+37
  %v3519 = vand.u32 %v3416, 2147483648
  %v3520 = vor.u32 1.1754944e-38, %v3519
  %v3521 = vsel %vm3518, %v3520, %v3516
  %v3522 = vmul.f32 1.0, %v3521
  %v3523 = vrcp.pop %v3417
  %v3524 = vmul.f32 %v3417, %v3523
  %v3525 = vsub.f32 1.0, %v3524
  %v3526 = vmul.f32 %v3523, %v3525
  %v3527 = vadd.f32 %v3523, %v3526
  %vm3528 = vweird.f32 %v3417
  %vm3529 = vweird.f32 %v3523
  %vm3530 = vmor %vm3528, %vm3529
  %v3531 = vsel %vm3530, %v3523, %v3527
  %v3532 = vand.u32 2147483647, %v3417
  %vm3533 = vcmp.eq.f32.partialorder %v3532, 8.507059e+37
  %v3534 = vand.u32 %v3417, 2147483648
  %v3535 = vor.u32 1.1754944e-38, %v3534
  %v3536 = vsel %vm3533, %v3535, %v3531
  %v3537 = vmul.f32 1.0, %v3536
  %v3538 = vxor.u32 %v3355, 2147483648
  %v3539 = vxor.u32 %v3359, 2147483648
  %v3540 = vxor.u32 %v3363, 2147483648
  %v3541 = vxor.u32 %v3367, 2147483648
  %v3542 = vxor.u32 %v3371, 2147483648
  %v3543 = vxor.u32 %v3375, 2147483648
  %v3544 = vxor.u32 %v3379, 2147483648
  %v3545 = vxor.u32 %v3383, 2147483648
  %v3546 = vmul.f32 %v3538, 1.442695
  %v3547 = vpow.pop %v3546
  %v3548 = vmul.f32 %v3539, 1.442695
  %v3549 = vpow.pop %v3548
  %v3550 = vmul.f32 %v3540, 1.442695
  %v3551 = vpow.pop %v3550
  %v3552 = vmul.f32 %v3541, 1.442695
  %v3553 = vpow.pop %v3552
  %v3554 = vmul.f32 %v3542, 1.442695
  %v3555 = vpow.pop %v3554
  %v3556 = vmul.f32 %v3543, 1.442695
  %v3557 = vpow.pop %v3556
  %v3558 = vmul.f32 %v3544, 1.442695
  %v3559 = vpow.pop %v3558
  %v3560 = vmul.f32 %v3545, 1.442695
  %v3561 = vpow.pop %v3560
  %v3562 = vadd.f32 %v3547, 1.0
  %v3563 = vadd.f32 %v3549, 1.0
  %v3564 = vadd.f32 %v3551, 1.0
  %v3565 = vadd.f32 %v3553, 1.0
  %v3566 = vadd.f32 %v3555, 1.0
  %v3567 = vadd.f32 %v3557, 1.0
  %v3568 = vadd.f32 %v3559, 1.0
  %v3569 = vadd.f32 %v3561, 1.0
  %v3570 = vrcp.pop %v3562
  %v3571 = vmul.f32 %v3562, %v3570
  %v3572 = vsub.f32 1.0, %v3571
  %v3573 = vmul.f32 %v3570, %v3572
  %v3574 = vadd.f32 %v3570, %v3573
  %vm3575 = vweird.f32 %v3562
  %vm3576 = vweird.f32 %v3570
  %vm3577 = vmor %vm3575, %vm3576
  %v3578 = vsel %vm3577, %v3570, %v3574
  %v3579 = vand.u32 2147483647, %v3562
  %vm3580 = vcmp.eq.f32.partialorder %v3579, 8.507059e+37
  %v3581 = vand.u32 %v3562, 2147483648
  %v3582 = vor.u32 1.1754944e-38, %v3581
  %v3583 = vsel %vm3580, %v3582, %v3578
  %v3584 = vmul.f32 1.0, %v3583
  %v3585 = vrcp.pop %v3563
  %v3586 = vmul.f32 %v3563, %v3585
  %v3587 = vsub.f32 1.0, %v3586
  %v3588 = vmul.f32 %v3585, %v3587
  %v3589 = vadd.f32 %v3585, %v3588
  %vm3590 = vweird.f32 %v3563
  %vm3591 = vweird.f32 %v3585
  %vm3592 = vmor %vm3590, %vm3591
  %v3593 = vsel %vm3592, %v3585, %v3589
  %v3594 = vand.u32 2147483647, %v3563
  %vm3595 = vcmp.eq.f32.partialorder %v3594, 8.507059e+37
  %v3596 = vand.u32 %v3563, 2147483648
  %v3597 = vor.u32 1.1754944e-38, %v3596
  %v3598 = vsel %vm3595, %v3597, %v3593
  %v3599 = vmul.f32 1.0, %v3598
  %v3600 = vrcp.pop %v3564
  %v3601 = vmul.f32 %v3564, %v3600
  %v3602 = vsub.f32 1.0, %v3601
  %v3603 = vmul.f32 %v3600, %v3602
  %v3604 = vadd.f32 %v3600, %v3603
  %vm3605 = vweird.f32 %v3564
  %vm3606 = vweird.f32 %v3600
  %vm3607 = vmor %vm3605, %vm3606
  %v3608 = vsel %vm3607, %v3600, %v3604
  %v3609 = vand.u32 2147483647, %v3564
  %vm3610 = vcmp.eq.f32.partialorder %v3609, 8.507059e+37
  %v3611 = vand.u32 %v3564, 2147483648
  %v3612 = vor.u32 1.1754944e-38, %v3611
  %v3613 = vsel %vm3610, %v3612, %v3608
  %v3614 = vmul.f32 1.0, %v3613
  %v3615 = vrcp.pop %v3565
  %v3616 = vmul.f32 %v3565, %v3615
  %v3617 = vsub.f32 1.0, %v3616
  %v3618 = vmul.f32 %v3615, %v3617
  %v3619 = vadd.f32 %v3615, %v3618
  %vm3620 = vweird.f32 %v3565
  %vm3621 = vweird.f32 %v3615
  %vm3622 = vmor %vm3620, %vm3621
  %v3623 = vsel %vm3622, %v3615, %v3619
  %v3624 = vand.u32 2147483647, %v3565
  %vm3625 = vcmp.eq.f32.partialorder %v3624, 8.507059e+37
  %v3626 = vand.u32 %v3565, 2147483648
  %v3627 = vor.u32 1.1754944e-38, %v3626
  %v3628 = vsel %vm3625, %v3627, %v3623
  %v3629 = vmul.f32 1.0, %v3628
  %v3630 = vrcp.pop %v3566
  %v3631 = vmul.f32 %v3566, %v3630
  %v3632 = vsub.f32 1.0, %v3631
  %v3633 = vmul.f32 %v3630, %v3632
  %v3634 = vadd.f32 %v3630, %v3633
  %vm3635 = vweird.f32 %v3566
  %vm3636 = vweird.f32 %v3630
  %vm3637 = vmor %vm3635, %vm3636
  %v3638 = vsel %vm3637, %v3630, %v3634
  %v3639 = vand.u32 2147483647, %v3566
  %vm3640 = vcmp.eq.f32.partialorder %v3639, 8.507059e+37
  %v3641 = vand.u32 %v3566, 2147483648
  %v3642 = vor.u32 1.1754944e-38, %v3641
  %v3643 = vsel %vm3640, %v3642, %v3638
  %v3644 = vmul.f32 1.0, %v3643
  %v3645 = vrcp.pop %v3567
  %v3646 = vmul.f32 %v3567, %v3645
  %v3647 = vsub.f32 1.0, %v3646
  %v3648 = vmul.f32 %v3645, %v3647
  %v3649 = vadd.f32 %v3645, %v3648
  %vm3650 = vweird.f32 %v3567
  %vm3651 = vweird.f32 %v3645
  %vm3652 = vmor %vm3650, %vm3651
  %v3653 = vsel %vm3652, %v3645, %v3649
  %v3654 = vand.u32 2147483647, %v3567
  %vm3655 = vcmp.eq.f32.partialorder %v3654, 8.507059e+37
  %v3656 = vand.u32 %v3567, 2147483648
  %v3657 = vor.u32 1.1754944e-38, %v3656
  %v3658 = vsel %vm3655, %v3657, %v3653
  %v3659 = vmul.f32 1.0, %v3658
  %v3660 = vrcp.pop %v3568
  %v3661 = vmul.f32 %v3568, %v3660
  %v3662 = vsub.f32 1.0, %v3661
  %v3663 = vmul.f32 %v3660, %v3662
  %v3664 = vadd.f32 %v3660, %v3663
  %vm3665 = vweird.f32 %v3568
  %vm3666 = vweird.f32 %v3660
  %vm3667 = vmor %vm3665, %vm3666
  %v3668 = vsel %vm3667, %v3660, %v3664
  %v3669 = vand.u32 2147483647, %v3568
  %vm3670 = vcmp.eq.f32.partialorder %v3669, 8.507059e+37
  %v3671 = vand.u32 %v3568, 2147483648
  %v3672 = vor.u32 1.1754944e-38, %v3671
  %v3673 = vsel %vm3670, %v3672, %v3668
  %v3674 = vmul.f32 1.0, %v3673
  %v3675 = vrcp.pop %v3569
  %v3676 = vmul.f32 %v3569, %v3675
  %v3677 = vsub.f32 1.0, %v3676
  %v3678 = vmul.f32 %v3675, %v3677
  %v3679 = vadd.f32 %v3675, %v3678
  %vm3680 = vweird.f32 %v3569
  %vm3681 = vweird.f32 %v3675
  %vm3682 = vmor %vm3680, %vm3681
  %v3683 = vsel %vm3682, %v3675, %v3679
  %v3684 = vand.u32 2147483647, %v3569
  %vm3685 = vcmp.eq.f32.partialorder %v3684, 8.507059e+37
  %v3686 = vand.u32 %v3569, 2147483648
  %v3687 = vor.u32 1.1754944e-38, %v3686
  %v3688 = vsel %vm3685, %v3687, %v3683
  %v3689 = vmul.f32 1.0, %v3688
  %v3690 = vtanh.pop %v3356
  %v3691 = vtanh.pop %v3360
  %v3692 = vtanh.pop %v3364
  %v3693 = vtanh.pop %v3368
  %v3694 = vtanh.pop %v3372
  %v3695 = vtanh.pop %v3376
  %v3696 = vtanh.pop %v3380
  %v3697 = vtanh.pop %v3384
  %v3698 = vxor.u32 %v3357, 2147483648
  %v3699 = vxor.u32 %v3361, 2147483648
  %v3700 = vxor.u32 %v3365, 2147483648
  %v3701 = vxor.u32 %v3369, 2147483648
  %v3702 = vxor.u32 %v3373, 2147483648
  %v3703 = vxor.u32 %v3377, 2147483648
  %v3704 = vxor.u32 %v3381, 2147483648
  %v3705 = vxor.u32 %v3385, 2147483648
  %v3706 = vmul.f32 %v3698, 1.442695
  %v3707 = vpow.pop %v3706
  %v3708 = vmul.f32 %v3699, 1.442695
  %v3709 = vpow.pop %v3708
  %v3710 = vmul.f32 %v3700, 1.442695
  %v3711 = vpow.pop %v3710
  %v3712 = vmul.f32 %v3701, 1.442695
  %v3713 = vpow.pop %v3712
  %v3714 = vmul.f32 %v3702, 1.442695
  %v3715 = vpow.pop %v3714
  %v3716 = vmul.f32 %v3703, 1.442695
  %v3717 = vpow.pop %v3716
  %v3718 = vmul.f32 %v3704, 1.442695
  %v3719 = vpow.pop %v3718
  %v3720 = vmul.f32 %v3705, 1.442695
  %v3721 = vpow.pop %v3720
  %v3722 = vadd.f32 %v3707, 1.0
  %v3723 = vadd.f32 %v3709, 1.0
  %v3724 = vadd.f32 %v3711, 1.0
  %v3725 = vadd.f32 %v3713, 1.0
  %v3726 = vadd.f32 %v3715, 1.0
  %v3727 = vadd.f32 %v3717, 1.0
  %v3728 = vadd.f32 %v3719, 1.0
  %v3729 = vadd.f32 %v3721, 1.0
  %v3730 = vrcp.pop %v3722
  %v3731 = vmul.f32 %v3722, %v3730
  %v3732 = vsub.f32 1.0, %v3731
  %v3733 = vmul.f32 %v3730, %v3732
  %v3734 = vadd.f32 %v3730, %v3733
  %vm3735 = vweird.f32 %v3722
  %vm3736 = vweird.f32 %v3730
  %vm3737 = vmor %vm3735, %vm3736
  %v3738 = vsel %vm3737, %v3730, %v3734
  %v3739 = vand.u32 2147483647, %v3722
  %vm3740 = vcmp.eq.f32.partialorder %v3739, 8.507059e+37
  %v3741 = vand.u32 %v3722, 2147483648
  %v3742 = vor.u32 1.1754944e-38, %v3741
  %v3743 = vsel %vm3740, %v3742, %v3738
  %v3744 = vmul.f32 1.0, %v3743
  %v3745 = vrcp.pop %v3723
  %v3746 = vmul.f32 %v3723, %v3745
  %v3747 = vsub.f32 1.0, %v3746
  %v3748 = vmul.f32 %v3745, %v3747
  %v3749 = vadd.f32 %v3745, %v3748
  %vm3750 = vweird.f32 %v3723
  %vm3751 = vweird.f32 %v3745
  %vm3752 = vmor %vm3750, %vm3751
  %v3753 = vsel %vm3752, %v3745, %v3749
  %v3754 = vand.u32 2147483647, %v3723
  %vm3755 = vcmp.eq.f32.partialorder %v3754, 8.507059e+37
  %v3756 = vand.u32 %v3723, 2147483648
  %v3757 = vor.u32 1.1754944e-38, %v3756
  %v3758 = vsel %vm3755, %v3757, %v3753
  %v3759 = vmul.f32 1.0, %v3758
  %v3760 = vrcp.pop %v3724
  %v3761 = vmul.f32 %v3724, %v3760
  %v3762 = vsub.f32 1.0, %v3761
  %v3763 = vmul.f32 %v3760, %v3762
  %v3764 = vadd.f32 %v3760, %v3763
  %vm3765 = vweird.f32 %v3724
  %vm3766 = vweird.f32 %v3760
  %vm3767 = vmor %vm3765, %vm3766
  %v3768 = vsel %vm3767, %v3760, %v3764
  %v3769 = vand.u32 2147483647, %v3724
  %vm3770 = vcmp.eq.f32.partialorder %v3769, 8.507059e+37
  %v3771 = vand.u32 %v3724, 2147483648
  %v3772 = vor.u32 1.1754944e-38, %v3771
  %v3773 = vsel %vm3770, %v3772, %v3768
  %v3774 = vmul.f32 1.0, %v3773
  %v3775 = vrcp.pop %v3725
  %v3776 = vmul.f32 %v3725, %v3775
  %v3777 = vsub.f32 1.0, %v3776
  %v3778 = vmul.f32 %v3775, %v3777
  %v3779 = vadd.f32 %v3775, %v3778
  %vm3780 = vweird.f32 %v3725
  %vm3781 = vweird.f32 %v3775
  %vm3782 = vmor %vm3780, %vm3781
  %v3783 = vsel %vm3782, %v3775, %v3779
  %v3784 = vand.u32 2147483647, %v3725
  %vm3785 = vcmp.eq.f32.partialorder %v3784, 8.507059e+37
  %v3786 = vand.u32 %v3725, 2147483648
  %v3787 = vor.u32 1.1754944e-38, %v3786
  %v3788 = vsel %vm3785, %v3787, %v3783
  %v3789 = vmul.f32 1.0, %v3788
  %v3790 = vrcp.pop %v3726
  %v3791 = vmul.f32 %v3726, %v3790
  %v3792 = vsub.f32 1.0, %v3791
  %v3793 = vmul.f32 %v3790, %v3792
  %v3794 = vadd.f32 %v3790, %v3793
  %vm3795 = vweird.f32 %v3726
  %vm3796 = vweird.f32 %v3790
  %vm3797 = vmor %vm3795, %vm3796
  %v3798 = vsel %vm3797, %v3790, %v3794
  %v3799 = vand.u32 2147483647, %v3726
  %vm3800 = vcmp.eq.f32.partialorder %v3799, 8.507059e+37
  %v3801 = vand.u32 %v3726, 2147483648
  %v3802 = vor.u32 1.1754944e-38, %v3801
  %v3803 = vsel %vm3800, %v3802, %v3798
  %v3804 = vmul.f32 1.0, %v3803
  %v3805 = vrcp.pop %v3727
  %v3806 = vmul.f32 %v3727, %v3805
  %v3807 = vsub.f32 1.0, %v3806
  %v3808 = vmul.f32 %v3805, %v3807
  %v3809 = vadd.f32 %v3805, %v3808
  %vm3810 = vweird.f32 %v3727
  %vm3811 = vweird.f32 %v3805
  %vm3812 = vmor %vm3810, %vm3811
  %v3813 = vsel %vm3812, %v3805, %v3809
  %v3814 = vand.u32 2147483647, %v3727
  %vm3815 = vcmp.eq.f32.partialorder %v3814, 8.507059e+37
  %v3816 = vand.u32 %v3727, 2147483648
  %v3817 = vor.u32 1.1754944e-38, %v3816
  %v3818 = vsel %vm3815, %v3817, %v3813
  %v3819 = vmul.f32 1.0, %v3818
  %v3820 = vrcp.pop %v3728
  %v3821 = vmul.f32 %v3728, %v3820
  %v3822 = vsub.f32 1.0, %v3821
  %v3823 = vmul.f32 %v3820, %v3822
  %v3824 = vadd.f32 %v3820, %v3823
  %vm3825 = vweird.f32 %v3728
  %vm3826 = vweird.f32 %v3820
  %vm3827 = vmor %vm3825, %vm3826
  %v3828 = vsel %vm3827, %v3820, %v3824
  %v3829 = vand.u32 2147483647, %v3728
  %vm3830 = vcmp.eq.f32.partialorder %v3829, 8.507059e+37
  %v3831 = vand.u32 %v3728, 2147483648
  %v3832 = vor.u32 1.1754944e-38, %v3831
  %v3833 = vsel %vm3830, %v3832, %v3828
  %v3834 = vmul.f32 1.0, %v3833
  %v3835 = vrcp.pop %v3729
  %v3836 = vmul.f32 %v3729, %v3835
  %v3837 = vsub.f32 1.0, %v3836
  %v3838 = vmul.f32 %v3835, %v3837
  %v3839 = vadd.f32 %v3835, %v3838
  %vm3840 = vweird.f32 %v3729
  %vm3841 = vweird.f32 %v3835
  %vm3842 = vmor %vm3840, %vm3841
  %v3843 = vsel %vm3842, %v3835, %v3839
  %v3844 = vand.u32 2147483647, %v3729
  %vm3845 = vcmp.eq.f32.partialorder %v3844, 8.507059e+37
  %v3846 = vand.u32 %v3729, 2147483648
  %v3847 = vor.u32 1.1754944e-38, %v3846
  %v3848 = vsel %vm3845, %v3847, %v3843
  %v3849 = vmul.f32 1.0, %v3848
  %v3858 = vrot.slane %v3163, 7
  %v3859 = vrot.slane %v3164, 7
  %v3860 = vrot.slane %v3165, 7
  %v3861 = vrot.slane %v3166, 7
  %v3862 = vrot.slane %v3167, 7
  %v3863 = vrot.slane %v3168, 7
  %v3864 = vrot.slane %v3169, 7
  %v3865 = vrot.slane %v3170, 7
  %v3874 = vmul.f32 %v3584, %v3858
  %v3875 = vmul.f32 %v3599, %v3859
  %v3876 = vmul.f32 %v3614, %v3860
  %v3877 = vmul.f32 %v3629, %v3861
  %v3878 = vmul.f32 %v3644, %v3862
  %v3879 = vmul.f32 %v3659, %v3863
  %v3880 = vmul.f32 %v3674, %v3864
  %v3881 = vmul.f32 %v3689, %v3865
  %v3882 = vmul.f32 %v3432, %v3690
  %v3883 = vmul.f32 %v3447, %v3691
  %v3884 = vmul.f32 %v3462, %v3692
  %v3885 = vmul.f32 %v3477, %v3693
  %v3886 = vmul.f32 %v3492, %v3694
  %v3887 = vmul.f32 %v3507, %v3695
  %v3888 = vmul.f32 %v3522, %v3696
  %v3889 = vmul.f32 %v3537, %v3697
  %v3890 = vadd.f32 %v3874, %v3882
  %v3891 = vadd.f32 %v3875, %v3883
  %v3892 = vadd.f32 %v3876, %v3884
  %v3893 = vadd.f32 %v3877, %v3885
  %v3894 = vadd.f32 %v3878, %v3886
  %v3895 = vadd.f32 %v3879, %v3887
  %v3896 = vadd.f32 %v3880, %v3888
  %v3897 = vadd.f32 %v3881, %v3889
  %v3898 = vtanh.pop %v3890
  %v3899 = vtanh.pop %v3891
  %v3900 = vtanh.pop %v3892
  %v3901 = vtanh.pop %v3893
  %v3902 = vtanh.pop %v3894
  %v3903 = vtanh.pop %v3895
  %v3904 = vtanh.pop %v3896
  %v3905 = vtanh.pop %v3897
  %v3906 = vmul.f32 %v3744, %v3898
  %v3907 = vmul.f32 %v3759, %v3899
  %v3908 = vmul.f32 %v3774, %v3900
  %v3909 = vmul.f32 %v3789, %v3901
  %v3910 = vmul.f32 %v3804, %v3902
  %v3911 = vmul.f32 %v3819, %v3903
  %v3912 = vmul.f32 %v3834, %v3904
  %v3913 = vmul.f32 %v3849, %v3905
  %v3922 = vrot.slane %v3906, 4
  %v3923 = vrot.slane %v3907, 3
  %v3924 = vsel %vm1008, %v3923, %v3922
  %v3925 = vrot.slane %v3908, 2
  %v3926 = vsel %vm1011, %v3925, %v3924
  %v3927 = vrot.slane %v3909, 1
  %v3928 = vsel %vm1014, %v3927, %v3926
  %v3929 = vsel %vm1017, %v3910, %v3928
  %v3930 = vrot.slane %v3911, 7
  %v3931 = vsel %vm1020, %v3930, %v3929
  %v3932 = vrot.slane %v3912, 6
  %v3933 = vsel %vm1023, %v3932, %v3931
  %v3934 = vrot.slane %v3913, 5
  %v3935 = vsel %vm1026, %v3934, %v3933
  %3937 = vmatpush.msra.mxu0 %v315
  %3938 = vmatpush.msra.mxu0 %v311
  %3939 = vmatpush.msra.mxu0 %v307
  %3940 = vmatpush.msra.mxu0 %v303
  %3941 = vmatpush.msra.mxu0 %v299
  %3942 = vmatpush.msra.mxu0 %v295
  %3943 = vmatpush.msra.mxu0 %v291
  %3944 = vmatpush.msra.mxu0 %v287
  %3945 = vmatpush.msra.mxu0 %v283
  %3946 = vmatpush.msra.mxu0 %v279
  %3947 = vmatpush.msra.mxu0 %v275
  %3948 = vmatpush.msra.mxu0 %v271
  %3949 = vmatpush.msra.mxu0 %v267
  %3950 = vmatpush.msra.mxu0 %v263
  %3951 = vmatpush.msra.mxu0 %v259
  %3952 = vmatpush.msra.mxu0 %v255
  %3953 = vmatmul.f32.gmra.mxu0 %v3935
  %v3954 = vpop.f32.mrf.mxu0
  %v3955 = vadd.f32 0.0, %v3954
  %3956 = vdwg.mxu0
  %3957 = vmatpush.msra.mxu0 %v316
  %3958 = vmatpush.msra.mxu0 %v312
  %3959 = vmatpush.msra.mxu0 %v308
  %3960 = vmatpush.msra.mxu0 %v304
  %3961 = vmatpush.msra.mxu0 %v300
  %3962 = vmatpush.msra.mxu0 %v296
  %3963 = vmatpush.msra.mxu0 %v292
  %3964 = vmatpush.msra.mxu0 %v288
  %3965 = vmatpush.msra.mxu0 %v284
  %3966 = vmatpush.msra.mxu0 %v280
  %3967 = vmatpush.msra.mxu0 %v276
  %3968 = vmatpush.msra.mxu0 %v272
  %3969 = vmatpush.msra.mxu0 %v268
  %3970 = vmatpush.msra.mxu0 %v264
  %3971 = vmatpush.msra.mxu0 %v260
  %3972 = vmatpush.msra.mxu0 %v256
  %3973 = vmatmul.f32.gmra.mxu0 %v3935
  %v3974 = vpop.f32.mrf.mxu0
  %v3975 = vadd.f32 0.0, %v3974
  %3976 = vdwg.mxu0
  %3977 = vmatpush.msra.mxu0 %v317
  %3978 = vmatpush.msra.mxu0 %v313
  %3979 = vmatpush.msra.mxu0 %v309
  %3980 = vmatpush.msra.mxu0 %v305
  %3981 = vmatpush.msra.mxu0 %v301
  %3982 = vmatpush.msra.mxu0 %v297
  %3983 = vmatpush.msra.mxu0 %v293
  %3984 = vmatpush.msra.mxu0 %v289
  %3985 = vmatpush.msra.mxu0 %v285
  %3986 = vmatpush.msra.mxu0 %v281
  %3987 = vmatpush.msra.mxu0 %v277
  %3988 = vmatpush.msra.mxu0 %v273
  %3989 = vmatpush.msra.mxu0 %v269
  %3990 = vmatpush.msra.mxu0 %v265
  %3991 = vmatpush.msra.mxu0 %v261
  %3992 = vmatpush.msra.mxu0 %v257
  %3993 = vmatmul.f32.gmra.mxu0 %v3935
  %v3994 = vpop.f32.mrf.mxu0
  %v3995 = vadd.f32 0.0, %v3994
  %3996 = vdwg.mxu0
  %3997 = vmatpush.msra.mxu0 %v318
  %3998 = vmatpush.msra.mxu0 %v314
  %3999 = vmatpush.msra.mxu0 %v310
  %4000 = vmatpush.msra.mxu0 %v306
  %4001 = vmatpush.msra.mxu0 %v302
  %4002 = vmatpush.msra.mxu0 %v298
  %4003 = vmatpush.msra.mxu0 %v294
  %4004 = vmatpush.msra.mxu0 %v290
  %4005 = vmatpush.msra.mxu0 %v286
  %4006 = vmatpush.msra.mxu0 %v282
  %4007 = vmatpush.msra.mxu0 %v278
  %4008 = vmatpush.msra.mxu0 %v274
  %4009 = vmatpush.msra.mxu0 %v270
  %4010 = vmatpush.msra.mxu0 %v266
  %4011 = vmatpush.msra.mxu0 %v262
  %4012 = vmatpush.msra.mxu0 %v258
  %4013 = vmatmul.f32.gmra.mxu0 %v3935
  %v4014 = vpop.f32.mrf.mxu0
  %v4015 = vadd.f32 0.0, %v4014
  %4016 = vdwg.mxu0
  %v4021 = vrot.slane %v3955, 3
  %v4022 = vrot.slane %v3975, 3
  %v4023 = vrot.slane %v3995, 3
  %v4024 = vrot.slane %v4015, 3
  %v4025 = vrot.slane %v3955, 4
  %v4026 = vrot.slane %v3975, 4
  %v4027 = vrot.slane %v3995, 4
  %v4028 = vrot.slane %v4015, 4
  %v4029 = vrot.slane %v3955, 5
  %v4030 = vrot.slane %v3975, 5
  %v4031 = vrot.slane %v3995, 5
  %v4032 = vrot.slane %v4015, 5
  %v4033 = vrot.slane %v3955, 6
  %v4034 = vrot.slane %v3975, 6
  %v4035 = vrot.slane %v3995, 6
  %v4036 = vrot.slane %v4015, 6
  %v4037 = vrot.slane %v3955, 7
  %v4038 = vrot.slane %v3975, 7
  %v4039 = vrot.slane %v3995, 7
  %v4040 = vrot.slane %v4015, 7
  %v4041 = vrot.slane %v3955, 1
  %v4042 = vrot.slane %v3975, 1
  %v4043 = vrot.slane %v3995, 1
  %v4044 = vrot.slane %v4015, 1
  %v4045 = vrot.slane %v3955, 2
  %v4046 = vrot.slane %v3975, 2
  %v4047 = vrot.slane %v3995, 2
  %v4048 = vrot.slane %v4015, 2
  %v4081 = vadd.f32 %v109, %v4021
  %v4082 = vadd.f32 %v150, %v4022
  %v4083 = vadd.f32 %v191, %v4023
  %v4084 = vadd.f32 %v232, %v4024
  %v4085 = vadd.f32 %v112, %v4025
  %v4086 = vadd.f32 %v153, %v4026
  %v4087 = vadd.f32 %v194, %v4027
  %v4088 = vadd.f32 %v235, %v4028
  %v4089 = vadd.f32 %v115, %v4029
  %v4090 = vadd.f32 %v156, %v4030
  %v4091 = vadd.f32 %v197, %v4031
  %v4092 = vadd.f32 %v238, %v4032
  %v4093 = vadd.f32 %v118, %v4033
  %v4094 = vadd.f32 %v159, %v4034
  %v4095 = vadd.f32 %v200, %v4035
  %v4096 = vadd.f32 %v241, %v4036
  %v4097 = vadd.f32 %v121, %v4037
  %v4098 = vadd.f32 %v162, %v4038
  %v4099 = vadd.f32 %v203, %v4039
  %v4100 = vadd.f32 %v244, %v4040
  %v4101 = vadd.f32 %v124, %v3955
  %v4102 = vadd.f32 %v165, %v3975
  %v4103 = vadd.f32 %v206, %v3995
  %v4104 = vadd.f32 %v247, %v4015
  %v4105 = vadd.f32 %v127, %v4041
  %v4106 = vadd.f32 %v168, %v4042
  %v4107 = vadd.f32 %v209, %v4043
  %v4108 = vadd.f32 %v250, %v4044
  %v4109 = vadd.f32 %v130, %v4045
  %v4110 = vadd.f32 %v171, %v4046
  %v4111 = vadd.f32 %v212, %v4047
  %v4112 = vadd.f32 %v253, %v4048
  %v4113 = vxor.u32 %v4081, 2147483648
  %v4114 = vxor.u32 %v4085, 2147483648
  %v4115 = vxor.u32 %v4089, 2147483648
  %v4116 = vxor.u32 %v4093, 2147483648
  %v4117 = vxor.u32 %v4097, 2147483648
  %v4118 = vxor.u32 %v4101, 2147483648
  %v4119 = vxor.u32 %v4105, 2147483648
  %v4120 = vxor.u32 %v4109, 2147483648
  %v4121 = vmul.f32 %v4113, 1.442695
  %v4122 = vpow.pop %v4121
  %v4123 = vmul.f32 %v4114, 1.442695
  %v4124 = vpow.pop %v4123
  %v4125 = vmul.f32 %v4115, 1.442695
  %v4126 = vpow.pop %v4125
  %v4127 = vmul.f32 %v4116, 1.442695
  %v4128 = vpow.pop %v4127
  %v4129 = vmul.f32 %v4117, 1.442695
  %v4130 = vpow.pop %v4129
  %v4131 = vmul.f32 %v4118, 1.442695
  %v4132 = vpow.pop %v4131
  %v4133 = vmul.f32 %v4119, 1.442695
  %v4134 = vpow.pop %v4133
  %v4135 = vmul.f32 %v4120, 1.442695
  %v4136 = vpow.pop %v4135
  %v4137 = vadd.f32 %v4122, 1.0
  %v4138 = vadd.f32 %v4124, 1.0
  %v4139 = vadd.f32 %v4126, 1.0
  %v4140 = vadd.f32 %v4128, 1.0
  %v4141 = vadd.f32 %v4130, 1.0
  %v4142 = vadd.f32 %v4132, 1.0
  %v4143 = vadd.f32 %v4134, 1.0
  %v4144 = vadd.f32 %v4136, 1.0
  %v4145 = vrcp.pop %v4137
  %v4146 = vmul.f32 %v4137, %v4145
  %v4147 = vsub.f32 1.0, %v4146
  %v4148 = vmul.f32 %v4145, %v4147
  %v4149 = vadd.f32 %v4145, %v4148
  %vm4150 = vweird.f32 %v4137
  %vm4151 = vweird.f32 %v4145
  %vm4152 = vmor %vm4150, %vm4151
  %v4153 = vsel %vm4152, %v4145, %v4149
  %v4154 = vand.u32 2147483647, %v4137
  %vm4155 = vcmp.eq.f32.partialorder %v4154, 8.507059e+37
  %v4156 = vand.u32 %v4137, 2147483648
  %v4157 = vor.u32 1.1754944e-38, %v4156
  %v4158 = vsel %vm4155, %v4157, %v4153
  %v4159 = vmul.f32 1.0, %v4158
  %v4160 = vrcp.pop %v4138
  %v4161 = vmul.f32 %v4138, %v4160
  %v4162 = vsub.f32 1.0, %v4161
  %v4163 = vmul.f32 %v4160, %v4162
  %v4164 = vadd.f32 %v4160, %v4163
  %vm4165 = vweird.f32 %v4138
  %vm4166 = vweird.f32 %v4160
  %vm4167 = vmor %vm4165, %vm4166
  %v4168 = vsel %vm4167, %v4160, %v4164
  %v4169 = vand.u32 2147483647, %v4138
  %vm4170 = vcmp.eq.f32.partialorder %v4169, 8.507059e+37
  %v4171 = vand.u32 %v4138, 2147483648
  %v4172 = vor.u32 1.1754944e-38, %v4171
  %v4173 = vsel %vm4170, %v4172, %v4168
  %v4174 = vmul.f32 1.0, %v4173
  %v4175 = vrcp.pop %v4139
  %v4176 = vmul.f32 %v4139, %v4175
  %v4177 = vsub.f32 1.0, %v4176
  %v4178 = vmul.f32 %v4175, %v4177
  %v4179 = vadd.f32 %v4175, %v4178
  %vm4180 = vweird.f32 %v4139
  %vm4181 = vweird.f32 %v4175
  %vm4182 = vmor %vm4180, %vm4181
  %v4183 = vsel %vm4182, %v4175, %v4179
  %v4184 = vand.u32 2147483647, %v4139
  %vm4185 = vcmp.eq.f32.partialorder %v4184, 8.507059e+37
  %v4186 = vand.u32 %v4139, 2147483648
  %v4187 = vor.u32 1.1754944e-38, %v4186
  %v4188 = vsel %vm4185, %v4187, %v4183
  %v4189 = vmul.f32 1.0, %v4188
  %v4190 = vrcp.pop %v4140
  %v4191 = vmul.f32 %v4140, %v4190
  %v4192 = vsub.f32 1.0, %v4191
  %v4193 = vmul.f32 %v4190, %v4192
  %v4194 = vadd.f32 %v4190, %v4193
  %vm4195 = vweird.f32 %v4140
  %vm4196 = vweird.f32 %v4190
  %vm4197 = vmor %vm4195, %vm4196
  %v4198 = vsel %vm4197, %v4190, %v4194
  %v4199 = vand.u32 2147483647, %v4140
  %vm4200 = vcmp.eq.f32.partialorder %v4199, 8.507059e+37
  %v4201 = vand.u32 %v4140, 2147483648
  %v4202 = vor.u32 1.1754944e-38, %v4201
  %v4203 = vsel %vm4200, %v4202, %v4198
  %v4204 = vmul.f32 1.0, %v4203
  %v4205 = vrcp.pop %v4141
  %v4206 = vmul.f32 %v4141, %v4205
  %v4207 = vsub.f32 1.0, %v4206
  %v4208 = vmul.f32 %v4205, %v4207
  %v4209 = vadd.f32 %v4205, %v4208
  %vm4210 = vweird.f32 %v4141
  %vm4211 = vweird.f32 %v4205
  %vm4212 = vmor %vm4210, %vm4211
  %v4213 = vsel %vm4212, %v4205, %v4209
  %v4214 = vand.u32 2147483647, %v4141
  %vm4215 = vcmp.eq.f32.partialorder %v4214, 8.507059e+37
  %v4216 = vand.u32 %v4141, 2147483648
  %v4217 = vor.u32 1.1754944e-38, %v4216
  %v4218 = vsel %vm4215, %v4217, %v4213
  %v4219 = vmul.f32 1.0, %v4218
  %v4220 = vrcp.pop %v4142
  %v4221 = vmul.f32 %v4142, %v4220
  %v4222 = vsub.f32 1.0, %v4221
  %v4223 = vmul.f32 %v4220, %v4222
  %v4224 = vadd.f32 %v4220, %v4223
  %vm4225 = vweird.f32 %v4142
  %vm4226 = vweird.f32 %v4220
  %vm4227 = vmor %vm4225, %vm4226
  %v4228 = vsel %vm4227, %v4220, %v4224
  %v4229 = vand.u32 2147483647, %v4142
  %vm4230 = vcmp.eq.f32.partialorder %v4229, 8.507059e+37
  %v4231 = vand.u32 %v4142, 2147483648
  %v4232 = vor.u32 1.1754944e-38, %v4231
  %v4233 = vsel %vm4230, %v4232, %v4228
  %v4234 = vmul.f32 1.0, %v4233
  %v4235 = vrcp.pop %v4143
  %v4236 = vmul.f32 %v4143, %v4235
  %v4237 = vsub.f32 1.0, %v4236
  %v4238 = vmul.f32 %v4235, %v4237
  %v4239 = vadd.f32 %v4235, %v4238
  %vm4240 = vweird.f32 %v4143
  %vm4241 = vweird.f32 %v4235
  %vm4242 = vmor %vm4240, %vm4241
  %v4243 = vsel %vm4242, %v4235, %v4239
  %v4244 = vand.u32 2147483647, %v4143
  %vm4245 = vcmp.eq.f32.partialorder %v4244, 8.507059e+37
  %v4246 = vand.u32 %v4143, 2147483648
  %v4247 = vor.u32 1.1754944e-38, %v4246
  %v4248 = vsel %vm4245, %v4247, %v4243
  %v4249 = vmul.f32 1.0, %v4248
  %v4250 = vrcp.pop %v4144
  %v4251 = vmul.f32 %v4144, %v4250
  %v4252 = vsub.f32 1.0, %v4251
  %v4253 = vmul.f32 %v4250, %v4252
  %v4254 = vadd.f32 %v4250, %v4253
  %vm4255 = vweird.f32 %v4144
  %vm4256 = vweird.f32 %v4250
  %vm4257 = vmor %vm4255, %vm4256
  %v4258 = vsel %vm4257, %v4250, %v4254
  %v4259 = vand.u32 2147483647, %v4144
  %vm4260 = vcmp.eq.f32.partialorder %v4259, 8.507059e+37
  %v4261 = vand.u32 %v4144, 2147483648
  %v4262 = vor.u32 1.1754944e-38, %v4261
  %v4263 = vsel %vm4260, %v4262, %v4258
  %v4264 = vmul.f32 1.0, %v4263
  %v4265 = vxor.u32 %v4082, 2147483648
  %v4266 = vxor.u32 %v4086, 2147483648
  %v4267 = vxor.u32 %v4090, 2147483648
  %v4268 = vxor.u32 %v4094, 2147483648
  %v4269 = vxor.u32 %v4098, 2147483648
  %v4270 = vxor.u32 %v4102, 2147483648
  %v4271 = vxor.u32 %v4106, 2147483648
  %v4272 = vxor.u32 %v4110, 2147483648
  %v4273 = vmul.f32 %v4265, 1.442695
  %v4274 = vpow.pop %v4273
  %v4275 = vmul.f32 %v4266, 1.442695
  %v4276 = vpow.pop %v4275
  %v4277 = vmul.f32 %v4267, 1.442695
  %v4278 = vpow.pop %v4277
  %v4279 = vmul.f32 %v4268, 1.442695
  %v4280 = vpow.pop %v4279
  %v4281 = vmul.f32 %v4269, 1.442695
  %v4282 = vpow.pop %v4281
  %v4283 = vmul.f32 %v4270, 1.442695
  %v4284 = vpow.pop %v4283
  %v4285 = vmul.f32 %v4271, 1.442695
  %v4286 = vpow.pop %v4285
  %v4287 = vmul.f32 %v4272, 1.442695
  %v4288 = vpow.pop %v4287
  %v4289 = vadd.f32 %v4274, 1.0
  %v4290 = vadd.f32 %v4276, 1.0
  %v4291 = vadd.f32 %v4278, 1.0
  %v4292 = vadd.f32 %v4280, 1.0
  %v4293 = vadd.f32 %v4282, 1.0
  %v4294 = vadd.f32 %v4284, 1.0
  %v4295 = vadd.f32 %v4286, 1.0
  %v4296 = vadd.f32 %v4288, 1.0
  %v4297 = vrcp.pop %v4289
  %v4298 = vmul.f32 %v4289, %v4297
  %v4299 = vsub.f32 1.0, %v4298
  %v4300 = vmul.f32 %v4297, %v4299
  %v4301 = vadd.f32 %v4297, %v4300
  %vm4302 = vweird.f32 %v4289
  %vm4303 = vweird.f32 %v4297
  %vm4304 = vmor %vm4302, %vm4303
  %v4305 = vsel %vm4304, %v4297, %v4301
  %v4306 = vand.u32 2147483647, %v4289
  %vm4307 = vcmp.eq.f32.partialorder %v4306, 8.507059e+37
  %v4308 = vand.u32 %v4289, 2147483648
  %v4309 = vor.u32 1.1754944e-38, %v4308
  %v4310 = vsel %vm4307, %v4309, %v4305
  %v4311 = vmul.f32 1.0, %v4310
  %v4312 = vrcp.pop %v4290
  %v4313 = vmul.f32 %v4290, %v4312
  %v4314 = vsub.f32 1.0, %v4313
  %v4315 = vmul.f32 %v4312, %v4314
  %v4316 = vadd.f32 %v4312, %v4315
  %vm4317 = vweird.f32 %v4290
  %vm4318 = vweird.f32 %v4312
  %vm4319 = vmor %vm4317, %vm4318
  %v4320 = vsel %vm4319, %v4312, %v4316
  %v4321 = vand.u32 2147483647, %v4290
  %vm4322 = vcmp.eq.f32.partialorder %v4321, 8.507059e+37
  %v4323 = vand.u32 %v4290, 2147483648
  %v4324 = vor.u32 1.1754944e-38, %v4323
  %v4325 = vsel %vm4322, %v4324, %v4320
  %v4326 = vmul.f32 1.0, %v4325
  %v4327 = vrcp.pop %v4291
  %v4328 = vmul.f32 %v4291, %v4327
  %v4329 = vsub.f32 1.0, %v4328
  %v4330 = vmul.f32 %v4327, %v4329
  %v4331 = vadd.f32 %v4327, %v4330
  %vm4332 = vweird.f32 %v4291
  %vm4333 = vweird.f32 %v4327
  %vm4334 = vmor %vm4332, %vm4333
  %v4335 = vsel %vm4334, %v4327, %v4331
  %v4336 = vand.u32 2147483647, %v4291
  %vm4337 = vcmp.eq.f32.partialorder %v4336, 8.507059e+37
  %v4338 = vand.u32 %v4291, 2147483648
  %v4339 = vor.u32 1.1754944e-38, %v4338
  %v4340 = vsel %vm4337, %v4339, %v4335
  %v4341 = vmul.f32 1.0, %v4340
  %v4342 = vrcp.pop %v4292
  %v4343 = vmul.f32 %v4292, %v4342
  %v4344 = vsub.f32 1.0, %v4343
  %v4345 = vmul.f32 %v4342, %v4344
  %v4346 = vadd.f32 %v4342, %v4345
  %vm4347 = vweird.f32 %v4292
  %vm4348 = vweird.f32 %v4342
  %vm4349 = vmor %vm4347, %vm4348
  %v4350 = vsel %vm4349, %v4342, %v4346
  %v4351 = vand.u32 2147483647, %v4292
  %vm4352 = vcmp.eq.f32.partialorder %v4351, 8.507059e+37
  %v4353 = vand.u32 %v4292, 2147483648
  %v4354 = vor.u32 1.1754944e-38, %v4353
  %v4355 = vsel %vm4352, %v4354, %v4350
  %v4356 = vmul.f32 1.0, %v4355
  %v4357 = vrcp.pop %v4293
  %v4358 = vmul.f32 %v4293, %v4357
  %v4359 = vsub.f32 1.0, %v4358
  %v4360 = vmul.f32 %v4357, %v4359
  %v4361 = vadd.f32 %v4357, %v4360
  %vm4362 = vweird.f32 %v4293
  %vm4363 = vweird.f32 %v4357
  %vm4364 = vmor %vm4362, %vm4363
  %v4365 = vsel %vm4364, %v4357, %v4361
  %v4366 = vand.u32 2147483647, %v4293
  %vm4367 = vcmp.eq.f32.partialorder %v4366, 8.507059e+37
  %v4368 = vand.u32 %v4293, 2147483648
  %v4369 = vor.u32 1.1754944e-38, %v4368
  %v4370 = vsel %vm4367, %v4369, %v4365
  %v4371 = vmul.f32 1.0, %v4370
  %v4372 = vrcp.pop %v4294
  %v4373 = vmul.f32 %v4294, %v4372
  %v4374 = vsub.f32 1.0, %v4373
  %v4375 = vmul.f32 %v4372, %v4374
  %v4376 = vadd.f32 %v4372, %v4375
  %vm4377 = vweird.f32 %v4294
  %vm4378 = vweird.f32 %v4372
  %vm4379 = vmor %vm4377, %vm4378
  %v4380 = vsel %vm4379, %v4372, %v4376
  %v4381 = vand.u32 2147483647, %v4294
  %vm4382 = vcmp.eq.f32.partialorder %v4381, 8.507059e+37
  %v4383 = vand.u32 %v4294, 2147483648
  %v4384 = vor.u32 1.1754944e-38, %v4383
  %v4385 = vsel %vm4382, %v4384, %v4380
  %v4386 = vmul.f32 1.0, %v4385
  %v4387 = vrcp.pop %v4295
  %v4388 = vmul.f32 %v4295, %v4387
  %v4389 = vsub.f32 1.0, %v4388
  %v4390 = vmul.f32 %v4387, %v4389
  %v4391 = vadd.f32 %v4387, %v4390
  %vm4392 = vweird.f32 %v4295
  %vm4393 = vweird.f32 %v4387
  %vm4394 = vmor %vm4392, %vm4393
  %v4395 = vsel %vm4394, %v4387, %v4391
  %v4396 = vand.u32 2147483647, %v4295
  %vm4397 = vcmp.eq.f32.partialorder %v4396, 8.507059e+37
  %v4398 = vand.u32 %v4295, 2147483648
  %v4399 = vor.u32 1.1754944e-38, %v4398
  %v4400 = vsel %vm4397, %v4399, %v4395
  %v4401 = vmul.f32 1.0, %v4400
  %v4402 = vrcp.pop %v4296
  %v4403 = vmul.f32 %v4296, %v4402
  %v4404 = vsub.f32 1.0, %v4403
  %v4405 = vmul.f32 %v4402, %v4404
  %v4406 = vadd.f32 %v4402, %v4405
  %vm4407 = vweird.f32 %v4296
  %vm4408 = vweird.f32 %v4402
  %vm4409 = vmor %vm4407, %vm4408
  %v4410 = vsel %vm4409, %v4402, %v4406
  %v4411 = vand.u32 2147483647, %v4296
  %vm4412 = vcmp.eq.f32.partialorder %v4411, 8.507059e+37
  %v4413 = vand.u32 %v4296, 2147483648
  %v4414 = vor.u32 1.1754944e-38, %v4413
  %v4415 = vsel %vm4412, %v4414, %v4410
  %v4416 = vmul.f32 1.0, %v4415
  %v4417 = vtanh.pop %v4083
  %v4418 = vtanh.pop %v4087
  %v4419 = vtanh.pop %v4091
  %v4420 = vtanh.pop %v4095
  %v4421 = vtanh.pop %v4099
  %v4422 = vtanh.pop %v4103
  %v4423 = vtanh.pop %v4107
  %v4424 = vtanh.pop %v4111
  %v4425 = vxor.u32 %v4084, 2147483648
  %v4426 = vxor.u32 %v4088, 2147483648
  %v4427 = vxor.u32 %v4092, 2147483648
  %v4428 = vxor.u32 %v4096, 2147483648
  %v4429 = vxor.u32 %v4100, 2147483648
  %v4430 = vxor.u32 %v4104, 2147483648
  %v4431 = vxor.u32 %v4108, 2147483648
  %v4432 = vxor.u32 %v4112, 2147483648
  %v4433 = vmul.f32 %v4425, 1.442695
  %v4434 = vpow.pop %v4433
  %v4435 = vmul.f32 %v4426, 1.442695
  %v4436 = vpow.pop %v4435
  %v4437 = vmul.f32 %v4427, 1.442695
  %v4438 = vpow.pop %v4437
  %v4439 = vmul.f32 %v4428, 1.442695
  %v4440 = vpow.pop %v4439
  %v4441 = vmul.f32 %v4429, 1.442695
  %v4442 = vpow.pop %v4441
  %v4443 = vmul.f32 %v4430, 1.442695
  %v4444 = vpow.pop %v4443
  %v4445 = vmul.f32 %v4431, 1.442695
  %v4446 = vpow.pop %v4445
  %v4447 = vmul.f32 %v4432, 1.442695
  %v4448 = vpow.pop %v4447
  %v4449 = vadd.f32 %v4434, 1.0
  %v4450 = vadd.f32 %v4436, 1.0
  %v4451 = vadd.f32 %v4438, 1.0
  %v4452 = vadd.f32 %v4440, 1.0
  %v4453 = vadd.f32 %v4442, 1.0
  %v4454 = vadd.f32 %v4444, 1.0
  %v4455 = vadd.f32 %v4446, 1.0
  %v4456 = vadd.f32 %v4448, 1.0
  %v4457 = vrcp.pop %v4449
  %v4458 = vmul.f32 %v4449, %v4457
  %v4459 = vsub.f32 1.0, %v4458
  %v4460 = vmul.f32 %v4457, %v4459
  %v4461 = vadd.f32 %v4457, %v4460
  %vm4462 = vweird.f32 %v4449
  %vm4463 = vweird.f32 %v4457
  %vm4464 = vmor %vm4462, %vm4463
  %v4465 = vsel %vm4464, %v4457, %v4461
  %v4466 = vand.u32 2147483647, %v4449
  %vm4467 = vcmp.eq.f32.partialorder %v4466, 8.507059e+37
  %v4468 = vand.u32 %v4449, 2147483648
  %v4469 = vor.u32 1.1754944e-38, %v4468
  %v4470 = vsel %vm4467, %v4469, %v4465
  %v4471 = vmul.f32 1.0, %v4470
  %v4472 = vrcp.pop %v4450
  %v4473 = vmul.f32 %v4450, %v4472
  %v4474 = vsub.f32 1.0, %v4473
  %v4475 = vmul.f32 %v4472, %v4474
  %v4476 = vadd.f32 %v4472, %v4475
  %vm4477 = vweird.f32 %v4450
  %vm4478 = vweird.f32 %v4472
  %vm4479 = vmor %vm4477, %vm4478
  %v4480 = vsel %vm4479, %v4472, %v4476
  %v4481 = vand.u32 2147483647, %v4450
  %vm4482 = vcmp.eq.f32.partialorder %v4481, 8.507059e+37
  %v4483 = vand.u32 %v4450, 2147483648
  %v4484 = vor.u32 1.1754944e-38, %v4483
  %v4485 = vsel %vm4482, %v4484, %v4480
  %v4486 = vmul.f32 1.0, %v4485
  %v4487 = vrcp.pop %v4451
  %v4488 = vmul.f32 %v4451, %v4487
  %v4489 = vsub.f32 1.0, %v4488
  %v4490 = vmul.f32 %v4487, %v4489
  %v4491 = vadd.f32 %v4487, %v4490
  %vm4492 = vweird.f32 %v4451
  %vm4493 = vweird.f32 %v4487
  %vm4494 = vmor %vm4492, %vm4493
  %v4495 = vsel %vm4494, %v4487, %v4491
  %v4496 = vand.u32 2147483647, %v4451
  %vm4497 = vcmp.eq.f32.partialorder %v4496, 8.507059e+37
  %v4498 = vand.u32 %v4451, 2147483648
  %v4499 = vor.u32 1.1754944e-38, %v4498
  %v4500 = vsel %vm4497, %v4499, %v4495
  %v4501 = vmul.f32 1.0, %v4500
  %v4502 = vrcp.pop %v4452
  %v4503 = vmul.f32 %v4452, %v4502
  %v4504 = vsub.f32 1.0, %v4503
  %v4505 = vmul.f32 %v4502, %v4504
  %v4506 = vadd.f32 %v4502, %v4505
  %vm4507 = vweird.f32 %v4452
  %vm4508 = vweird.f32 %v4502
  %vm4509 = vmor %vm4507, %vm4508
  %v4510 = vsel %vm4509, %v4502, %v4506
  %v4511 = vand.u32 2147483647, %v4452
  %vm4512 = vcmp.eq.f32.partialorder %v4511, 8.507059e+37
  %v4513 = vand.u32 %v4452, 2147483648
  %v4514 = vor.u32 1.1754944e-38, %v4513
  %v4515 = vsel %vm4512, %v4514, %v4510
  %v4516 = vmul.f32 1.0, %v4515
  %v4517 = vrcp.pop %v4453
  %v4518 = vmul.f32 %v4453, %v4517
  %v4519 = vsub.f32 1.0, %v4518
  %v4520 = vmul.f32 %v4517, %v4519
  %v4521 = vadd.f32 %v4517, %v4520
  %vm4522 = vweird.f32 %v4453
  %vm4523 = vweird.f32 %v4517
  %vm4524 = vmor %vm4522, %vm4523
  %v4525 = vsel %vm4524, %v4517, %v4521
  %v4526 = vand.u32 2147483647, %v4453
  %vm4527 = vcmp.eq.f32.partialorder %v4526, 8.507059e+37
  %v4528 = vand.u32 %v4453, 2147483648
  %v4529 = vor.u32 1.1754944e-38, %v4528
  %v4530 = vsel %vm4527, %v4529, %v4525
  %v4531 = vmul.f32 1.0, %v4530
  %v4532 = vrcp.pop %v4454
  %v4533 = vmul.f32 %v4454, %v4532
  %v4534 = vsub.f32 1.0, %v4533
  %v4535 = vmul.f32 %v4532, %v4534
  %v4536 = vadd.f32 %v4532, %v4535
  %vm4537 = vweird.f32 %v4454
  %vm4538 = vweird.f32 %v4532
  %vm4539 = vmor %vm4537, %vm4538
  %v4540 = vsel %vm4539, %v4532, %v4536
  %v4541 = vand.u32 2147483647, %v4454
  %vm4542 = vcmp.eq.f32.partialorder %v4541, 8.507059e+37
  %v4543 = vand.u32 %v4454, 2147483648
  %v4544 = vor.u32 1.1754944e-38, %v4543
  %v4545 = vsel %vm4542, %v4544, %v4540
  %v4546 = vmul.f32 1.0, %v4545
  %v4547 = vrcp.pop %v4455
  %v4548 = vmul.f32 %v4455, %v4547
  %v4549 = vsub.f32 1.0, %v4548
  %v4550 = vmul.f32 %v4547, %v4549
  %v4551 = vadd.f32 %v4547, %v4550
  %vm4552 = vweird.f32 %v4455
  %vm4553 = vweird.f32 %v4547
  %vm4554 = vmor %vm4552, %vm4553
  %v4555 = vsel %vm4554, %v4547, %v4551
  %v4556 = vand.u32 2147483647, %v4455
  %vm4557 = vcmp.eq.f32.partialorder %v4556, 8.507059e+37
  %v4558 = vand.u32 %v4455, 2147483648
  %v4559 = vor.u32 1.1754944e-38, %v4558
  %v4560 = vsel %vm4557, %v4559, %v4555
  %v4561 = vmul.f32 1.0, %v4560
  %v4562 = vrcp.pop %v4456
  %v4563 = vmul.f32 %v4456, %v4562
  %v4564 = vsub.f32 1.0, %v4563
  %v4565 = vmul.f32 %v4562, %v4564
  %v4566 = vadd.f32 %v4562, %v4565
  %vm4567 = vweird.f32 %v4456
  %vm4568 = vweird.f32 %v4562
  %vm4569 = vmor %vm4567, %vm4568
  %v4570 = vsel %vm4569, %v4562, %v4566
  %v4571 = vand.u32 2147483647, %v4456
  %vm4572 = vcmp.eq.f32.partialorder %v4571, 8.507059e+37
  %v4573 = vand.u32 %v4456, 2147483648
  %v4574 = vor.u32 1.1754944e-38, %v4573
  %v4575 = vsel %vm4572, %v4574, %v4570
  %v4576 = vmul.f32 1.0, %v4575
  %v4585 = vrot.slane %v3890, 7
  %v4586 = vrot.slane %v3891, 7
  %v4587 = vrot.slane %v3892, 7
  %v4588 = vrot.slane %v3893, 7
  %v4589 = vrot.slane %v3894, 7
  %v4590 = vrot.slane %v3895, 7
  %v4591 = vrot.slane %v3896, 7
  %v4592 = vrot.slane %v3897, 7
  %v4601 = vmul.f32 %v4311, %v4585
  %v4602 = vmul.f32 %v4326, %v4586
  %v4603 = vmul.f32 %v4341, %v4587
  %v4604 = vmul.f32 %v4356, %v4588
  %v4605 = vmul.f32 %v4371, %v4589
  %v4606 = vmul.f32 %v4386, %v4590
  %v4607 = vmul.f32 %v4401, %v4591
  %v4608 = vmul.f32 %v4416, %v4592
  %v4609 = vmul.f32 %v4159, %v4417
  %v4610 = vmul.f32 %v4174, %v4418
  %v4611 = vmul.f32 %v4189, %v4419
  %v4612 = vmul.f32 %v4204, %v4420
  %v4613 = vmul.f32 %v4219, %v4421
  %v4614 = vmul.f32 %v4234, %v4422
  %v4615 = vmul.f32 %v4249, %v4423
  %v4616 = vmul.f32 %v4264, %v4424
  %v4617 = vadd.f32 %v4601, %v4609
  %v4618 = vadd.f32 %v4602, %v4610
  %v4619 = vadd.f32 %v4603, %v4611
  %v4620 = vadd.f32 %v4604, %v4612
  %v4621 = vadd.f32 %v4605, %v4613
  %v4622 = vadd.f32 %v4606, %v4614
  %v4623 = vadd.f32 %v4607, %v4615
  %v4624 = vadd.f32 %v4608, %v4616
  %v4625 = vtanh.pop %v4617
  %v4626 = vtanh.pop %v4618
  %v4627 = vtanh.pop %v4619
  %v4628 = vtanh.pop %v4620
  %v4629 = vtanh.pop %v4621
  %v4630 = vtanh.pop %v4622
  %v4631 = vtanh.pop %v4623
  %v4632 = vtanh.pop %v4624
  %v4633 = vmul.f32 %v4471, %v4625
  %v4634 = vmul.f32 %v4486, %v4626
  %v4635 = vmul.f32 %v4501, %v4627
  %v4636 = vmul.f32 %v4516, %v4628
  %v4637 = vmul.f32 %v4531, %v4629
  %v4638 = vmul.f32 %v4546, %v4630
  %v4639 = vmul.f32 %v4561, %v4631
  %v4640 = vmul.f32 %v4576, %v4632
  %v4649 = vrot.slane %v4633, 5
  %v4650 = vrot.slane %v4634, 4
  %v4651 = vsel %vm1008, %v4650, %v4649
  %v4652 = vrot.slane %v4635, 3
  %v4653 = vsel %vm1011, %v4652, %v4651
  %v4654 = vrot.slane %v4636, 2
  %v4655 = vsel %vm1014, %v4654, %v4653
  %v4656 = vrot.slane %v4637, 1
  %v4657 = vsel %vm1017, %v4656, %v4655
  %v4658 = vsel %vm1020, %v4638, %v4657
  %v4659 = vrot.slane %v4639, 7
  %v4660 = vsel %vm1023, %v4659, %v4658
  %v4661 = vrot.slane %v4640, 6
  %v4662 = vsel %vm1026, %v4661, %v4660
  %4664 = vmatpush.msra.mxu0 %v315
  %4665 = vmatpush.msra.mxu0 %v311
  %4666 = vmatpush.msra.mxu0 %v307
  %4667 = vmatpush.msra.mxu0 %v303
  %4668 = vmatpush.msra.mxu0 %v299
  %4669 = vmatpush.msra.mxu0 %v295
  %4670 = vmatpush.msra.mxu0 %v291
  %4671 = vmatpush.msra.mxu0 %v287
  %4672 = vmatpush.msra.mxu0 %v283
  %4673 = vmatpush.msra.mxu0 %v279
  %4674 = vmatpush.msra.mxu0 %v275
  %4675 = vmatpush.msra.mxu0 %v271
  %4676 = vmatpush.msra.mxu0 %v267
  %4677 = vmatpush.msra.mxu0 %v263
  %4678 = vmatpush.msra.mxu0 %v259
  %4679 = vmatpush.msra.mxu0 %v255
  %4680 = vmatmul.f32.gmra.mxu0 %v4662
  %v4681 = vpop.f32.mrf.mxu0
  %v4682 = vadd.f32 0.0, %v4681
  %4683 = vdwg.mxu0
  %4684 = vmatpush.msra.mxu0 %v316
  %4685 = vmatpush.msra.mxu0 %v312
  %4686 = vmatpush.msra.mxu0 %v308
  %4687 = vmatpush.msra.mxu0 %v304
  %4688 = vmatpush.msra.mxu0 %v300
  %4689 = vmatpush.msra.mxu0 %v296
  %4690 = vmatpush.msra.mxu0 %v292
  %4691 = vmatpush.msra.mxu0 %v288
  %4692 = vmatpush.msra.mxu0 %v284
  %4693 = vmatpush.msra.mxu0 %v280
  %4694 = vmatpush.msra.mxu0 %v276
  %4695 = vmatpush.msra.mxu0 %v272
  %4696 = vmatpush.msra.mxu0 %v268
  %4697 = vmatpush.msra.mxu0 %v264
  %4698 = vmatpush.msra.mxu0 %v260
  %4699 = vmatpush.msra.mxu0 %v256
  %4700 = vmatmul.f32.gmra.mxu0 %v4662
  %v4701 = vpop.f32.mrf.mxu0
  %v4702 = vadd.f32 0.0, %v4701
  %4703 = vdwg.mxu0
  %4704 = vmatpush.msra.mxu0 %v317
  %4705 = vmatpush.msra.mxu0 %v313
  %4706 = vmatpush.msra.mxu0 %v309
  %4707 = vmatpush.msra.mxu0 %v305
  %4708 = vmatpush.msra.mxu0 %v301
  %4709 = vmatpush.msra.mxu0 %v297
  %4710 = vmatpush.msra.mxu0 %v293
  %4711 = vmatpush.msra.mxu0 %v289
  %4712 = vmatpush.msra.mxu0 %v285
  %4713 = vmatpush.msra.mxu0 %v281
  %4714 = vmatpush.msra.mxu0 %v277
  %4715 = vmatpush.msra.mxu0 %v273
  %4716 = vmatpush.msra.mxu0 %v269
  %4717 = vmatpush.msra.mxu0 %v265
  %4718 = vmatpush.msra.mxu0 %v261
  %4719 = vmatpush.msra.mxu0 %v257
  %4720 = vmatmul.f32.gmra.mxu0 %v4662
  %v4721 = vpop.f32.mrf.mxu0
  %v4722 = vadd.f32 0.0, %v4721
  %4723 = vdwg.mxu0
  %4724 = vmatpush.msra.mxu0 %v318
  %4725 = vmatpush.msra.mxu0 %v314
  %4726 = vmatpush.msra.mxu0 %v310
  %4727 = vmatpush.msra.mxu0 %v306
  %4728 = vmatpush.msra.mxu0 %v302
  %4729 = vmatpush.msra.mxu0 %v298
  %4730 = vmatpush.msra.mxu0 %v294
  %4731 = vmatpush.msra.mxu0 %v290
  %4732 = vmatpush.msra.mxu0 %v286
  %4733 = vmatpush.msra.mxu0 %v282
  %4734 = vmatpush.msra.mxu0 %v278
  %4735 = vmatpush.msra.mxu0 %v274
  %4736 = vmatpush.msra.mxu0 %v270
  %4737 = vmatpush.msra.mxu0 %v266
  %4738 = vmatpush.msra.mxu0 %v262
  %4739 = vmatpush.msra.mxu0 %v258
  %4740 = vmatmul.f32.gmra.mxu0 %v4662
  %v4741 = vpop.f32.mrf.mxu0
  %v4742 = vadd.f32 0.0, %v4741
  %4743 = vdwg.mxu0
  %v4748 = vrot.slane %v4682, 2
  %v4749 = vrot.slane %v4702, 2
  %v4750 = vrot.slane %v4722, 2
  %v4751 = vrot.slane %v4742, 2
  %v4752 = vrot.slane %v4682, 3
  %v4753 = vrot.slane %v4702, 3
  %v4754 = vrot.slane %v4722, 3
  %v4755 = vrot.slane %v4742, 3
  %v4756 = vrot.slane %v4682, 4
  %v4757 = vrot.slane %v4702, 4
  %v4758 = vrot.slane %v4722, 4
  %v4759 = vrot.slane %v4742, 4
  %v4760 = vrot.slane %v4682, 5
  %v4761 = vrot.slane %v4702, 5
  %v4762 = vrot.slane %v4722, 5
  %v4763 = vrot.slane %v4742, 5
  %v4764 = vrot.slane %v4682, 6
  %v4765 = vrot.slane %v4702, 6
  %v4766 = vrot.slane %v4722, 6
  %v4767 = vrot.slane %v4742, 6
  %v4768 = vrot.slane %v4682, 7
  %v4769 = vrot.slane %v4702, 7
  %v4770 = vrot.slane %v4722, 7
  %v4771 = vrot.slane %v4742, 7
  %v4772 = vrot.slane %v4682, 1
  %v4773 = vrot.slane %v4702, 1
  %v4774 = vrot.slane %v4722, 1
  %v4775 = vrot.slane %v4742, 1
  %v4808 = vadd.f32 %v109, %v4748
  %v4809 = vadd.f32 %v150, %v4749
  %v4810 = vadd.f32 %v191, %v4750
  %v4811 = vadd.f32 %v232, %v4751
  %v4812 = vadd.f32 %v112, %v4752
  %v4813 = vadd.f32 %v153, %v4753
  %v4814 = vadd.f32 %v194, %v4754
  %v4815 = vadd.f32 %v235, %v4755
  %v4816 = vadd.f32 %v115, %v4756
  %v4817 = vadd.f32 %v156, %v4757
  %v4818 = vadd.f32 %v197, %v4758
  %v4819 = vadd.f32 %v238, %v4759
  %v4820 = vadd.f32 %v118, %v4760
  %v4821 = vadd.f32 %v159, %v4761
  %v4822 = vadd.f32 %v200, %v4762
  %v4823 = vadd.f32 %v241, %v4763
  %v4824 = vadd.f32 %v121, %v4764
  %v4825 = vadd.f32 %v162, %v4765
  %v4826 = vadd.f32 %v203, %v4766
  %v4827 = vadd.f32 %v244, %v4767
  %v4828 = vadd.f32 %v124, %v4768
  %v4829 = vadd.f32 %v165, %v4769
  %v4830 = vadd.f32 %v206, %v4770
  %v4831 = vadd.f32 %v247, %v4771
  %v4832 = vadd.f32 %v127, %v4682
  %v4833 = vadd.f32 %v168, %v4702
  %v4834 = vadd.f32 %v209, %v4722
  %v4835 = vadd.f32 %v250, %v4742
  %v4836 = vadd.f32 %v130, %v4772
  %v4837 = vadd.f32 %v171, %v4773
  %v4838 = vadd.f32 %v212, %v4774
  %v4839 = vadd.f32 %v253, %v4775
  %v4840 = vxor.u32 %v4808, 2147483648
  %v4841 = vxor.u32 %v4812, 2147483648
  %v4842 = vxor.u32 %v4816, 2147483648
  %v4843 = vxor.u32 %v4820, 2147483648
  %v4844 = vxor.u32 %v4824, 2147483648
  %v4845 = vxor.u32 %v4828, 2147483648
  %v4846 = vxor.u32 %v4832, 2147483648
  %v4847 = vxor.u32 %v4836, 2147483648
  %v4848 = vmul.f32 %v4840, 1.442695
  %v4849 = vpow.pop %v4848
  %v4850 = vmul.f32 %v4841, 1.442695
  %v4851 = vpow.pop %v4850
  %v4852 = vmul.f32 %v4842, 1.442695
  %v4853 = vpow.pop %v4852
  %v4854 = vmul.f32 %v4843, 1.442695
  %v4855 = vpow.pop %v4854
  %v4856 = vmul.f32 %v4844, 1.442695
  %v4857 = vpow.pop %v4856
  %v4858 = vmul.f32 %v4845, 1.442695
  %v4859 = vpow.pop %v4858
  %v4860 = vmul.f32 %v4846, 1.442695
  %v4861 = vpow.pop %v4860
  %v4862 = vmul.f32 %v4847, 1.442695
  %v4863 = vpow.pop %v4862
  %v4864 = vadd.f32 %v4849, 1.0
  %v4865 = vadd.f32 %v4851, 1.0
  %v4866 = vadd.f32 %v4853, 1.0
  %v4867 = vadd.f32 %v4855, 1.0
  %v4868 = vadd.f32 %v4857, 1.0
  %v4869 = vadd.f32 %v4859, 1.0
  %v4870 = vadd.f32 %v4861, 1.0
  %v4871 = vadd.f32 %v4863, 1.0
  %v4872 = vrcp.pop %v4864
  %v4873 = vmul.f32 %v4864, %v4872
  %v4874 = vsub.f32 1.0, %v4873
  %v4875 = vmul.f32 %v4872, %v4874
  %v4876 = vadd.f32 %v4872, %v4875
  %vm4877 = vweird.f32 %v4864
  %vm4878 = vweird.f32 %v4872
  %vm4879 = vmor %vm4877, %vm4878
  %v4880 = vsel %vm4879, %v4872, %v4876
  %v4881 = vand.u32 2147483647, %v4864
  %vm4882 = vcmp.eq.f32.partialorder %v4881, 8.507059e+37
  %v4883 = vand.u32 %v4864, 2147483648
  %v4884 = vor.u32 1.1754944e-38, %v4883
  %v4885 = vsel %vm4882, %v4884, %v4880
  %v4886 = vmul.f32 1.0, %v4885
  %v4887 = vrcp.pop %v4865
  %v4888 = vmul.f32 %v4865, %v4887
  %v4889 = vsub.f32 1.0, %v4888
  %v4890 = vmul.f32 %v4887, %v4889
  %v4891 = vadd.f32 %v4887, %v4890
  %vm4892 = vweird.f32 %v4865
  %vm4893 = vweird.f32 %v4887
  %vm4894 = vmor %vm4892, %vm4893
  %v4895 = vsel %vm4894, %v4887, %v4891
  %v4896 = vand.u32 2147483647, %v4865
  %vm4897 = vcmp.eq.f32.partialorder %v4896, 8.507059e+37
  %v4898 = vand.u32 %v4865, 2147483648
  %v4899 = vor.u32 1.1754944e-38, %v4898
  %v4900 = vsel %vm4897, %v4899, %v4895
  %v4901 = vmul.f32 1.0, %v4900
  %v4902 = vrcp.pop %v4866
  %v4903 = vmul.f32 %v4866, %v4902
  %v4904 = vsub.f32 1.0, %v4903
  %v4905 = vmul.f32 %v4902, %v4904
  %v4906 = vadd.f32 %v4902, %v4905
  %vm4907 = vweird.f32 %v4866
  %vm4908 = vweird.f32 %v4902
  %vm4909 = vmor %vm4907, %vm4908
  %v4910 = vsel %vm4909, %v4902, %v4906
  %v4911 = vand.u32 2147483647, %v4866
  %vm4912 = vcmp.eq.f32.partialorder %v4911, 8.507059e+37
  %v4913 = vand.u32 %v4866, 2147483648
  %v4914 = vor.u32 1.1754944e-38, %v4913
  %v4915 = vsel %vm4912, %v4914, %v4910
  %v4916 = vmul.f32 1.0, %v4915
  %v4917 = vrcp.pop %v4867
  %v4918 = vmul.f32 %v4867, %v4917
  %v4919 = vsub.f32 1.0, %v4918
  %v4920 = vmul.f32 %v4917, %v4919
  %v4921 = vadd.f32 %v4917, %v4920
  %vm4922 = vweird.f32 %v4867
  %vm4923 = vweird.f32 %v4917
  %vm4924 = vmor %vm4922, %vm4923
  %v4925 = vsel %vm4924, %v4917, %v4921
  %v4926 = vand.u32 2147483647, %v4867
  %vm4927 = vcmp.eq.f32.partialorder %v4926, 8.507059e+37
  %v4928 = vand.u32 %v4867, 2147483648
  %v4929 = vor.u32 1.1754944e-38, %v4928
  %v4930 = vsel %vm4927, %v4929, %v4925
  %v4931 = vmul.f32 1.0, %v4930
  %v4932 = vrcp.pop %v4868
  %v4933 = vmul.f32 %v4868, %v4932
  %v4934 = vsub.f32 1.0, %v4933
  %v4935 = vmul.f32 %v4932, %v4934
  %v4936 = vadd.f32 %v4932, %v4935
  %vm4937 = vweird.f32 %v4868
  %vm4938 = vweird.f32 %v4932
  %vm4939 = vmor %vm4937, %vm4938
  %v4940 = vsel %vm4939, %v4932, %v4936
  %v4941 = vand.u32 2147483647, %v4868
  %vm4942 = vcmp.eq.f32.partialorder %v4941, 8.507059e+37
  %v4943 = vand.u32 %v4868, 2147483648
  %v4944 = vor.u32 1.1754944e-38, %v4943
  %v4945 = vsel %vm4942, %v4944, %v4940
  %v4946 = vmul.f32 1.0, %v4945
  %v4947 = vrcp.pop %v4869
  %v4948 = vmul.f32 %v4869, %v4947
  %v4949 = vsub.f32 1.0, %v4948
  %v4950 = vmul.f32 %v4947, %v4949
  %v4951 = vadd.f32 %v4947, %v4950
  %vm4952 = vweird.f32 %v4869
  %vm4953 = vweird.f32 %v4947
  %vm4954 = vmor %vm4952, %vm4953
  %v4955 = vsel %vm4954, %v4947, %v4951
  %v4956 = vand.u32 2147483647, %v4869
  %vm4957 = vcmp.eq.f32.partialorder %v4956, 8.507059e+37
  %v4958 = vand.u32 %v4869, 2147483648
  %v4959 = vor.u32 1.1754944e-38, %v4958
  %v4960 = vsel %vm4957, %v4959, %v4955
  %v4961 = vmul.f32 1.0, %v4960
  %v4962 = vrcp.pop %v4870
  %v4963 = vmul.f32 %v4870, %v4962
  %v4964 = vsub.f32 1.0, %v4963
  %v4965 = vmul.f32 %v4962, %v4964
  %v4966 = vadd.f32 %v4962, %v4965
  %vm4967 = vweird.f32 %v4870
  %vm4968 = vweird.f32 %v4962
  %vm4969 = vmor %vm4967, %vm4968
  %v4970 = vsel %vm4969, %v4962, %v4966
  %v4971 = vand.u32 2147483647, %v4870
  %vm4972 = vcmp.eq.f32.partialorder %v4971, 8.507059e+37
  %v4973 = vand.u32 %v4870, 2147483648
  %v4974 = vor.u32 1.1754944e-38, %v4973
  %v4975 = vsel %vm4972, %v4974, %v4970
  %v4976 = vmul.f32 1.0, %v4975
  %v4977 = vrcp.pop %v4871
  %v4978 = vmul.f32 %v4871, %v4977
  %v4979 = vsub.f32 1.0, %v4978
  %v4980 = vmul.f32 %v4977, %v4979
  %v4981 = vadd.f32 %v4977, %v4980
  %vm4982 = vweird.f32 %v4871
  %vm4983 = vweird.f32 %v4977
  %vm4984 = vmor %vm4982, %vm4983
  %v4985 = vsel %vm4984, %v4977, %v4981
  %v4986 = vand.u32 2147483647, %v4871
  %vm4987 = vcmp.eq.f32.partialorder %v4986, 8.507059e+37
  %v4988 = vand.u32 %v4871, 2147483648
  %v4989 = vor.u32 1.1754944e-38, %v4988
  %v4990 = vsel %vm4987, %v4989, %v4985
  %v4991 = vmul.f32 1.0, %v4990
  %v4992 = vxor.u32 %v4809, 2147483648
  %v4993 = vxor.u32 %v4813, 2147483648
  %v4994 = vxor.u32 %v4817, 2147483648
  %v4995 = vxor.u32 %v4821, 2147483648
  %v4996 = vxor.u32 %v4825, 2147483648
  %v4997 = vxor.u32 %v4829, 2147483648
  %v4998 = vxor.u32 %v4833, 2147483648
  %v4999 = vxor.u32 %v4837, 2147483648
  %v5000 = vmul.f32 %v4992, 1.442695
  %v5001 = vpow.pop %v5000
  %v5002 = vmul.f32 %v4993, 1.442695
  %v5003 = vpow.pop %v5002
  %v5004 = vmul.f32 %v4994, 1.442695
  %v5005 = vpow.pop %v5004
  %v5006 = vmul.f32 %v4995, 1.442695
  %v5007 = vpow.pop %v5006
  %v5008 = vmul.f32 %v4996, 1.442695
  %v5009 = vpow.pop %v5008
  %v5010 = vmul.f32 %v4997, 1.442695
  %v5011 = vpow.pop %v5010
  %v5012 = vmul.f32 %v4998, 1.442695
  %v5013 = vpow.pop %v5012
  %v5014 = vmul.f32 %v4999, 1.442695
  %v5015 = vpow.pop %v5014
  %v5016 = vadd.f32 %v5001, 1.0
  %v5017 = vadd.f32 %v5003, 1.0
  %v5018 = vadd.f32 %v5005, 1.0
  %v5019 = vadd.f32 %v5007, 1.0
  %v5020 = vadd.f32 %v5009, 1.0
  %v5021 = vadd.f32 %v5011, 1.0
  %v5022 = vadd.f32 %v5013, 1.0
  %v5023 = vadd.f32 %v5015, 1.0
  %v5024 = vrcp.pop %v5016
  %v5025 = vmul.f32 %v5016, %v5024
  %v5026 = vsub.f32 1.0, %v5025
  %v5027 = vmul.f32 %v5024, %v5026
  %v5028 = vadd.f32 %v5024, %v5027
  %vm5029 = vweird.f32 %v5016
  %vm5030 = vweird.f32 %v5024
  %vm5031 = vmor %vm5029, %vm5030
  %v5032 = vsel %vm5031, %v5024, %v5028
  %v5033 = vand.u32 2147483647, %v5016
  %vm5034 = vcmp.eq.f32.partialorder %v5033, 8.507059e+37
  %v5035 = vand.u32 %v5016, 2147483648
  %v5036 = vor.u32 1.1754944e-38, %v5035
  %v5037 = vsel %vm5034, %v5036, %v5032
  %v5038 = vmul.f32 1.0, %v5037
  %v5039 = vrcp.pop %v5017
  %v5040 = vmul.f32 %v5017, %v5039
  %v5041 = vsub.f32 1.0, %v5040
  %v5042 = vmul.f32 %v5039, %v5041
  %v5043 = vadd.f32 %v5039, %v5042
  %vm5044 = vweird.f32 %v5017
  %vm5045 = vweird.f32 %v5039
  %vm5046 = vmor %vm5044, %vm5045
  %v5047 = vsel %vm5046, %v5039, %v5043
  %v5048 = vand.u32 2147483647, %v5017
  %vm5049 = vcmp.eq.f32.partialorder %v5048, 8.507059e+37
  %v5050 = vand.u32 %v5017, 2147483648
  %v5051 = vor.u32 1.1754944e-38, %v5050
  %v5052 = vsel %vm5049, %v5051, %v5047
  %v5053 = vmul.f32 1.0, %v5052
  %v5054 = vrcp.pop %v5018
  %v5055 = vmul.f32 %v5018, %v5054
  %v5056 = vsub.f32 1.0, %v5055
  %v5057 = vmul.f32 %v5054, %v5056
  %v5058 = vadd.f32 %v5054, %v5057
  %vm5059 = vweird.f32 %v5018
  %vm5060 = vweird.f32 %v5054
  %vm5061 = vmor %vm5059, %vm5060
  %v5062 = vsel %vm5061, %v5054, %v5058
  %v5063 = vand.u32 2147483647, %v5018
  %vm5064 = vcmp.eq.f32.partialorder %v5063, 8.507059e+37
  %v5065 = vand.u32 %v5018, 2147483648
  %v5066 = vor.u32 1.1754944e-38, %v5065
  %v5067 = vsel %vm5064, %v5066, %v5062
  %v5068 = vmul.f32 1.0, %v5067
  %v5069 = vrcp.pop %v5019
  %v5070 = vmul.f32 %v5019, %v5069
  %v5071 = vsub.f32 1.0, %v5070
  %v5072 = vmul.f32 %v5069, %v5071
  %v5073 = vadd.f32 %v5069, %v5072
  %vm5074 = vweird.f32 %v5019
  %vm5075 = vweird.f32 %v5069
  %vm5076 = vmor %vm5074, %vm5075
  %v5077 = vsel %vm5076, %v5069, %v5073
  %v5078 = vand.u32 2147483647, %v5019
  %vm5079 = vcmp.eq.f32.partialorder %v5078, 8.507059e+37
  %v5080 = vand.u32 %v5019, 2147483648
  %v5081 = vor.u32 1.1754944e-38, %v5080
  %v5082 = vsel %vm5079, %v5081, %v5077
  %v5083 = vmul.f32 1.0, %v5082
  %v5084 = vrcp.pop %v5020
  %v5085 = vmul.f32 %v5020, %v5084
  %v5086 = vsub.f32 1.0, %v5085
  %v5087 = vmul.f32 %v5084, %v5086
  %v5088 = vadd.f32 %v5084, %v5087
  %vm5089 = vweird.f32 %v5020
  %vm5090 = vweird.f32 %v5084
  %vm5091 = vmor %vm5089, %vm5090
  %v5092 = vsel %vm5091, %v5084, %v5088
  %v5093 = vand.u32 2147483647, %v5020
  %vm5094 = vcmp.eq.f32.partialorder %v5093, 8.507059e+37
  %v5095 = vand.u32 %v5020, 2147483648
  %v5096 = vor.u32 1.1754944e-38, %v5095
  %v5097 = vsel %vm5094, %v5096, %v5092
  %v5098 = vmul.f32 1.0, %v5097
  %v5099 = vrcp.pop %v5021
  %v5100 = vmul.f32 %v5021, %v5099
  %v5101 = vsub.f32 1.0, %v5100
  %v5102 = vmul.f32 %v5099, %v5101
  %v5103 = vadd.f32 %v5099, %v5102
  %vm5104 = vweird.f32 %v5021
  %vm5105 = vweird.f32 %v5099
  %vm5106 = vmor %vm5104, %vm5105
  %v5107 = vsel %vm5106, %v5099, %v5103
  %v5108 = vand.u32 2147483647, %v5021
  %vm5109 = vcmp.eq.f32.partialorder %v5108, 8.507059e+37
  %v5110 = vand.u32 %v5021, 2147483648
  %v5111 = vor.u32 1.1754944e-38, %v5110
  %v5112 = vsel %vm5109, %v5111, %v5107
  %v5113 = vmul.f32 1.0, %v5112
  %v5114 = vrcp.pop %v5022
  %v5115 = vmul.f32 %v5022, %v5114
  %v5116 = vsub.f32 1.0, %v5115
  %v5117 = vmul.f32 %v5114, %v5116
  %v5118 = vadd.f32 %v5114, %v5117
  %vm5119 = vweird.f32 %v5022
  %vm5120 = vweird.f32 %v5114
  %vm5121 = vmor %vm5119, %vm5120
  %v5122 = vsel %vm5121, %v5114, %v5118
  %v5123 = vand.u32 2147483647, %v5022
  %vm5124 = vcmp.eq.f32.partialorder %v5123, 8.507059e+37
  %v5125 = vand.u32 %v5022, 2147483648
  %v5126 = vor.u32 1.1754944e-38, %v5125
  %v5127 = vsel %vm5124, %v5126, %v5122
  %v5128 = vmul.f32 1.0, %v5127
  %v5129 = vrcp.pop %v5023
  %v5130 = vmul.f32 %v5023, %v5129
  %v5131 = vsub.f32 1.0, %v5130
  %v5132 = vmul.f32 %v5129, %v5131
  %v5133 = vadd.f32 %v5129, %v5132
  %vm5134 = vweird.f32 %v5023
  %vm5135 = vweird.f32 %v5129
  %vm5136 = vmor %vm5134, %vm5135
  %v5137 = vsel %vm5136, %v5129, %v5133
  %v5138 = vand.u32 2147483647, %v5023
  %vm5139 = vcmp.eq.f32.partialorder %v5138, 8.507059e+37
  %v5140 = vand.u32 %v5023, 2147483648
  %v5141 = vor.u32 1.1754944e-38, %v5140
  %v5142 = vsel %vm5139, %v5141, %v5137
  %v5143 = vmul.f32 1.0, %v5142
  %v5144 = vtanh.pop %v4810
  %v5145 = vtanh.pop %v4814
  %v5146 = vtanh.pop %v4818
  %v5147 = vtanh.pop %v4822
  %v5148 = vtanh.pop %v4826
  %v5149 = vtanh.pop %v4830
  %v5150 = vtanh.pop %v4834
  %v5151 = vtanh.pop %v4838
  %v5152 = vxor.u32 %v4811, 2147483648
  %v5153 = vxor.u32 %v4815, 2147483648
  %v5154 = vxor.u32 %v4819, 2147483648
  %v5155 = vxor.u32 %v4823, 2147483648
  %v5156 = vxor.u32 %v4827, 2147483648
  %v5157 = vxor.u32 %v4831, 2147483648
  %v5158 = vxor.u32 %v4835, 2147483648
  %v5159 = vxor.u32 %v4839, 2147483648
  %v5160 = vmul.f32 %v5152, 1.442695
  %v5161 = vpow.pop %v5160
  %v5162 = vmul.f32 %v5153, 1.442695
  %v5163 = vpow.pop %v5162
  %v5164 = vmul.f32 %v5154, 1.442695
  %v5165 = vpow.pop %v5164
  %v5166 = vmul.f32 %v5155, 1.442695
  %v5167 = vpow.pop %v5166
  %v5168 = vmul.f32 %v5156, 1.442695
  %v5169 = vpow.pop %v5168
  %v5170 = vmul.f32 %v5157, 1.442695
  %v5171 = vpow.pop %v5170
  %v5172 = vmul.f32 %v5158, 1.442695
  %v5173 = vpow.pop %v5172
  %v5174 = vmul.f32 %v5159, 1.442695
  %v5175 = vpow.pop %v5174
  %v5176 = vadd.f32 %v5161, 1.0
  %v5177 = vadd.f32 %v5163, 1.0
  %v5178 = vadd.f32 %v5165, 1.0
  %v5179 = vadd.f32 %v5167, 1.0
  %v5180 = vadd.f32 %v5169, 1.0
  %v5181 = vadd.f32 %v5171, 1.0
  %v5182 = vadd.f32 %v5173, 1.0
  %v5183 = vadd.f32 %v5175, 1.0
  %v5184 = vrcp.pop %v5176
  %v5185 = vmul.f32 %v5176, %v5184
  %v5186 = vsub.f32 1.0, %v5185
  %v5187 = vmul.f32 %v5184, %v5186
  %v5188 = vadd.f32 %v5184, %v5187
  %vm5189 = vweird.f32 %v5176
  %vm5190 = vweird.f32 %v5184
  %vm5191 = vmor %vm5189, %vm5190
  %v5192 = vsel %vm5191, %v5184, %v5188
  %v5193 = vand.u32 2147483647, %v5176
  %vm5194 = vcmp.eq.f32.partialorder %v5193, 8.507059e+37
  %v5195 = vand.u32 %v5176, 2147483648
  %v5196 = vor.u32 1.1754944e-38, %v5195
  %v5197 = vsel %vm5194, %v5196, %v5192
  %v5198 = vmul.f32 1.0, %v5197
  %v5199 = vrcp.pop %v5177
  %v5200 = vmul.f32 %v5177, %v5199
  %v5201 = vsub.f32 1.0, %v5200
  %v5202 = vmul.f32 %v5199, %v5201
  %v5203 = vadd.f32 %v5199, %v5202
  %vm5204 = vweird.f32 %v5177
  %vm5205 = vweird.f32 %v5199
  %vm5206 = vmor %vm5204, %vm5205
  %v5207 = vsel %vm5206, %v5199, %v5203
  %v5208 = vand.u32 2147483647, %v5177
  %vm5209 = vcmp.eq.f32.partialorder %v5208, 8.507059e+37
  %v5210 = vand.u32 %v5177, 2147483648
  %v5211 = vor.u32 1.1754944e-38, %v5210
  %v5212 = vsel %vm5209, %v5211, %v5207
  %v5213 = vmul.f32 1.0, %v5212
  %v5214 = vrcp.pop %v5178
  %v5215 = vmul.f32 %v5178, %v5214
  %v5216 = vsub.f32 1.0, %v5215
  %v5217 = vmul.f32 %v5214, %v5216
  %v5218 = vadd.f32 %v5214, %v5217
  %vm5219 = vweird.f32 %v5178
  %vm5220 = vweird.f32 %v5214
  %vm5221 = vmor %vm5219, %vm5220
  %v5222 = vsel %vm5221, %v5214, %v5218
  %v5223 = vand.u32 2147483647, %v5178
  %vm5224 = vcmp.eq.f32.partialorder %v5223, 8.507059e+37
  %v5225 = vand.u32 %v5178, 2147483648
  %v5226 = vor.u32 1.1754944e-38, %v5225
  %v5227 = vsel %vm5224, %v5226, %v5222
  %v5228 = vmul.f32 1.0, %v5227
  %v5229 = vrcp.pop %v5179
  %v5230 = vmul.f32 %v5179, %v5229
  %v5231 = vsub.f32 1.0, %v5230
  %v5232 = vmul.f32 %v5229, %v5231
  %v5233 = vadd.f32 %v5229, %v5232
  %vm5234 = vweird.f32 %v5179
  %vm5235 = vweird.f32 %v5229
  %vm5236 = vmor %vm5234, %vm5235
  %v5237 = vsel %vm5236, %v5229, %v5233
  %v5238 = vand.u32 2147483647, %v5179
  %vm5239 = vcmp.eq.f32.partialorder %v5238, 8.507059e+37
  %v5240 = vand.u32 %v5179, 2147483648
  %v5241 = vor.u32 1.1754944e-38, %v5240
  %v5242 = vsel %vm5239, %v5241, %v5237
  %v5243 = vmul.f32 1.0, %v5242
  %v5244 = vrcp.pop %v5180
  %v5245 = vmul.f32 %v5180, %v5244
  %v5246 = vsub.f32 1.0, %v5245
  %v5247 = vmul.f32 %v5244, %v5246
  %v5248 = vadd.f32 %v5244, %v5247
  %vm5249 = vweird.f32 %v5180
  %vm5250 = vweird.f32 %v5244
  %vm5251 = vmor %vm5249, %vm5250
  %v5252 = vsel %vm5251, %v5244, %v5248
  %v5253 = vand.u32 2147483647, %v5180
  %vm5254 = vcmp.eq.f32.partialorder %v5253, 8.507059e+37
  %v5255 = vand.u32 %v5180, 2147483648
  %v5256 = vor.u32 1.1754944e-38, %v5255
  %v5257 = vsel %vm5254, %v5256, %v5252
  %v5258 = vmul.f32 1.0, %v5257
  %v5259 = vrcp.pop %v5181
  %v5260 = vmul.f32 %v5181, %v5259
  %v5261 = vsub.f32 1.0, %v5260
  %v5262 = vmul.f32 %v5259, %v5261
  %v5263 = vadd.f32 %v5259, %v5262
  %vm5264 = vweird.f32 %v5181
  %vm5265 = vweird.f32 %v5259
  %vm5266 = vmor %vm5264, %vm5265
  %v5267 = vsel %vm5266, %v5259, %v5263
  %v5268 = vand.u32 2147483647, %v5181
  %vm5269 = vcmp.eq.f32.partialorder %v5268, 8.507059e+37
  %v5270 = vand.u32 %v5181, 2147483648
  %v5271 = vor.u32 1.1754944e-38, %v5270
  %v5272 = vsel %vm5269, %v5271, %v5267
  %v5273 = vmul.f32 1.0, %v5272
  %v5274 = vrcp.pop %v5182
  %v5275 = vmul.f32 %v5182, %v5274
  %v5276 = vsub.f32 1.0, %v5275
  %v5277 = vmul.f32 %v5274, %v5276
  %v5278 = vadd.f32 %v5274, %v5277
  %vm5279 = vweird.f32 %v5182
  %vm5280 = vweird.f32 %v5274
  %vm5281 = vmor %vm5279, %vm5280
  %v5282 = vsel %vm5281, %v5274, %v5278
  %v5283 = vand.u32 2147483647, %v5182
  %vm5284 = vcmp.eq.f32.partialorder %v5283, 8.507059e+37
  %v5285 = vand.u32 %v5182, 2147483648
  %v5286 = vor.u32 1.1754944e-38, %v5285
  %v5287 = vsel %vm5284, %v5286, %v5282
  %v5288 = vmul.f32 1.0, %v5287
  %v5289 = vrcp.pop %v5183
  %v5290 = vmul.f32 %v5183, %v5289
  %v5291 = vsub.f32 1.0, %v5290
  %v5292 = vmul.f32 %v5289, %v5291
  %v5293 = vadd.f32 %v5289, %v5292
  %vm5294 = vweird.f32 %v5183
  %vm5295 = vweird.f32 %v5289
  %vm5296 = vmor %vm5294, %vm5295
  %v5297 = vsel %vm5296, %v5289, %v5293
  %v5298 = vand.u32 2147483647, %v5183
  %vm5299 = vcmp.eq.f32.partialorder %v5298, 8.507059e+37
  %v5300 = vand.u32 %v5183, 2147483648
  %v5301 = vor.u32 1.1754944e-38, %v5300
  %v5302 = vsel %vm5299, %v5301, %v5297
  %v5303 = vmul.f32 1.0, %v5302
  %v5312 = vrot.slane %v4617, 7
  %v5313 = vrot.slane %v4618, 7
  %v5314 = vrot.slane %v4619, 7
  %v5315 = vrot.slane %v4620, 7
  %v5316 = vrot.slane %v4621, 7
  %v5317 = vrot.slane %v4622, 7
  %v5318 = vrot.slane %v4623, 7
  %v5319 = vrot.slane %v4624, 7
  %v5328 = vmul.f32 %v5038, %v5312
  %v5329 = vmul.f32 %v5053, %v5313
  %v5330 = vmul.f32 %v5068, %v5314
  %v5331 = vmul.f32 %v5083, %v5315
  %v5332 = vmul.f32 %v5098, %v5316
  %v5333 = vmul.f32 %v5113, %v5317
  %v5334 = vmul.f32 %v5128, %v5318
  %v5335 = vmul.f32 %v5143, %v5319
  %v5336 = vmul.f32 %v4886, %v5144
  %v5337 = vmul.f32 %v4901, %v5145
  %v5338 = vmul.f32 %v4916, %v5146
  %v5339 = vmul.f32 %v4931, %v5147
  %v5340 = vmul.f32 %v4946, %v5148
  %v5341 = vmul.f32 %v4961, %v5149
  %v5342 = vmul.f32 %v4976, %v5150
  %v5343 = vmul.f32 %v4991, %v5151
  %v5344 = vadd.f32 %v5328, %v5336
  %v5345 = vadd.f32 %v5329, %v5337
  %v5346 = vadd.f32 %v5330, %v5338
  %v5347 = vadd.f32 %v5331, %v5339
  %v5348 = vadd.f32 %v5332, %v5340
  %v5349 = vadd.f32 %v5333, %v5341
  %v5350 = vadd.f32 %v5334, %v5342
  %v5351 = vadd.f32 %v5335, %v5343
  %v5352 = vtanh.pop %v5344
  %v5353 = vtanh.pop %v5345
  %v5354 = vtanh.pop %v5346
  %v5355 = vtanh.pop %v5347
  %v5356 = vtanh.pop %v5348
  %v5357 = vtanh.pop %v5349
  %v5358 = vtanh.pop %v5350
  %v5359 = vtanh.pop %v5351
  %v5360 = vmul.f32 %v5198, %v5352
  %v5361 = vmul.f32 %v5213, %v5353
  %v5362 = vmul.f32 %v5228, %v5354
  %v5363 = vmul.f32 %v5243, %v5355
  %v5364 = vmul.f32 %v5258, %v5356
  %v5365 = vmul.f32 %v5273, %v5357
  %v5366 = vmul.f32 %v5288, %v5358
  %v5367 = vmul.f32 %v5303, %v5359
  %v5376 = vrot.slane %v5360, 6
  %v5377 = vrot.slane %v5361, 5
  %v5378 = vsel %vm1008, %v5377, %v5376
  %v5379 = vrot.slane %v5362, 4
  %v5380 = vsel %vm1011, %v5379, %v5378
  %v5381 = vrot.slane %v5363, 3
  %v5382 = vsel %vm1014, %v5381, %v5380
  %v5383 = vrot.slane %v5364, 2
  %v5384 = vsel %vm1017, %v5383, %v5382
  %v5385 = vrot.slane %v5365, 1
  %v5386 = vsel %vm1020, %v5385, %v5384
  %v5387 = vsel %vm1023, %v5366, %v5386
  %v5388 = vrot.slane %v5367, 7
  %v5389 = vsel %vm1026, %v5388, %v5387
  %5391 = vmatpush.msra.mxu0 %v315
  %5392 = vmatpush.msra.mxu0 %v311
  %5393 = vmatpush.msra.mxu0 %v307
  %5394 = vmatpush.msra.mxu0 %v303
  %5395 = vmatpush.msra.mxu0 %v299
  %5396 = vmatpush.msra.mxu0 %v295
  %5397 = vmatpush.msra.mxu0 %v291
  %5398 = vmatpush.msra.mxu0 %v287
  %5399 = vmatpush.msra.mxu0 %v283
  %5400 = vmatpush.msra.mxu0 %v279
  %5401 = vmatpush.msra.mxu0 %v275
  %5402 = vmatpush.msra.mxu0 %v271
  %5403 = vmatpush.msra.mxu0 %v267
  %5404 = vmatpush.msra.mxu0 %v263
  %5405 = vmatpush.msra.mxu0 %v259
  %5406 = vmatpush.msra.mxu0 %v255
  %5407 = vmatmul.f32.gmra.mxu0 %v5389
  %v5408 = vpop.f32.mrf.mxu0
  %v5409 = vadd.f32 0.0, %v5408
  %5410 = vdwg.mxu0
  %5411 = vmatpush.msra.mxu0 %v316
  %5412 = vmatpush.msra.mxu0 %v312
  %5413 = vmatpush.msra.mxu0 %v308
  %5414 = vmatpush.msra.mxu0 %v304
  %5415 = vmatpush.msra.mxu0 %v300
  %5416 = vmatpush.msra.mxu0 %v296
  %5417 = vmatpush.msra.mxu0 %v292
  %5418 = vmatpush.msra.mxu0 %v288
  %5419 = vmatpush.msra.mxu0 %v284
  %5420 = vmatpush.msra.mxu0 %v280
  %5421 = vmatpush.msra.mxu0 %v276
  %5422 = vmatpush.msra.mxu0 %v272
  %5423 = vmatpush.msra.mxu0 %v268
  %5424 = vmatpush.msra.mxu0 %v264
  %5425 = vmatpush.msra.mxu0 %v260
  %5426 = vmatpush.msra.mxu0 %v256
  %5427 = vmatmul.f32.gmra.mxu0 %v5389
  %v5428 = vpop.f32.mrf.mxu0
  %v5429 = vadd.f32 0.0, %v5428
  %5430 = vdwg.mxu0
  %5431 = vmatpush.msra.mxu0 %v317
  %5432 = vmatpush.msra.mxu0 %v313
  %5433 = vmatpush.msra.mxu0 %v309
  %5434 = vmatpush.msra.mxu0 %v305
  %5435 = vmatpush.msra.mxu0 %v301
  %5436 = vmatpush.msra.mxu0 %v297
  %5437 = vmatpush.msra.mxu0 %v293
  %5438 = vmatpush.msra.mxu0 %v289
  %5439 = vmatpush.msra.mxu0 %v285
  %5440 = vmatpush.msra.mxu0 %v281
  %5441 = vmatpush.msra.mxu0 %v277
  %5442 = vmatpush.msra.mxu0 %v273
  %5443 = vmatpush.msra.mxu0 %v269
  %5444 = vmatpush.msra.mxu0 %v265
  %5445 = vmatpush.msra.mxu0 %v261
  %5446 = vmatpush.msra.mxu0 %v257
  %5447 = vmatmul.f32.gmra.mxu0 %v5389
  %v5448 = vpop.f32.mrf.mxu0
  %v5449 = vadd.f32 0.0, %v5448
  %5450 = vdwg.mxu0
  %5451 = vmatpush.msra.mxu0 %v318
  %5452 = vmatpush.msra.mxu0 %v314
  %5453 = vmatpush.msra.mxu0 %v310
  %5454 = vmatpush.msra.mxu0 %v306
  %5455 = vmatpush.msra.mxu0 %v302
  %5456 = vmatpush.msra.mxu0 %v298
  %5457 = vmatpush.msra.mxu0 %v294
  %5458 = vmatpush.msra.mxu0 %v290
  %5459 = vmatpush.msra.mxu0 %v286
  %5460 = vmatpush.msra.mxu0 %v282
  %5461 = vmatpush.msra.mxu0 %v278
  %5462 = vmatpush.msra.mxu0 %v274
  %5463 = vmatpush.msra.mxu0 %v270
  %5464 = vmatpush.msra.mxu0 %v266
  %5465 = vmatpush.msra.mxu0 %v262
  %5466 = vmatpush.msra.mxu0 %v258
  %5467 = vmatmul.f32.gmra.mxu0 %v5389
  %v5468 = vpop.f32.mrf.mxu0
  %v5469 = vadd.f32 0.0, %v5468
  %5470 = vdwg.mxu0
  %v5475 = vrot.slane %v5409, 1
  %v5476 = vrot.slane %v5429, 1
  %v5477 = vrot.slane %v5449, 1
  %v5478 = vrot.slane %v5469, 1
  %v5479 = vrot.slane %v5409, 2
  %v5480 = vrot.slane %v5429, 2
  %v5481 = vrot.slane %v5449, 2
  %v5482 = vrot.slane %v5469, 2
  %v5483 = vrot.slane %v5409, 3
  %v5484 = vrot.slane %v5429, 3
  %v5485 = vrot.slane %v5449, 3
  %v5486 = vrot.slane %v5469, 3
  %v5487 = vrot.slane %v5409, 4
  %v5488 = vrot.slane %v5429, 4
  %v5489 = vrot.slane %v5449, 4
  %v5490 = vrot.slane %v5469, 4
  %v5491 = vrot.slane %v5409, 5
  %v5492 = vrot.slane %v5429, 5
  %v5493 = vrot.slane %v5449, 5
  %v5494 = vrot.slane %v5469, 5
  %v5495 = vrot.slane %v5409, 6
  %v5496 = vrot.slane %v5429, 6
  %v5497 = vrot.slane %v5449, 6
  %v5498 = vrot.slane %v5469, 6
  %v5499 = vrot.slane %v5409, 7
  %v5500 = vrot.slane %v5429, 7
  %v5501 = vrot.slane %v5449, 7
  %v5502 = vrot.slane %v5469, 7
  %v5535 = vadd.f32 %v109, %v5475
  %v5536 = vadd.f32 %v150, %v5476
  %v5537 = vadd.f32 %v191, %v5477
  %v5538 = vadd.f32 %v232, %v5478
  %v5539 = vadd.f32 %v112, %v5479
  %v5540 = vadd.f32 %v153, %v5480
  %v5541 = vadd.f32 %v194, %v5481
  %v5542 = vadd.f32 %v235, %v5482
  %v5543 = vadd.f32 %v115, %v5483
  %v5544 = vadd.f32 %v156, %v5484
  %v5545 = vadd.f32 %v197, %v5485
  %v5546 = vadd.f32 %v238, %v5486
  %v5547 = vadd.f32 %v118, %v5487
  %v5548 = vadd.f32 %v159, %v5488
  %v5549 = vadd.f32 %v200, %v5489
  %v5550 = vadd.f32 %v241, %v5490
  %v5551 = vadd.f32 %v121, %v5491
  %v5552 = vadd.f32 %v162, %v5492
  %v5553 = vadd.f32 %v203, %v5493
  %v5554 = vadd.f32 %v244, %v5494
  %v5555 = vadd.f32 %v124, %v5495
  %v5556 = vadd.f32 %v165, %v5496
  %v5557 = vadd.f32 %v206, %v5497
  %v5558 = vadd.f32 %v247, %v5498
  %v5559 = vadd.f32 %v127, %v5499
  %v5560 = vadd.f32 %v168, %v5500
  %v5561 = vadd.f32 %v209, %v5501
  %v5562 = vadd.f32 %v250, %v5502
  %v5563 = vadd.f32 %v130, %v5409
  %v5564 = vadd.f32 %v171, %v5429
  %v5565 = vadd.f32 %v212, %v5449
  %v5566 = vadd.f32 %v253, %v5469
  %v5567 = vxor.u32 %v5535, 2147483648
  %v5568 = vxor.u32 %v5539, 2147483648
  %v5569 = vxor.u32 %v5543, 2147483648
  %v5570 = vxor.u32 %v5547, 2147483648
  %v5571 = vxor.u32 %v5551, 2147483648
  %v5572 = vxor.u32 %v5555, 2147483648
  %v5573 = vxor.u32 %v5559, 2147483648
  %v5574 = vxor.u32 %v5563, 2147483648
  %v5575 = vmul.f32 %v5567, 1.442695
  %v5576 = vpow.pop %v5575
  %v5577 = vmul.f32 %v5568, 1.442695
  %v5578 = vpow.pop %v5577
  %v5579 = vmul.f32 %v5569, 1.442695
  %v5580 = vpow.pop %v5579
  %v5581 = vmul.f32 %v5570, 1.442695
  %v5582 = vpow.pop %v5581
  %v5583 = vmul.f32 %v5571, 1.442695
  %v5584 = vpow.pop %v5583
  %v5585 = vmul.f32 %v5572, 1.442695
  %v5586 = vpow.pop %v5585
  %v5587 = vmul.f32 %v5573, 1.442695
  %v5588 = vpow.pop %v5587
  %v5589 = vmul.f32 %v5574, 1.442695
  %v5590 = vpow.pop %v5589
  %v5591 = vadd.f32 %v5576, 1.0
  %v5592 = vadd.f32 %v5578, 1.0
  %v5593 = vadd.f32 %v5580, 1.0
  %v5594 = vadd.f32 %v5582, 1.0
  %v5595 = vadd.f32 %v5584, 1.0
  %v5596 = vadd.f32 %v5586, 1.0
  %v5597 = vadd.f32 %v5588, 1.0
  %v5598 = vadd.f32 %v5590, 1.0
  %v5599 = vrcp.pop %v5591
  %v5600 = vmul.f32 %v5591, %v5599
  %v5601 = vsub.f32 1.0, %v5600
  %v5602 = vmul.f32 %v5599, %v5601
  %v5603 = vadd.f32 %v5599, %v5602
  %vm5604 = vweird.f32 %v5591
  %vm5605 = vweird.f32 %v5599
  %vm5606 = vmor %vm5604, %vm5605
  %v5607 = vsel %vm5606, %v5599, %v5603
  %v5608 = vand.u32 2147483647, %v5591
  %vm5609 = vcmp.eq.f32.partialorder %v5608, 8.507059e+37
  %v5610 = vand.u32 %v5591, 2147483648
  %v5611 = vor.u32 1.1754944e-38, %v5610
  %v5612 = vsel %vm5609, %v5611, %v5607
  %v5613 = vmul.f32 1.0, %v5612
  %v5614 = vrcp.pop %v5592
  %v5615 = vmul.f32 %v5592, %v5614
  %v5616 = vsub.f32 1.0, %v5615
  %v5617 = vmul.f32 %v5614, %v5616
  %v5618 = vadd.f32 %v5614, %v5617
  %vm5619 = vweird.f32 %v5592
  %vm5620 = vweird.f32 %v5614
  %vm5621 = vmor %vm5619, %vm5620
  %v5622 = vsel %vm5621, %v5614, %v5618
  %v5623 = vand.u32 2147483647, %v5592
  %vm5624 = vcmp.eq.f32.partialorder %v5623, 8.507059e+37
  %v5625 = vand.u32 %v5592, 2147483648
  %v5626 = vor.u32 1.1754944e-38, %v5625
  %v5627 = vsel %vm5624, %v5626, %v5622
  %v5628 = vmul.f32 1.0, %v5627
  %v5629 = vrcp.pop %v5593
  %v5630 = vmul.f32 %v5593, %v5629
  %v5631 = vsub.f32 1.0, %v5630
  %v5632 = vmul.f32 %v5629, %v5631
  %v5633 = vadd.f32 %v5629, %v5632
  %vm5634 = vweird.f32 %v5593
  %vm5635 = vweird.f32 %v5629
  %vm5636 = vmor %vm5634, %vm5635
  %v5637 = vsel %vm5636, %v5629, %v5633
  %v5638 = vand.u32 2147483647, %v5593
  %vm5639 = vcmp.eq.f32.partialorder %v5638, 8.507059e+37
  %v5640 = vand.u32 %v5593, 2147483648
  %v5641 = vor.u32 1.1754944e-38, %v5640
  %v5642 = vsel %vm5639, %v5641, %v5637
  %v5643 = vmul.f32 1.0, %v5642
  %v5644 = vrcp.pop %v5594
  %v5645 = vmul.f32 %v5594, %v5644
  %v5646 = vsub.f32 1.0, %v5645
  %v5647 = vmul.f32 %v5644, %v5646
  %v5648 = vadd.f32 %v5644, %v5647
  %vm5649 = vweird.f32 %v5594
  %vm5650 = vweird.f32 %v5644
  %vm5651 = vmor %vm5649, %vm5650
  %v5652 = vsel %vm5651, %v5644, %v5648
  %v5653 = vand.u32 2147483647, %v5594
  %vm5654 = vcmp.eq.f32.partialorder %v5653, 8.507059e+37
  %v5655 = vand.u32 %v5594, 2147483648
  %v5656 = vor.u32 1.1754944e-38, %v5655
  %v5657 = vsel %vm5654, %v5656, %v5652
  %v5658 = vmul.f32 1.0, %v5657
  %v5659 = vrcp.pop %v5595
  %v5660 = vmul.f32 %v5595, %v5659
  %v5661 = vsub.f32 1.0, %v5660
  %v5662 = vmul.f32 %v5659, %v5661
  %v5663 = vadd.f32 %v5659, %v5662
  %vm5664 = vweird.f32 %v5595
  %vm5665 = vweird.f32 %v5659
  %vm5666 = vmor %vm5664, %vm5665
  %v5667 = vsel %vm5666, %v5659, %v5663
  %v5668 = vand.u32 2147483647, %v5595
  %vm5669 = vcmp.eq.f32.partialorder %v5668, 8.507059e+37
  %v5670 = vand.u32 %v5595, 2147483648
  %v5671 = vor.u32 1.1754944e-38, %v5670
  %v5672 = vsel %vm5669, %v5671, %v5667
  %v5673 = vmul.f32 1.0, %v5672
  %v5674 = vrcp.pop %v5596
  %v5675 = vmul.f32 %v5596, %v5674
  %v5676 = vsub.f32 1.0, %v5675
  %v5677 = vmul.f32 %v5674, %v5676
  %v5678 = vadd.f32 %v5674, %v5677
  %vm5679 = vweird.f32 %v5596
  %vm5680 = vweird.f32 %v5674
  %vm5681 = vmor %vm5679, %vm5680
  %v5682 = vsel %vm5681, %v5674, %v5678
  %v5683 = vand.u32 2147483647, %v5596
  %vm5684 = vcmp.eq.f32.partialorder %v5683, 8.507059e+37
  %v5685 = vand.u32 %v5596, 2147483648
  %v5686 = vor.u32 1.1754944e-38, %v5685
  %v5687 = vsel %vm5684, %v5686, %v5682
  %v5688 = vmul.f32 1.0, %v5687
  %v5689 = vrcp.pop %v5597
  %v5690 = vmul.f32 %v5597, %v5689
  %v5691 = vsub.f32 1.0, %v5690
  %v5692 = vmul.f32 %v5689, %v5691
  %v5693 = vadd.f32 %v5689, %v5692
  %vm5694 = vweird.f32 %v5597
  %vm5695 = vweird.f32 %v5689
  %vm5696 = vmor %vm5694, %vm5695
  %v5697 = vsel %vm5696, %v5689, %v5693
  %v5698 = vand.u32 2147483647, %v5597
  %vm5699 = vcmp.eq.f32.partialorder %v5698, 8.507059e+37
  %v5700 = vand.u32 %v5597, 2147483648
  %v5701 = vor.u32 1.1754944e-38, %v5700
  %v5702 = vsel %vm5699, %v5701, %v5697
  %v5703 = vmul.f32 1.0, %v5702
  %v5704 = vrcp.pop %v5598
  %v5705 = vmul.f32 %v5598, %v5704
  %v5706 = vsub.f32 1.0, %v5705
  %v5707 = vmul.f32 %v5704, %v5706
  %v5708 = vadd.f32 %v5704, %v5707
  %vm5709 = vweird.f32 %v5598
  %vm5710 = vweird.f32 %v5704
  %vm5711 = vmor %vm5709, %vm5710
  %v5712 = vsel %vm5711, %v5704, %v5708
  %v5713 = vand.u32 2147483647, %v5598
  %vm5714 = vcmp.eq.f32.partialorder %v5713, 8.507059e+37
  %v5715 = vand.u32 %v5598, 2147483648
  %v5716 = vor.u32 1.1754944e-38, %v5715
  %v5717 = vsel %vm5714, %v5716, %v5712
  %v5718 = vmul.f32 1.0, %v5717
  %v5719 = vxor.u32 %v5536, 2147483648
  %v5720 = vxor.u32 %v5540, 2147483648
  %v5721 = vxor.u32 %v5544, 2147483648
  %v5722 = vxor.u32 %v5548, 2147483648
  %v5723 = vxor.u32 %v5552, 2147483648
  %v5724 = vxor.u32 %v5556, 2147483648
  %v5725 = vxor.u32 %v5560, 2147483648
  %v5726 = vxor.u32 %v5564, 2147483648
  %v5727 = vmul.f32 %v5719, 1.442695
  %v5728 = vpow.pop %v5727
  %v5729 = vmul.f32 %v5720, 1.442695
  %v5730 = vpow.pop %v5729
  %v5731 = vmul.f32 %v5721, 1.442695
  %v5732 = vpow.pop %v5731
  %v5733 = vmul.f32 %v5722, 1.442695
  %v5734 = vpow.pop %v5733
  %v5735 = vmul.f32 %v5723, 1.442695
  %v5736 = vpow.pop %v5735
  %v5737 = vmul.f32 %v5724, 1.442695
  %v5738 = vpow.pop %v5737
  %v5739 = vmul.f32 %v5725, 1.442695
  %v5740 = vpow.pop %v5739
  %v5741 = vmul.f32 %v5726, 1.442695
  %v5742 = vpow.pop %v5741
  %v5743 = vadd.f32 %v5728, 1.0
  %v5744 = vadd.f32 %v5730, 1.0
  %v5745 = vadd.f32 %v5732, 1.0
  %v5746 = vadd.f32 %v5734, 1.0
  %v5747 = vadd.f32 %v5736, 1.0
  %v5748 = vadd.f32 %v5738, 1.0
  %v5749 = vadd.f32 %v5740, 1.0
  %v5750 = vadd.f32 %v5742, 1.0
  %v5751 = vrcp.pop %v5743
  %v5752 = vmul.f32 %v5743, %v5751
  %v5753 = vsub.f32 1.0, %v5752
  %v5754 = vmul.f32 %v5751, %v5753
  %v5755 = vadd.f32 %v5751, %v5754
  %vm5756 = vweird.f32 %v5743
  %vm5757 = vweird.f32 %v5751
  %vm5758 = vmor %vm5756, %vm5757
  %v5759 = vsel %vm5758, %v5751, %v5755
  %v5760 = vand.u32 2147483647, %v5743
  %vm5761 = vcmp.eq.f32.partialorder %v5760, 8.507059e+37
  %v5762 = vand.u32 %v5743, 2147483648
  %v5763 = vor.u32 1.1754944e-38, %v5762
  %v5764 = vsel %vm5761, %v5763, %v5759
  %v5765 = vmul.f32 1.0, %v5764
  %v5766 = vrcp.pop %v5744
  %v5767 = vmul.f32 %v5744, %v5766
  %v5768 = vsub.f32 1.0, %v5767
  %v5769 = vmul.f32 %v5766, %v5768
  %v5770 = vadd.f32 %v5766, %v5769
  %vm5771 = vweird.f32 %v5744
  %vm5772 = vweird.f32 %v5766
  %vm5773 = vmor %vm5771, %vm5772
  %v5774 = vsel %vm5773, %v5766, %v5770
  %v5775 = vand.u32 2147483647, %v5744
  %vm5776 = vcmp.eq.f32.partialorder %v5775, 8.507059e+37
  %v5777 = vand.u32 %v5744, 2147483648
  %v5778 = vor.u32 1.1754944e-38, %v5777
  %v5779 = vsel %vm5776, %v5778, %v5774
  %v5780 = vmul.f32 1.0, %v5779
  %v5781 = vrcp.pop %v5745
  %v5782 = vmul.f32 %v5745, %v5781
  %v5783 = vsub.f32 1.0, %v5782
  %v5784 = vmul.f32 %v5781, %v5783
  %v5785 = vadd.f32 %v5781, %v5784
  %vm5786 = vweird.f32 %v5745
  %vm5787 = vweird.f32 %v5781
  %vm5788 = vmor %vm5786, %vm5787
  %v5789 = vsel %vm5788, %v5781, %v5785
  %v5790 = vand.u32 2147483647, %v5745
  %vm5791 = vcmp.eq.f32.partialorder %v5790, 8.507059e+37
  %v5792 = vand.u32 %v5745, 2147483648
  %v5793 = vor.u32 1.1754944e-38, %v5792
  %v5794 = vsel %vm5791, %v5793, %v5789
  %v5795 = vmul.f32 1.0, %v5794
  %v5796 = vrcp.pop %v5746
  %v5797 = vmul.f32 %v5746, %v5796
  %v5798 = vsub.f32 1.0, %v5797
  %v5799 = vmul.f32 %v5796, %v5798
  %v5800 = vadd.f32 %v5796, %v5799
  %vm5801 = vweird.f32 %v5746
  %vm5802 = vweird.f32 %v5796
  %vm5803 = vmor %vm5801, %vm5802
  %v5804 = vsel %vm5803, %v5796, %v5800
  %v5805 = vand.u32 2147483647, %v5746
  %vm5806 = vcmp.eq.f32.partialorder %v5805, 8.507059e+37
  %v5807 = vand.u32 %v5746, 2147483648
  %v5808 = vor.u32 1.1754944e-38, %v5807
  %v5809 = vsel %vm5806, %v5808, %v5804
  %v5810 = vmul.f32 1.0, %v5809
  %v5811 = vrcp.pop %v5747
  %v5812 = vmul.f32 %v5747, %v5811
  %v5813 = vsub.f32 1.0, %v5812
  %v5814 = vmul.f32 %v5811, %v5813
  %v5815 = vadd.f32 %v5811, %v5814
  %vm5816 = vweird.f32 %v5747
  %vm5817 = vweird.f32 %v5811
  %vm5818 = vmor %vm5816, %vm5817
  %v5819 = vsel %vm5818, %v5811, %v5815
  %v5820 = vand.u32 2147483647, %v5747
  %vm5821 = vcmp.eq.f32.partialorder %v5820, 8.507059e+37
  %v5822 = vand.u32 %v5747, 2147483648
  %v5823 = vor.u32 1.1754944e-38, %v5822
  %v5824 = vsel %vm5821, %v5823, %v5819
  %v5825 = vmul.f32 1.0, %v5824
  %v5826 = vrcp.pop %v5748
  %v5827 = vmul.f32 %v5748, %v5826
  %v5828 = vsub.f32 1.0, %v5827
  %v5829 = vmul.f32 %v5826, %v5828
  %v5830 = vadd.f32 %v5826, %v5829
  %vm5831 = vweird.f32 %v5748
  %vm5832 = vweird.f32 %v5826
  %vm5833 = vmor %vm5831, %vm5832
  %v5834 = vsel %vm5833, %v5826, %v5830
  %v5835 = vand.u32 2147483647, %v5748
  %vm5836 = vcmp.eq.f32.partialorder %v5835, 8.507059e+37
  %v5837 = vand.u32 %v5748, 2147483648
  %v5838 = vor.u32 1.1754944e-38, %v5837
  %v5839 = vsel %vm5836, %v5838, %v5834
  %v5840 = vmul.f32 1.0, %v5839
  %v5841 = vrcp.pop %v5749
  %v5842 = vmul.f32 %v5749, %v5841
  %v5843 = vsub.f32 1.0, %v5842
  %v5844 = vmul.f32 %v5841, %v5843
  %v5845 = vadd.f32 %v5841, %v5844
  %vm5846 = vweird.f32 %v5749
  %vm5847 = vweird.f32 %v5841
  %vm5848 = vmor %vm5846, %vm5847
  %v5849 = vsel %vm5848, %v5841, %v5845
  %v5850 = vand.u32 2147483647, %v5749
  %vm5851 = vcmp.eq.f32.partialorder %v5850, 8.507059e+37
  %v5852 = vand.u32 %v5749, 2147483648
  %v5853 = vor.u32 1.1754944e-38, %v5852
  %v5854 = vsel %vm5851, %v5853, %v5849
  %v5855 = vmul.f32 1.0, %v5854
  %v5856 = vrcp.pop %v5750
  %v5857 = vmul.f32 %v5750, %v5856
  %v5858 = vsub.f32 1.0, %v5857
  %v5859 = vmul.f32 %v5856, %v5858
  %v5860 = vadd.f32 %v5856, %v5859
  %vm5861 = vweird.f32 %v5750
  %vm5862 = vweird.f32 %v5856
  %vm5863 = vmor %vm5861, %vm5862
  %v5864 = vsel %vm5863, %v5856, %v5860
  %v5865 = vand.u32 2147483647, %v5750
  %vm5866 = vcmp.eq.f32.partialorder %v5865, 8.507059e+37
  %v5867 = vand.u32 %v5750, 2147483648
  %v5868 = vor.u32 1.1754944e-38, %v5867
  %v5869 = vsel %vm5866, %v5868, %v5864
  %v5870 = vmul.f32 1.0, %v5869
  %v5871 = vtanh.pop %v5537
  %v5872 = vtanh.pop %v5541
  %v5873 = vtanh.pop %v5545
  %v5874 = vtanh.pop %v5549
  %v5875 = vtanh.pop %v5553
  %v5876 = vtanh.pop %v5557
  %v5877 = vtanh.pop %v5561
  %v5878 = vtanh.pop %v5565
  %v5879 = vxor.u32 %v5538, 2147483648
  %v5880 = vxor.u32 %v5542, 2147483648
  %v5881 = vxor.u32 %v5546, 2147483648
  %v5882 = vxor.u32 %v5550, 2147483648
  %v5883 = vxor.u32 %v5554, 2147483648
  %v5884 = vxor.u32 %v5558, 2147483648
  %v5885 = vxor.u32 %v5562, 2147483648
  %v5886 = vxor.u32 %v5566, 2147483648
  %v5887 = vmul.f32 %v5879, 1.442695
  %v5888 = vpow.pop %v5887
  %v5889 = vmul.f32 %v5880, 1.442695
  %v5890 = vpow.pop %v5889
  %v5891 = vmul.f32 %v5881, 1.442695
  %v5892 = vpow.pop %v5891
  %v5893 = vmul.f32 %v5882, 1.442695
  %v5894 = vpow.pop %v5893
  %v5895 = vmul.f32 %v5883, 1.442695
  %v5896 = vpow.pop %v5895
  %v5897 = vmul.f32 %v5884, 1.442695
  %v5898 = vpow.pop %v5897
  %v5899 = vmul.f32 %v5885, 1.442695
  %v5900 = vpow.pop %v5899
  %v5901 = vmul.f32 %v5886, 1.442695
  %v5902 = vpow.pop %v5901
  %v5903 = vadd.f32 %v5888, 1.0
  %v5904 = vadd.f32 %v5890, 1.0
  %v5905 = vadd.f32 %v5892, 1.0
  %v5906 = vadd.f32 %v5894, 1.0
  %v5907 = vadd.f32 %v5896, 1.0
  %v5908 = vadd.f32 %v5898, 1.0
  %v5909 = vadd.f32 %v5900, 1.0
  %v5910 = vadd.f32 %v5902, 1.0
  %v5911 = vrcp.pop %v5903
  %v5912 = vmul.f32 %v5903, %v5911
  %v5913 = vsub.f32 1.0, %v5912
  %v5914 = vmul.f32 %v5911, %v5913
  %v5915 = vadd.f32 %v5911, %v5914
  %vm5916 = vweird.f32 %v5903
  %vm5917 = vweird.f32 %v5911
  %vm5918 = vmor %vm5916, %vm5917
  %v5919 = vsel %vm5918, %v5911, %v5915
  %v5920 = vand.u32 2147483647, %v5903
  %vm5921 = vcmp.eq.f32.partialorder %v5920, 8.507059e+37
  %v5922 = vand.u32 %v5903, 2147483648
  %v5923 = vor.u32 1.1754944e-38, %v5922
  %v5924 = vsel %vm5921, %v5923, %v5919
  %v5925 = vmul.f32 1.0, %v5924
  %v5926 = vrcp.pop %v5904
  %v5927 = vmul.f32 %v5904, %v5926
  %v5928 = vsub.f32 1.0, %v5927
  %v5929 = vmul.f32 %v5926, %v5928
  %v5930 = vadd.f32 %v5926, %v5929
  %vm5931 = vweird.f32 %v5904
  %vm5932 = vweird.f32 %v5926
  %vm5933 = vmor %vm5931, %vm5932
  %v5934 = vsel %vm5933, %v5926, %v5930
  %v5935 = vand.u32 2147483647, %v5904
  %vm5936 = vcmp.eq.f32.partialorder %v5935, 8.507059e+37
  %v5937 = vand.u32 %v5904, 2147483648
  %v5938 = vor.u32 1.1754944e-38, %v5937
  %v5939 = vsel %vm5936, %v5938, %v5934
  %v5940 = vmul.f32 1.0, %v5939
  %v5941 = vrcp.pop %v5905
  %v5942 = vmul.f32 %v5905, %v5941
  %v5943 = vsub.f32 1.0, %v5942
  %v5944 = vmul.f32 %v5941, %v5943
  %v5945 = vadd.f32 %v5941, %v5944
  %vm5946 = vweird.f32 %v5905
  %vm5947 = vweird.f32 %v5941
  %vm5948 = vmor %vm5946, %vm5947
  %v5949 = vsel %vm5948, %v5941, %v5945
  %v5950 = vand.u32 2147483647, %v5905
  %vm5951 = vcmp.eq.f32.partialorder %v5950, 8.507059e+37
  %v5952 = vand.u32 %v5905, 2147483648
  %v5953 = vor.u32 1.1754944e-38, %v5952
  %v5954 = vsel %vm5951, %v5953, %v5949
  %v5955 = vmul.f32 1.0, %v5954
  %v5956 = vrcp.pop %v5906
  %v5957 = vmul.f32 %v5906, %v5956
  %v5958 = vsub.f32 1.0, %v5957
  %v5959 = vmul.f32 %v5956, %v5958
  %v5960 = vadd.f32 %v5956, %v5959
  %vm5961 = vweird.f32 %v5906
  %vm5962 = vweird.f32 %v5956
  %vm5963 = vmor %vm5961, %vm5962
  %v5964 = vsel %vm5963, %v5956, %v5960
  %v5965 = vand.u32 2147483647, %v5906
  %vm5966 = vcmp.eq.f32.partialorder %v5965, 8.507059e+37
  %v5967 = vand.u32 %v5906, 2147483648
  %v5968 = vor.u32 1.1754944e-38, %v5967
  %v5969 = vsel %vm5966, %v5968, %v5964
  %v5970 = vmul.f32 1.0, %v5969
  %v5971 = vrcp.pop %v5907
  %v5972 = vmul.f32 %v5907, %v5971
  %v5973 = vsub.f32 1.0, %v5972
  %v5974 = vmul.f32 %v5971, %v5973
  %v5975 = vadd.f32 %v5971, %v5974
  %vm5976 = vweird.f32 %v5907
  %vm5977 = vweird.f32 %v5971
  %vm5978 = vmor %vm5976, %vm5977
  %v5979 = vsel %vm5978, %v5971, %v5975
  %v5980 = vand.u32 2147483647, %v5907
  %vm5981 = vcmp.eq.f32.partialorder %v5980, 8.507059e+37
  %v5982 = vand.u32 %v5907, 2147483648
  %v5983 = vor.u32 1.1754944e-38, %v5982
  %v5984 = vsel %vm5981, %v5983, %v5979
  %v5985 = vmul.f32 1.0, %v5984
  %v5986 = vrcp.pop %v5908
  %v5987 = vmul.f32 %v5908, %v5986
  %v5988 = vsub.f32 1.0, %v5987
  %v5989 = vmul.f32 %v5986, %v5988
  %v5990 = vadd.f32 %v5986, %v5989
  %vm5991 = vweird.f32 %v5908
  %vm5992 = vweird.f32 %v5986
  %vm5993 = vmor %vm5991, %vm5992
  %v5994 = vsel %vm5993, %v5986, %v5990
  %v5995 = vand.u32 2147483647, %v5908
  %vm5996 = vcmp.eq.f32.partialorder %v5995, 8.507059e+37
  %v5997 = vand.u32 %v5908, 2147483648
  %v5998 = vor.u32 1.1754944e-38, %v5997
  %v5999 = vsel %vm5996, %v5998, %v5994
  %v6000 = vmul.f32 1.0, %v5999
  %v6001 = vrcp.pop %v5909
  %v6002 = vmul.f32 %v5909, %v6001
  %v6003 = vsub.f32 1.0, %v6002
  %v6004 = vmul.f32 %v6001, %v6003
  %v6005 = vadd.f32 %v6001, %v6004
  %vm6006 = vweird.f32 %v5909
  %vm6007 = vweird.f32 %v6001
  %vm6008 = vmor %vm6006, %vm6007
  %v6009 = vsel %vm6008, %v6001, %v6005
  %v6010 = vand.u32 2147483647, %v5909
  %vm6011 = vcmp.eq.f32.partialorder %v6010, 8.507059e+37
  %v6012 = vand.u32 %v5909, 2147483648
  %v6013 = vor.u32 1.1754944e-38, %v6012
  %v6014 = vsel %vm6011, %v6013, %v6009
  %v6015 = vmul.f32 1.0, %v6014
  %v6016 = vrcp.pop %v5910
  %v6017 = vmul.f32 %v5910, %v6016
  %v6018 = vsub.f32 1.0, %v6017
  %v6019 = vmul.f32 %v6016, %v6018
  %v6020 = vadd.f32 %v6016, %v6019
  %vm6021 = vweird.f32 %v5910
  %vm6022 = vweird.f32 %v6016
  %vm6023 = vmor %vm6021, %vm6022
  %v6024 = vsel %vm6023, %v6016, %v6020
  %v6025 = vand.u32 2147483647, %v5910
  %vm6026 = vcmp.eq.f32.partialorder %v6025, 8.507059e+37
  %v6027 = vand.u32 %v5910, 2147483648
  %v6028 = vor.u32 1.1754944e-38, %v6027
  %v6029 = vsel %vm6026, %v6028, %v6024
  %v6030 = vmul.f32 1.0, %v6029
  %v6039 = vrot.slane %v5344, 7
  %v6040 = vrot.slane %v5345, 7
  %v6041 = vrot.slane %v5346, 7
  %v6042 = vrot.slane %v5347, 7
  %v6043 = vrot.slane %v5348, 7
  %v6044 = vrot.slane %v5349, 7
  %v6045 = vrot.slane %v5350, 7
  %v6046 = vrot.slane %v5351, 7
  %v6055 = vmul.f32 %v5765, %v6039
  %v6056 = vmul.f32 %v5780, %v6040
  %v6057 = vmul.f32 %v5795, %v6041
  %v6058 = vmul.f32 %v5810, %v6042
  %v6059 = vmul.f32 %v5825, %v6043
  %v6060 = vmul.f32 %v5840, %v6044
  %v6061 = vmul.f32 %v5855, %v6045
  %v6062 = vmul.f32 %v5870, %v6046
  %v6063 = vmul.f32 %v5613, %v5871
  %v6064 = vmul.f32 %v5628, %v5872
  %v6065 = vmul.f32 %v5643, %v5873
  %v6066 = vmul.f32 %v5658, %v5874
  %v6067 = vmul.f32 %v5673, %v5875
  %v6068 = vmul.f32 %v5688, %v5876
  %v6069 = vmul.f32 %v5703, %v5877
  %v6070 = vmul.f32 %v5718, %v5878
  %v6071 = vadd.f32 %v6055, %v6063
  %v6072 = vadd.f32 %v6056, %v6064
  %v6073 = vadd.f32 %v6057, %v6065
  %v6074 = vadd.f32 %v6058, %v6066
  %v6075 = vadd.f32 %v6059, %v6067
  %v6076 = vadd.f32 %v6060, %v6068
  %v6077 = vadd.f32 %v6061, %v6069
  %v6078 = vadd.f32 %v6062, %v6070
  %v6079 = vtanh.pop %v6071
  %v6080 = vtanh.pop %v6072
  %v6081 = vtanh.pop %v6073
  %v6082 = vtanh.pop %v6074
  %v6083 = vtanh.pop %v6075
  %v6084 = vtanh.pop %v6076
  %v6085 = vtanh.pop %v6077
  %v6086 = vtanh.pop %v6078
  %v6087 = vmul.f32 %v5925, %v6079
  %v6088 = vmul.f32 %v5940, %v6080
  %v6089 = vmul.f32 %v5955, %v6081
  %v6090 = vmul.f32 %v5970, %v6082
  %v6091 = vmul.f32 %v5985, %v6083
  %v6092 = vmul.f32 %v6000, %v6084
  %v6093 = vmul.f32 %v6015, %v6085
  %v6094 = vmul.f32 %v6030, %v6086
  %v6095 = vld [vmem:[%s4] sm:$0xff]
  %v6096 = vld [vmem:[%s4 + $0x8] sm:$0xff]
  %v6097 = vld [vmem:[%s4 + $0x10] sm:$0xff]
  %v6098 = vld [vmem:[%s4 + $0x18] sm:$0xff]
  %v6099 = vld [vmem:[%s4 + $0x20] sm:$0xff]
  %v6100 = vld [vmem:[%s4 + $0x28] sm:$0xff]
  %v6101 = vld [vmem:[%s4 + $0x30] sm:$0xff]
  %v6102 = vld [vmem:[%s4 + $0x38] sm:$0xff]
  %v6103 = vld [vmem:[%s4 + $0x40] sm:$0xff]
  %v6104 = vld [vmem:[%s4 + $0x48] sm:$0xff]
  %v6105 = vld [vmem:[%s4 + $0x50] sm:$0xff]
  %v6106 = vld [vmem:[%s4 + $0x58] sm:$0xff]
  %v6107 = vld [vmem:[%s4 + $0x60] sm:$0xff]
  %v6108 = vld [vmem:[%s4 + $0x68] sm:$0xff]
  %v6109 = vld [vmem:[%s4 + $0x70] sm:$0xff]
  %v6110 = vld [vmem:[%s4 + $0x78] sm:$0xff]
  %v6111 = vld [vmem:[%s5] sm:$0x1]
  %v6113 = vperm.slane %v6111, 0
  %v6123 = vrot.slane %v6087, 7
  %v6124 = vrot.slane %v6088, 6
  %v6125 = vsel %vm1008, %v6124, %v6123
  %v6126 = vrot.slane %v6089, 5
  %v6127 = vsel %vm1011, %v6126, %v6125
  %v6128 = vrot.slane %v6090, 4
  %v6129 = vsel %vm1014, %v6128, %v6127
  %v6130 = vrot.slane %v6091, 3
  %v6131 = vsel %vm1017, %v6130, %v6129
  %v6132 = vrot.slane %v6092, 2
  %v6133 = vsel %vm1020, %v6132, %v6131
  %v6134 = vrot.slane %v6093, 1
  %v6135 = vsel %vm1023, %v6134, %v6133
  %v6136 = vsel %vm1026, %v6094, %v6135
  %6138 = vmatpush.msra.mxu0 %v6110
  %6139 = vmatpush.msra.mxu0 %v6109
  %6140 = vmatpush.msra.mxu0 %v6108
  %6141 = vmatpush.msra.mxu0 %v6107
  %6142 = vmatpush.msra.mxu0 %v6106
  %6143 = vmatpush.msra.mxu0 %v6105
  %6144 = vmatpush.msra.mxu0 %v6104
  %6145 = vmatpush.msra.mxu0 %v6103
  %6146 = vmatpush.msra.mxu0 %v6102
  %6147 = vmatpush.msra.mxu0 %v6101
  %6148 = vmatpush.msra.mxu0 %v6100
  %6149 = vmatpush.msra.mxu0 %v6099
  %6150 = vmatpush.msra.mxu0 %v6098
  %6151 = vmatpush.msra.mxu0 %v6097
  %6152 = vmatpush.msra.mxu0 %v6096
  %6153 = vmatpush.msra.mxu0 %v6095
  %6154 = vmatmul.f32.gmra.mxu0 %v6136
  %v6155 = vpop.f32.mrf.mxu0
  %v6156 = vadd.f32 %v6113, %v6155
  %6157 = vdwg.mxu0
  %vm6158 = vcmask 130048
  %6159 = vst.msk [vmem:[%s6] sm:$0xff] %vm6158, %v6156
  // Predicated region
  $region26: #{sequential_behaviour_lstm.1} parent=0 // pred_check
    _
  $region27: #{sequential_behaviour_lstm.1} parent=0 // pred_check_branch
    %6161 = sbr.rel (0) target = $region29
  $region28: #{sequential_behaviour_lstm.1} parent=0 // pred_region
    _
  $region29: #{sequential_behaviour_lstm.1} parent=0 // pred_fallthru
    _
  // Predicated region
  $region30: #{sequential_behaviour_lstm.1} parent=0 // pred_check
    _
  $region31: #{sequential_behaviour_lstm.1} parent=0 // pred_check_branch
    %6163 = sbr.rel (0) target = $region33
  $region32: #{sequential_behaviour_lstm.1} parent=0 // pred_region
    _
  $region33: #{sequential_behaviour_lstm.1} parent=0 // pred_fallthru
    _

</llo_original>
